<compile_context>
chip_gen: v5e
topology: v5e:2x2
jax: 0.10.0
libtpu: 0.0.40
codegen_flags: <defaults>
</compile_context>

<pallas_src>
import functools

import jax
import jax.numpy as jnp
from jax import lax
from jax.experimental import pallas as pl
from jax.experimental.pallas import tpu as pltpu


def _round_up(x, m):
    return (x + m - 1) // m * m


def _roll_lanes(v, delta, length):
    """out[:, q] = v[:, q + delta] (circular; the wrap only lands on the
    masked / discarded halo positions, never on valid grid positions)."""
    s = (-delta) % length
    if s == 0:
        return v
    return jnp.concatenate([v[:, length - s:], v[:, :length - s]], axis=-1)


# ------------------------------ fused kernel -------------------------------- #

def _basic_block_kernel(x_ref, w1_ref, b1_ref, w2_ref, b2_ref, wd_ref, bd_ref,
                        o_ref, *, ksize, pad, grid_w, out_h, out_w, lflat,
                        scaling, has_downsample, imgs_per_step, mxu_dtype):
    """One batch group per grid step.  Everything lives on a shared flattened
    zero-padded (Hg, Wg) grid of Lpad lanes; the valid output block sits at
    rows/cols [2p, 2p+H) x [2p, 2p+W) of that grid.

    x_ref : (imgs, Cin, Lpad)   flat zero-padded input, channels in sublanes
    w1_ref: (K*K, Cout, Cin)    conv1 weights, one (Cout, Cin) slab per tap
    w2_ref: (K*K, Cout, Cout)   conv2 weights
    wd_ref: (Cout, Cin)         1x1 downsample weights (ignored if identity)
    b*_ref: (Cout, 1)
    o_ref : (imgs, Cout, Lpad)  lane-dense output on the same flat grid
    """
    K, p, Wg, Lpad = ksize, pad, grid_w, lflat
    Cout = o_ref.shape[1]
    Cin = x_ref.shape[1]

    # Per-tap lane offsets on the flat grid: (kh, kw) -> (kh-p)*Wg + (kw-p).
    deltas = [(kh - p) * Wg + (kw - p) for kh in range(K) for kw in range(K)]

    # Halo mask built in-register from an iota.  Row/col are derived with an
    # f32 floor-div (+0.5 guard) so no vector integer division is needed.
    ids = lax.broadcasted_iota(jnp.int32, (1, Lpad), 1).astype(jnp.float32)
    row = jnp.floor((ids + 0.5) * (1.0 / Wg))
    col = ids - row * Wg
    lo = float(2 * p)
    valid = ((row >= lo) & (row < lo + out_h) &
             (col >= lo) & (col < lo + out_w))

    b1 = b1_ref[...]                                   # (Cout, 1)
    b2 = b2_ref[...]

    for n in range(imgs_per_step):
        xg = x_ref[n]                                  # (Cin, Lpad) f32
        xg_m = xg.astype(mxu_dtype)

        # ---- conv1: 9 per-tap transposed GEMMs, f32 accumulation ----
        acc = jnp.zeros((Cout, Lpad), jnp.float32)
        for t, d in enumerate(deltas):
            acc = acc + jnp.dot(w1_ref[t].astype(mxu_dtype),
                                _roll_lanes(xg_m, d, Lpad),
                                preferred_element_type=jnp.float32)
        h = jnp.maximum(acc + b1, 0.0)
        h = jnp.where(valid, h, 0.0)                   # == conv2's zero padding
        h_m = h.astype(mxu_dtype)

        # ---- conv2 (stride 1) on the same grid ----
        acc = jnp.zeros((Cout, Lpad), jnp.float32)
        for t, d in enumerate(deltas):
            acc = acc + jnp.dot(w2_ref[t].astype(mxu_dtype),
                                _roll_lanes(h_m, d, Lpad),
                                preferred_element_type=jnp.float32)
        out = acc + b2

        # ---- residual: 1x1 downsample as Cin unrolled VPU broadcast-FMAs ----
        if has_downsample:
            wd = wd_ref[...]                           # (Cout, Cin)
            res = wd[:, 0:1] * xg[0:1, :]
            for c in range(1, Cin):
                res = res + wd[:, c:c + 1] * xg[c:c + 1, :]
            res = res + bd_ref[...]
        else:
            res = xg                                   # identity: Cin == Cout

        out = jnp.maximum(out + scaling * res, 0.0)
        o_ref[n] = out.astype(o_ref.dtype)


# ------------------------------ JAX wrapper --------------------------------- #

def basic_block_forward(x_nchw, w1, b1, w2, b2, wd, bd, *,
                        kernel_size, stride, scaling_factor,
                        imgs_per_step=None, mxu_dtype=jnp.float32):
    """Mirrors BasicBlock.forward (use_batchnorm=False, ReLU activations)."""
    N, Cin, H, W = x_nchw.shape
    K = kernel_size
    p = K // 2
    Cout = w1.shape[-1]

    if stride != 1:
        # TODO(synk): stride>1 path (pre-gather the strided taps in the wrapper
        # so the kernel keeps contiguous lane slices); demo config is stride=1.
        raise NotImplementedError("Pallas BasicBlock kernel: stride=1 only")
    assert K % 2 == 1, "odd kernel_size expected ('same' padding)"

    M = 2 * p                                   # x and outputs placed at (M, M)
    Hg, Wg = H + 4 * p, W + 4 * p               # shared padded grid
    Lg = Hg * Wg
    Lpad = _round_up(Lg, 128)

    # NCHW is already channel-major: pad + flatten, no transpose needed.
    xg = jnp.pad(x_nchw, ((0, 0), (0, 0), (M, M), (M, M)))
    xg = xg.reshape(N, Cin, Lg)
    xg = jnp.pad(xg, ((0, 0), (0, 0), (0, Lpad - Lg)))   # (N, Cin, Lpad)

    # Weights: one (Cout, Cin) slab per tap (transposed-GEMM layout).
    w1k = jnp.transpose(w1.reshape(K * K, Cin, Cout), (0, 2, 1))
    w2k = jnp.transpose(w2.reshape(K * K, Cout, Cout), (0, 2, 1))
    has_downsample = wd is not None
    if has_downsample:
        wdk = wd.reshape(Cin, Cout).T                    # (Cout, Cin)
        bdk = bd.reshape(Cout, 1)
    else:
        assert Cin == Cout, "identity residual needs Cin == Cout"
        wdk = jnp.zeros((Cout, Cin), x_nchw.dtype)
        bdk = jnp.zeros((Cout, 1), x_nchw.dtype)

    # Batch grouping: one image per grid step on dual-TC chips (v7x megacore),
    # whole batch folded into a single step on single-TC chips (v5e/v6e).
    if imgs_per_step is None:
        kind = jax.devices()[0].device_kind.lower()
        imgs_per_step = 1 if "v7" in kind else N
    nb = max(1, min(int(imgs_per_step), N))
    while N % nb:
        nb -= 1

    kernel = functools.partial(
        _basic_block_kernel, ksize=K, pad=p, grid_w=Wg, out_h=H, out_w=W,
        lflat=Lpad, scaling=float(scaling_factor),
        has_downsample=has_downsample, imgs_per_step=nb, mxu_dtype=mxu_dtype)

    out = pl.pallas_call(
        kernel,
        out_shape=jax.ShapeDtypeStruct((N, Cout, Lpad), x_nchw.dtype),
        grid=(N // nb,),
        in_specs=[
            pl.BlockSpec((nb, Cin, Lpad), lambda g: (g, 0, 0)),
            pl.BlockSpec((K * K, Cout, Cin), lambda g: (0, 0, 0)),
            pl.BlockSpec((Cout, 1), lambda g: (0, 0)),
            pl.BlockSpec((K * K, Cout, Cout), lambda g: (0, 0, 0)),
            pl.BlockSpec((Cout, 1), lambda g: (0, 0)),
            pl.BlockSpec((Cout, Cin), lambda g: (0, 0)),
            pl.BlockSpec((Cout, 1), lambda g: (0, 0)),
        ],
        out_specs=pl.BlockSpec((nb, Cout, Lpad), lambda g: (g, 0, 0)),
        compiler_params=pltpu.CompilerParams(
            dimension_semantics=("parallel",)),
    )(xg, w1k, b1.reshape(Cout, 1), w2k, b2.reshape(Cout, 1), wdk, bdk)

    # Pull the valid HxW block out of the flat padded grid -> NCHW directly.
    out = out[:, :, :Lg].reshape(N, Cout, Hg, Wg)
    return out[:, :, M:M + H, M:M + W]


# ------------------------------- reference ---------------------------------- #

def _ref_conv(x, w, b, stride, padding):
    y = lax.conv_general_dilated(
        x, w, window_strides=(stride, stride),
        padding=((padding, padding), (padding, padding)),
        dimension_numbers=('NHWC', 'HWIO', 'NHWC'))
    return y + b.reshape(1, 1, 1, -1)


def basic_block_reference(x_nchw, w1, b1, w2, b2, wd, bd, *,
                          kernel_size, stride, scaling_factor):
    x = jnp.transpose(x_nchw, (0, 2, 3, 1))
    pad = kernel_size // 2
    residual = _ref_conv(x, wd, bd, stride, 0) if wd is not None else x
    h = jnp.maximum(_ref_conv(x, w1, b1, stride, pad), 0.0)
    out = _ref_conv(h, w2, b2, 1, pad) + residual * scaling_factor
    out = jnp.maximum(out, 0.0)
    return jnp.transpose(out, (0, 3, 1, 2))


# --------------------------------- main -------------------------------------- #

if __name__ == "__main__":
    # BasicBlock(4, 8, 3, stride=1) -> downsample present (Cin != Cout)
    N, Cin, H, W = 2, 4, 16, 16
    Cout, K, stride = 8, 3, 1
    scaling_factor = 1.0

    key = jax.random.PRNGKey(0)
    k_x, k_w1, k_b1, k_w2, k_b2, k_wd, k_bd = jax.random.split(key, 7)

    x = jax.random.normal(k_x, (N, Cin, H, W), jnp.float32)

    # Deterministic init (weights stored directly in HWIO = (KH, KW, Cin, Cout)):
    #   conv1/conv2: kaiming_normal (ReLU)   std = sqrt(2/fan_in)
    #   downsample : xavier_normal           std = sqrt(2/(fan_in+fan_out))
    fan1 = Cin * K * K
    w1 = jax.random.normal(k_w1, (K, K, Cin, Cout), jnp.float32) * (2.0 / fan1) ** 0.5
    b1 = jax.random.uniform(k_b1, (Cout,), jnp.float32, -1.0, 1.0) * fan1 ** -0.5
    fan2 = Cout * K * K
    w2 = jax.random.normal(k_w2, (K, K, Cout, Cout), jnp.float32) * (2.0 / fan2) ** 0.5
    b2 = jax.random.uniform(k_b2, (Cout,), jnp.float32, -1.0, 1.0) * fan2 ** -0.5
    wd = jax.random.normal(k_wd, (1, 1, Cin, Cout), jnp.float32) * (2.0 / (Cin + Cout)) ** 0.5
    bd = jax.random.uniform(k_bd, (Cout,), jnp.float32, -1.0, 1.0) * Cin ** -0.5

    # mxu_dtype=jnp.float32 keeps the tight check; jnp.bfloat16 is the v6e/v7x
    # throughput knob (requires loosening the tolerance to ~5e-2).
    out = basic_block_forward(x, w1, b1, w2, b2, wd, bd,
                              kernel_size=K, stride=stride,
                              scaling_factor=scaling_factor,
                              mxu_dtype=jnp.float32)
    out = jax.block_until_ready(out)
    assert out.shape == (N, Cout, H, W), out.shape

    ref = basic_block_reference(x, w1, b1, w2, b2, wd, bd,
                                kernel_size=K, stride=stride,
                                scaling_factor=scaling_factor)
    assert jnp.allclose(out, ref, atol=2e-4, rtol=2e-4), \
        float(jnp.max(jnp.abs(out - ref)))

    print("KERNEL_OK")
</pallas_src>

<mosaic_0001>
module attributes {stable_mosaic.version = 11 : i64} {
  func.func @_basic_block_kernel(%arg0: i32, %arg1: memref<2x4x512xf32, #tpu.memory_space<vmem>>, %arg2: memref<9x8x4xf32, #tpu.memory_space<vmem>>, %arg3: memref<8x1xf32, #tpu.memory_space<vmem>>, %arg4: memref<9x8x8xf32, #tpu.memory_space<vmem>>, %arg5: memref<8x1xf32, #tpu.memory_space<vmem>>, %arg6: memref<8x4xf32, #tpu.memory_space<vmem>>, %arg7: memref<8x1xf32, #tpu.memory_space<vmem>>, %arg8: memref<2x8x512xf32, #tpu.memory_space<vmem>>) attributes {dimension_semantics = [#tpu.dimension_semantics<parallel>], iteration_bounds = array<i64: 1>, scalar_prefetch = 0 : i64, scratch_operands = 0 : i64, tpu.core_type = #tpu.core_type<tc>, window_params = [{transform_indices = @transform_0, window_bounds = array<i64: 2, 4, 512>}, {pipeline_mode = #tpu.pipeline_mode<synchronous>, transform_indices = @transform_1, window_bounds = array<i64: 9, 8, 4>}, {pipeline_mode = #tpu.pipeline_mode<synchronous>, transform_indices = @transform_2, window_bounds = array<i64: 8, 1>}, {pipeline_mode = #tpu.pipeline_mode<synchronous>, transform_indices = @transform_3, window_bounds = array<i64: 9, 8, 8>}, {pipeline_mode = #tpu.pipeline_mode<synchronous>, transform_indices = @transform_4, window_bounds = array<i64: 8, 1>}, {pipeline_mode = #tpu.pipeline_mode<synchronous>, transform_indices = @transform_5, window_bounds = array<i64: 8, 4>}, {pipeline_mode = #tpu.pipeline_mode<synchronous>, transform_indices = @transform_6, window_bounds = array<i64: 8, 1>}, {transform_indices = @transform_7, window_bounds = array<i64: 2, 8, 512>}]} {
    %0 = tpu.iota {dimensions = array<i32: 1>} : vector<1x512xi32>
    %1 = arith.sitofp %0 : vector<1x512xi32> to vector<1x512xf32>
    %cst = arith.constant 5.000000e-01 : f32
    %2 = vector.broadcast %cst : f32 to vector<1x512xf32>
    %3 = arith.addf %1, %2 : vector<1x512xf32>
    %cst_0 = arith.constant 5.000000e-02 : f32
    %4 = vector.broadcast %cst_0 : f32 to vector<1x512xf32>
    %5 = arith.mulf %3, %4 : vector<1x512xf32>
    %6 = math.floor %5 : vector<1x512xf32>
    %cst_1 = arith.constant 2.000000e+01 : f32
    %7 = vector.broadcast %cst_1 : f32 to vector<1x512xf32>
    %8 = arith.mulf %6, %7 : vector<1x512xf32>
    %9 = arith.subf %1, %8 : vector<1x512xf32>
    %cst_2 = arith.constant 2.000000e+00 : f32
    %10 = vector.broadcast %cst_2 : f32 to vector<1x512xf32>
    %11 = arith.cmpf oge, %6, %10 : vector<1x512xf32>
    %cst_3 = arith.constant 1.800000e+01 : f32
    %12 = vector.broadcast %cst_3 : f32 to vector<1x512xf32>
    %13 = arith.cmpf olt, %6, %12 : vector<1x512xf32>
    %14 = arith.andi %11, %13 : vector<1x512xi1>
    %cst_4 = arith.constant 2.000000e+00 : f32
    %15 = vector.broadcast %cst_4 : f32 to vector<1x512xf32>
    %16 = arith.cmpf oge, %9, %15 : vector<1x512xf32>
    %17 = arith.andi %14, %16 : vector<1x512xi1>
    %cst_5 = arith.constant 1.800000e+01 : f32
    %18 = vector.broadcast %cst_5 : f32 to vector<1x512xf32>
    %19 = arith.cmpf olt, %9, %18 : vector<1x512xf32>
    %20 = arith.andi %17, %19 : vector<1x512xi1>
    %c0 = arith.constant 0 : index
    %c0_6 = arith.constant 0 : index
    %21 = vector.load %arg3[%c0, %c0_6] : memref<8x1xf32, #tpu.memory_space<vmem>>, vector<8x1xf32>
    %c0_7 = arith.constant 0 : index
    %c0_8 = arith.constant 0 : index
    %22 = vector.load %arg5[%c0_7, %c0_8] : memref<8x1xf32, #tpu.memory_space<vmem>>, vector<8x1xf32>
    %c0_9 = arith.constant 0 : index
    %c0_10 = arith.constant 0 : index
    %c0_11 = arith.constant 0 : index
    %23 = vector.load %arg1[%c0_9, %c0_10, %c0_11] : memref<2x4x512xf32, #tpu.memory_space<vmem>>, vector<1x4x512xf32>
    %24 = vector.shape_cast %23 : vector<1x4x512xf32> to vector<4x512xf32>
    %cst_12 = arith.constant 0.000000e+00 : f32
    %25 = vector.broadcast %cst_12 : f32 to vector<8x512xf32>
    %c0_13 = arith.constant 0 : index
    %c0_14 = arith.constant 0 : index
    %c0_15 = arith.constant 0 : index
    %26 = vector.load %arg2[%c0_13, %c0_14, %c0_15] : memref<9x8x4xf32, #tpu.memory_space<vmem>>, vector<1x8x4xf32>
    %27 = vector.shape_cast %26 : vector<1x8x4xf32> to vector<8x4xf32>
    %28 = vector.extract_strided_slice %24 {offsets = [0, 491], sizes = [4, 21], strides = [1, 1]} : vector<4x512xf32> to vector<4x21xf32>
    %29 = vector.extract_strided_slice %24 {offsets = [0, 0], sizes = [4, 491], strides = [1, 1]} : vector<4x512xf32> to vector<4x491xf32>
    %30 = tpu.concatenate %28, %29 in 1 : vector<4x21xf32>, vector<4x491xf32> -> vector<4x512xf32>
    %cst_16 = arith.constant dense<0.000000e+00> : vector<8x512xf32>
    %31 = tpu.matmul %27, %30, %cst_16 {dimension_numbers = #tpu.dot_dimension_numbers<[1], [0], [0], [1], [0, 0, 1, 1], [], []>} : vector<8x4xf32>, vector<4x512xf32>, vector<8x512xf32> -> vector<8x512xf32>
    %32 = arith.addf %25, %31 : vector<8x512xf32>
    %c1 = arith.constant 1 : index
    %c0_17 = arith.constant 0 : index
    %c0_18 = arith.constant 0 : index
    %33 = vector.load %arg2[%c1, %c0_17, %c0_18] : memref<9x8x4xf32, #tpu.memory_space<vmem>>, vector<1x8x4xf32>
    %34 = vector.shape_cast %33 : vector<1x8x4xf32> to vector<8x4xf32>
    %35 = vector.extract_strided_slice %24 {offsets = [0, 492], sizes = [4, 20], strides = [1, 1]} : vector<4x512xf32> to vector<4x20xf32>
    %36 = vector.extract_strided_slice %24 {offsets = [0, 0], sizes = [4, 492], strides = [1, 1]} : vector<4x512xf32> to vector<4x492xf32>
    %37 = tpu.concatenate %35, %36 in 1 : vector<4x20xf32>, vector<4x492xf32> -> vector<4x512xf32>
    %cst_19 = arith.constant dense<0.000000e+00> : vector<8x512xf32>
    %38 = tpu.matmul %34, %37, %cst_19 {dimension_numbers = #tpu.dot_dimension_numbers<[1], [0], [0], [1], [0, 0, 1, 1], [], []>} : vector<8x4xf32>, vector<4x512xf32>, vector<8x512xf32> -> vector<8x512xf32>
    %39 = arith.addf %32, %38 : vector<8x512xf32>
    %c2 = arith.constant 2 : index
    %c0_20 = arith.constant 0 : index
    %c0_21 = arith.constant 0 : index
    %40 = vector.load %arg2[%c2, %c0_20, %c0_21] : memref<9x8x4xf32, #tpu.memory_space<vmem>>, vector<1x8x4xf32>
    %41 = vector.shape_cast %40 : vector<1x8x4xf32> to vector<8x4xf32>
    %42 = vector.extract_strided_slice %24 {offsets = [0, 493], sizes = [4, 19], strides = [1, 1]} : vector<4x512xf32> to vector<4x19xf32>
    %43 = vector.extract_strided_slice %24 {offsets = [0, 0], sizes = [4, 493], strides = [1, 1]} : vector<4x512xf32> to vector<4x493xf32>
    %44 = tpu.concatenate %42, %43 in 1 : vector<4x19xf32>, vector<4x493xf32> -> vector<4x512xf32>
    %cst_22 = arith.constant dense<0.000000e+00> : vector<8x512xf32>
    %45 = tpu.matmul %41, %44, %cst_22 {dimension_numbers = #tpu.dot_dimension_numbers<[1], [0], [0], [1], [0, 0, 1, 1], [], []>} : vector<8x4xf32>, vector<4x512xf32>, vector<8x512xf32> -> vector<8x512xf32>
    %46 = arith.addf %39, %45 : vector<8x512xf32>
    %c3 = arith.constant 3 : index
    %c0_23 = arith.constant 0 : index
    %c0_24 = arith.constant 0 : index
    %47 = vector.load %arg2[%c3, %c0_23, %c0_24] : memref<9x8x4xf32, #tpu.memory_space<vmem>>, vector<1x8x4xf32>
    %48 = vector.shape_cast %47 : vector<1x8x4xf32> to vector<8x4xf32>
    %49 = vector.extract_strided_slice %24 {offsets = [0, 511], sizes = [4, 1], strides = [1, 1]} : vector<4x512xf32> to vector<4x1xf32>
    %50 = vector.extract_strided_slice %24 {offsets = [0, 0], sizes = [4, 511], strides = [1, 1]} : vector<4x512xf32> to vector<4x511xf32>
    %51 = tpu.concatenate %49, %50 in 1 : vector<4x1xf32>, vector<4x511xf32> -> vector<4x512xf32>
    %cst_25 = arith.constant dense<0.000000e+00> : vector<8x512xf32>
    %52 = tpu.matmul %48, %51, %cst_25 {dimension_numbers = #tpu.dot_dimension_numbers<[1], [0], [0], [1], [0, 0, 1, 1], [], []>} : vector<8x4xf32>, vector<4x512xf32>, vector<8x512xf32> -> vector<8x512xf32>
    %53 = arith.addf %46, %52 : vector<8x512xf32>
    %c4 = arith.constant 4 : index
    %c0_26 = arith.constant 0 : index
    %c0_27 = arith.constant 0 : index
    %54 = vector.load %arg2[%c4, %c0_26, %c0_27] : memref<9x8x4xf32, #tpu.memory_space<vmem>>, vector<1x8x4xf32>
    %55 = vector.shape_cast %54 : vector<1x8x4xf32> to vector<8x4xf32>
    %cst_28 = arith.constant dense<0.000000e+00> : vector<8x512xf32>
    %56 = tpu.matmul %55, %24, %cst_28 {dimension_numbers = #tpu.dot_dimension_numbers<[1], [0], [0], [1], [0, 0, 1, 1], [], []>} : vector<8x4xf32>, vector<4x512xf32>, vector<8x512xf32> -> vector<8x512xf32>
    %57 = arith.addf %53, %56 : vector<8x512xf32>
    %c5 = arith.constant 5 : index
    %c0_29 = arith.constant 0 : index
    %c0_30 = arith.constant 0 : index
    %58 = vector.load %arg2[%c5, %c0_29, %c0_30] : memref<9x8x4xf32, #tpu.memory_space<vmem>>, vector<1x8x4xf32>
    %59 = vector.shape_cast %58 : vector<1x8x4xf32> to vector<8x4xf32>
    %60 = vector.extract_strided_slice %24 {offsets = [0, 1], sizes = [4, 511], strides = [1, 1]} : vector<4x512xf32> to vector<4x511xf32>
    %61 = vector.extract_strided_slice %24 {offsets = [0, 0], sizes = [4, 1], strides = [1, 1]} : vector<4x512xf32> to vector<4x1xf32>
    %62 = tpu.concatenate %60, %61 in 1 : vector<4x511xf32>, vector<4x1xf32> -> vector<4x512xf32>
    %cst_31 = arith.constant dense<0.000000e+00> : vector<8x512xf32>
    %63 = tpu.matmul %59, %62, %cst_31 {dimension_numbers = #tpu.dot_dimension_numbers<[1], [0], [0], [1], [0, 0, 1, 1], [], []>} : vector<8x4xf32>, vector<4x512xf32>, vector<8x512xf32> -> vector<8x512xf32>
    %64 = arith.addf %57, %63 : vector<8x512xf32>
    %c6 = arith.constant 6 : index
    %c0_32 = arith.constant 0 : index
    %c0_33 = arith.constant 0 : index
    %65 = vector.load %arg2[%c6, %c0_32, %c0_33] : memref<9x8x4xf32, #tpu.memory_space<vmem>>, vector<1x8x4xf32>
    %66 = vector.shape_cast %65 : vector<1x8x4xf32> to vector<8x4xf32>
    %67 = vector.extract_strided_slice %24 {offsets = [0, 19], sizes = [4, 493], strides = [1, 1]} : vector<4x512xf32> to vector<4x493xf32>
    %68 = vector.extract_strided_slice %24 {offsets = [0, 0], sizes = [4, 19], strides = [1, 1]} : vector<4x512xf32> to vector<4x19xf32>
    %69 = tpu.concatenate %67, %68 in 1 : vector<4x493xf32>, vector<4x19xf32> -> vector<4x512xf32>
    %cst_34 = arith.constant dense<0.000000e+00> : vector<8x512xf32>
    %70 = tpu.matmul %66, %69, %cst_34 {dimension_numbers = #tpu.dot_dimension_numbers<[1], [0], [0], [1], [0, 0, 1, 1], [], []>} : vector<8x4xf32>, vector<4x512xf32>, vector<8x512xf32> -> vector<8x512xf32>
    %71 = arith.addf %64, %70 : vector<8x512xf32>
    %c7 = arith.constant 7 : index
    %c0_35 = arith.constant 0 : index
    %c0_36 = arith.constant 0 : index
    %72 = vector.load %arg2[%c7, %c0_35, %c0_36] : memref<9x8x4xf32, #tpu.memory_space<vmem>>, vector<1x8x4xf32>
    %73 = vector.shape_cast %72 : vector<1x8x4xf32> to vector<8x4xf32>
    %74 = vector.extract_strided_slice %24 {offsets = [0, 20], sizes = [4, 492], strides = [1, 1]} : vector<4x512xf32> to vector<4x492xf32>
    %75 = vector.extract_strided_slice %24 {offsets = [0, 0], sizes = [4, 20], strides = [1, 1]} : vector<4x512xf32> to vector<4x20xf32>
    %76 = tpu.concatenate %74, %75 in 1 : vector<4x492xf32>, vector<4x20xf32> -> vector<4x512xf32>
    %cst_37 = arith.constant dense<0.000000e+00> : vector<8x512xf32>
    %77 = tpu.matmul %73, %76, %cst_37 {dimension_numbers = #tpu.dot_dimension_numbers<[1], [0], [0], [1], [0, 0, 1, 1], [], []>} : vector<8x4xf32>, vector<4x512xf32>, vector<8x512xf32> -> vector<8x512xf32>
    %78 = arith.addf %71, %77 : vector<8x512xf32>
    %c8 = arith.constant 8 : index
    %c0_38 = arith.constant 0 : index
    %c0_39 = arith.constant 0 : index
    %79 = vector.load %arg2[%c8, %c0_38, %c0_39] : memref<9x8x4xf32, #tpu.memory_space<vmem>>, vector<1x8x4xf32>
    %80 = vector.shape_cast %79 : vector<1x8x4xf32> to vector<8x4xf32>
    %81 = vector.extract_strided_slice %24 {offsets = [0, 21], sizes = [4, 491], strides = [1, 1]} : vector<4x512xf32> to vector<4x491xf32>
    %82 = vector.extract_strided_slice %24 {offsets = [0, 0], sizes = [4, 21], strides = [1, 1]} : vector<4x512xf32> to vector<4x21xf32>
    %83 = tpu.concatenate %81, %82 in 1 : vector<4x491xf32>, vector<4x21xf32> -> vector<4x512xf32>
    %cst_40 = arith.constant dense<0.000000e+00> : vector<8x512xf32>
    %84 = tpu.matmul %80, %83, %cst_40 {dimension_numbers = #tpu.dot_dimension_numbers<[1], [0], [0], [1], [0, 0, 1, 1], [], []>} : vector<8x4xf32>, vector<4x512xf32>, vector<8x512xf32> -> vector<8x512xf32>
    %85 = arith.addf %78, %84 : vector<8x512xf32>
    %86 = vector.broadcast %21 : vector<8x1xf32> to vector<8x512xf32>
    %87 = arith.addf %85, %86 : vector<8x512xf32>
    %cst_41 = arith.constant 0.000000e+00 : f32
    %88 = vector.broadcast %cst_41 : f32 to vector<8x512xf32>
    %89 = arith.maximumf %87, %88 : vector<8x512xf32>
    %cst_42 = arith.constant 0.000000e+00 : f32
    %90 = vector.shape_cast %20 : vector<1x512xi1> to vector<1x512xi1>
    %91 = vector.broadcast %90 : vector<1x512xi1> to vector<8x512xi1>
    %92 = vector.broadcast %cst_42 : f32 to vector<8x512xf32>
    %93 = arith.select %91, %89, %92 : vector<8x512xi1>, vector<8x512xf32>
    %cst_43 = arith.constant 0.000000e+00 : f32
    %94 = vector.broadcast %cst_43 : f32 to vector<8x512xf32>
    %c0_44 = arith.constant 0 : index
    %c0_45 = arith.constant 0 : index
    %c0_46 = arith.constant 0 : index
    %95 = vector.load %arg4[%c0_44, %c0_45, %c0_46] : memref<9x8x8xf32, #tpu.memory_space<vmem>>, vector<1x8x8xf32>
    %96 = vector.shape_cast %95 : vector<1x8x8xf32> to vector<8x8xf32>
    %97 = vector.extract_strided_slice %93 {offsets = [0, 491], sizes = [8, 21], strides = [1, 1]} : vector<8x512xf32> to vector<8x21xf32>
    %98 = vector.extract_strided_slice %93 {offsets = [0, 0], sizes = [8, 491], strides = [1, 1]} : vector<8x512xf32> to vector<8x491xf32>
    %99 = tpu.concatenate %97, %98 in 1 : vector<8x21xf32>, vector<8x491xf32> -> vector<8x512xf32>
    %cst_47 = arith.constant dense<0.000000e+00> : vector<8x512xf32>
    %100 = tpu.matmul %96, %99, %cst_47 {dimension_numbers = #tpu.dot_dimension_numbers<[1], [0], [0], [1], [0, 0, 1, 1], [], []>} : vector<8x8xf32>, vector<8x512xf32>, vector<8x512xf32> -> vector<8x512xf32>
    %101 = arith.addf %94, %100 : vector<8x512xf32>
    %c1_48 = arith.constant 1 : index
    %c0_49 = arith.constant 0 : index
    %c0_50 = arith.constant 0 : index
    %102 = vector.load %arg4[%c1_48, %c0_49, %c0_50] : memref<9x8x8xf32, #tpu.memory_space<vmem>>, vector<1x8x8xf32>
    %103 = vector.shape_cast %102 : vector<1x8x8xf32> to vector<8x8xf32>
    %104 = vector.extract_strided_slice %93 {offsets = [0, 492], sizes = [8, 20], strides = [1, 1]} : vector<8x512xf32> to vector<8x20xf32>
    %105 = vector.extract_strided_slice %93 {offsets = [0, 0], sizes = [8, 492], strides = [1, 1]} : vector<8x512xf32> to vector<8x492xf32>
    %106 = tpu.concatenate %104, %105 in 1 : vector<8x20xf32>, vector<8x492xf32> -> vector<8x512xf32>
    %cst_51 = arith.constant dense<0.000000e+00> : vector<8x512xf32>
    %107 = tpu.matmul %103, %106, %cst_51 {dimension_numbers = #tpu.dot_dimension_numbers<[1], [0], [0], [1], [0, 0, 1, 1], [], []>} : vector<8x8xf32>, vector<8x512xf32>, vector<8x512xf32> -> vector<8x512xf32>
    %108 = arith.addf %101, %107 : vector<8x512xf32>
    %c2_52 = arith.constant 2 : index
    %c0_53 = arith.constant 0 : index
    %c0_54 = arith.constant 0 : index
    %109 = vector.load %arg4[%c2_52, %c0_53, %c0_54] : memref<9x8x8xf32, #tpu.memory_space<vmem>>, vector<1x8x8xf32>
    %110 = vector.shape_cast %109 : vector<1x8x8xf32> to vector<8x8xf32>
    %111 = vector.extract_strided_slice %93 {offsets = [0, 493], sizes = [8, 19], strides = [1, 1]} : vector<8x512xf32> to vector<8x19xf32>
    %112 = vector.extract_strided_slice %93 {offsets = [0, 0], sizes = [8, 493], strides = [1, 1]} : vector<8x512xf32> to vector<8x493xf32>
    %113 = tpu.concatenate %111, %112 in 1 : vector<8x19xf32>, vector<8x493xf32> -> vector<8x512xf32>
    %cst_55 = arith.constant dense<0.000000e+00> : vector<8x512xf32>
    %114 = tpu.matmul %110, %113, %cst_55 {dimension_numbers = #tpu.dot_dimension_numbers<[1], [0], [0], [1], [0, 0, 1, 1], [], []>} : vector<8x8xf32>, vector<8x512xf32>, vector<8x512xf32> -> vector<8x512xf32>
    %115 = arith.addf %108, %114 : vector<8x512xf32>
    %c3_56 = arith.constant 3 : index
    %c0_57 = arith.constant 0 : index
    %c0_58 = arith.constant 0 : index
    %116 = vector.load %arg4[%c3_56, %c0_57, %c0_58] : memref<9x8x8xf32, #tpu.memory_space<vmem>>, vector<1x8x8xf32>
    %117 = vector.shape_cast %116 : vector<1x8x8xf32> to vector<8x8xf32>
    %118 = vector.extract_strided_slice %93 {offsets = [0, 511], sizes = [8, 1], strides = [1, 1]} : vector<8x512xf32> to vector<8x1xf32>
    %119 = vector.extract_strided_slice %93 {offsets = [0, 0], sizes = [8, 511], strides = [1, 1]} : vector<8x512xf32> to vector<8x511xf32>
    %120 = tpu.concatenate %118, %119 in 1 : vector<8x1xf32>, vector<8x511xf32> -> vector<8x512xf32>
    %cst_59 = arith.constant dense<0.000000e+00> : vector<8x512xf32>
    %121 = tpu.matmul %117, %120, %cst_59 {dimension_numbers = #tpu.dot_dimension_numbers<[1], [0], [0], [1], [0, 0, 1, 1], [], []>} : vector<8x8xf32>, vector<8x512xf32>, vector<8x512xf32> -> vector<8x512xf32>
    %122 = arith.addf %115, %121 : vector<8x512xf32>
    %c4_60 = arith.constant 4 : index
    %c0_61 = arith.constant 0 : index
    %c0_62 = arith.constant 0 : index
    %123 = vector.load %arg4[%c4_60, %c0_61, %c0_62] : memref<9x8x8xf32, #tpu.memory_space<vmem>>, vector<1x8x8xf32>
    %124 = vector.shape_cast %123 : vector<1x8x8xf32> to vector<8x8xf32>
    %cst_63 = arith.constant dense<0.000000e+00> : vector<8x512xf32>
    %125 = tpu.matmul %124, %93, %cst_63 {dimension_numbers = #tpu.dot_dimension_numbers<[1], [0], [0], [1], [0, 0, 1, 1], [], []>} : vector<8x8xf32>, vector<8x512xf32>, vector<8x512xf32> -> vector<8x512xf32>
    %126 = arith.addf %122, %125 : vector<8x512xf32>
    %c5_64 = arith.constant 5 : index
    %c0_65 = arith.constant 0 : index
    %c0_66 = arith.constant 0 : index
    %127 = vector.load %arg4[%c5_64, %c0_65, %c0_66] : memref<9x8x8xf32, #tpu.memory_space<vmem>>, vector<1x8x8xf32>
    %128 = vector.shape_cast %127 : vector<1x8x8xf32> to vector<8x8xf32>
    %129 = vector.extract_strided_slice %93 {offsets = [0, 1], sizes = [8, 511], strides = [1, 1]} : vector<8x512xf32> to vector<8x511xf32>
    %130 = vector.extract_strided_slice %93 {offsets = [0, 0], sizes = [8, 1], strides = [1, 1]} : vector<8x512xf32> to vector<8x1xf32>
    %131 = tpu.concatenate %129, %130 in 1 : vector<8x511xf32>, vector<8x1xf32> -> vector<8x512xf32>
    %cst_67 = arith.constant dense<0.000000e+00> : vector<8x512xf32>
    %132 = tpu.matmul %128, %131, %cst_67 {dimension_numbers = #tpu.dot_dimension_numbers<[1], [0], [0], [1], [0, 0, 1, 1], [], []>} : vector<8x8xf32>, vector<8x512xf32>, vector<8x512xf32> -> vector<8x512xf32>
    %133 = arith.addf %126, %132 : vector<8x512xf32>
    %c6_68 = arith.constant 6 : index
    %c0_69 = arith.constant 0 : index
    %c0_70 = arith.constant 0 : index
    %134 = vector.load %arg4[%c6_68, %c0_69, %c0_70] : memref<9x8x8xf32, #tpu.memory_space<vmem>>, vector<1x8x8xf32>
    %135 = vector.shape_cast %134 : vector<1x8x8xf32> to vector<8x8xf32>
    %136 = vector.extract_strided_slice %93 {offsets = [0, 19], sizes = [8, 493], strides = [1, 1]} : vector<8x512xf32> to vector<8x493xf32>
    %137 = vector.extract_strided_slice %93 {offsets = [0, 0], sizes = [8, 19], strides = [1, 1]} : vector<8x512xf32> to vector<8x19xf32>
    %138 = tpu.concatenate %136, %137 in 1 : vector<8x493xf32>, vector<8x19xf32> -> vector<8x512xf32>
    %cst_71 = arith.constant dense<0.000000e+00> : vector<8x512xf32>
    %139 = tpu.matmul %135, %138, %cst_71 {dimension_numbers = #tpu.dot_dimension_numbers<[1], [0], [0], [1], [0, 0, 1, 1], [], []>} : vector<8x8xf32>, vector<8x512xf32>, vector<8x512xf32> -> vector<8x512xf32>
    %140 = arith.addf %133, %139 : vector<8x512xf32>
    %c7_72 = arith.constant 7 : index
    %c0_73 = arith.constant 0 : index
    %c0_74 = arith.constant 0 : index
    %141 = vector.load %arg4[%c7_72, %c0_73, %c0_74] : memref<9x8x8xf32, #tpu.memory_space<vmem>>, vector<1x8x8xf32>
    %142 = vector.shape_cast %141 : vector<1x8x8xf32> to vector<8x8xf32>
    %143 = vector.extract_strided_slice %93 {offsets = [0, 20], sizes = [8, 492], strides = [1, 1]} : vector<8x512xf32> to vector<8x492xf32>
    %144 = vector.extract_strided_slice %93 {offsets = [0, 0], sizes = [8, 20], strides = [1, 1]} : vector<8x512xf32> to vector<8x20xf32>
    %145 = tpu.concatenate %143, %144 in 1 : vector<8x492xf32>, vector<8x20xf32> -> vector<8x512xf32>
    %cst_75 = arith.constant dense<0.000000e+00> : vector<8x512xf32>
    %146 = tpu.matmul %142, %145, %cst_75 {dimension_numbers = #tpu.dot_dimension_numbers<[1], [0], [0], [1], [0, 0, 1, 1], [], []>} : vector<8x8xf32>, vector<8x512xf32>, vector<8x512xf32> -> vector<8x512xf32>
    %147 = arith.addf %140, %146 : vector<8x512xf32>
    %c8_76 = arith.constant 8 : index
    %c0_77 = arith.constant 0 : index
    %c0_78 = arith.constant 0 : index
    %148 = vector.load %arg4[%c8_76, %c0_77, %c0_78] : memref<9x8x8xf32, #tpu.memory_space<vmem>>, vector<1x8x8xf32>
    %149 = vector.shape_cast %148 : vector<1x8x8xf32> to vector<8x8xf32>
    %150 = vector.extract_strided_slice %93 {offsets = [0, 21], sizes = [8, 491], strides = [1, 1]} : vector<8x512xf32> to vector<8x491xf32>
    %151 = vector.extract_strided_slice %93 {offsets = [0, 0], sizes = [8, 21], strides = [1, 1]} : vector<8x512xf32> to vector<8x21xf32>
    %152 = tpu.concatenate %150, %151 in 1 : vector<8x491xf32>, vector<8x21xf32> -> vector<8x512xf32>
    %cst_79 = arith.constant dense<0.000000e+00> : vector<8x512xf32>
    %153 = tpu.matmul %149, %152, %cst_79 {dimension_numbers = #tpu.dot_dimension_numbers<[1], [0], [0], [1], [0, 0, 1, 1], [], []>} : vector<8x8xf32>, vector<8x512xf32>, vector<8x512xf32> -> vector<8x512xf32>
    %154 = arith.addf %147, %153 : vector<8x512xf32>
    %155 = vector.broadcast %22 : vector<8x1xf32> to vector<8x512xf32>
    %156 = arith.addf %154, %155 : vector<8x512xf32>
    %c0_80 = arith.constant 0 : index
    %c0_81 = arith.constant 0 : index
    %157 = vector.load %arg6[%c0_80, %c0_81] : memref<8x4xf32, #tpu.memory_space<vmem>>, vector<8x4xf32>
    %158 = vector.extract_strided_slice %157 {offsets = [0, 0], sizes = [8, 1], strides = [1, 1]} : vector<8x4xf32> to vector<8x1xf32>
    %159 = vector.extract_strided_slice %24 {offsets = [0, 0], sizes = [1, 512], strides = [1, 1]} : vector<4x512xf32> to vector<1x512xf32>
    %160 = vector.broadcast %158 : vector<8x1xf32> to vector<8x512xf32>
    %161 = vector.broadcast %159 : vector<1x512xf32> to vector<8x512xf32>
    %162 = arith.mulf %160, %161 : vector<8x512xf32>
    %163 = vector.extract_strided_slice %157 {offsets = [0, 1], sizes = [8, 1], strides = [1, 1]} : vector<8x4xf32> to vector<8x1xf32>
    %164 = vector.extract_strided_slice %24 {offsets = [1, 0], sizes = [1, 512], strides = [1, 1]} : vector<4x512xf32> to vector<1x512xf32>
    %165 = vector.broadcast %163 : vector<8x1xf32> to vector<8x512xf32>
    %166 = vector.broadcast %164 : vector<1x512xf32> to vector<8x512xf32>
    %167 = arith.mulf %165, %166 : vector<8x512xf32>
    %168 = arith.addf %162, %167 : vector<8x512xf32>
    %169 = vector.extract_strided_slice %157 {offsets = [0, 2], sizes = [8, 1], strides = [1, 1]} : vector<8x4xf32> to vector<8x1xf32>
    %170 = vector.extract_strided_slice %24 {offsets = [2, 0], sizes = [1, 512], strides = [1, 1]} : vector<4x512xf32> to vector<1x512xf32>
    %171 = vector.broadcast %169 : vector<8x1xf32> to vector<8x512xf32>
    %172 = vector.broadcast %170 : vector<1x512xf32> to vector<8x512xf32>
    %173 = arith.mulf %171, %172 : vector<8x512xf32>
    %174 = arith.addf %168, %173 : vector<8x512xf32>
    %175 = vector.extract_strided_slice %157 {offsets = [0, 3], sizes = [8, 1], strides = [1, 1]} : vector<8x4xf32> to vector<8x1xf32>
    %176 = vector.extract_strided_slice %24 {offsets = [3, 0], sizes = [1, 512], strides = [1, 1]} : vector<4x512xf32> to vector<1x512xf32>
    %177 = vector.broadcast %175 : vector<8x1xf32> to vector<8x512xf32>
    %178 = vector.broadcast %176 : vector<1x512xf32> to vector<8x512xf32>
    %179 = arith.mulf %177, %178 : vector<8x512xf32>
    %180 = arith.addf %174, %179 : vector<8x512xf32>
    %c0_82 = arith.constant 0 : index
    %c0_83 = arith.constant 0 : index
    %181 = vector.load %arg7[%c0_82, %c0_83] : memref<8x1xf32, #tpu.memory_space<vmem>>, vector<8x1xf32>
    %182 = vector.broadcast %181 : vector<8x1xf32> to vector<8x512xf32>
    %183 = arith.addf %180, %182 : vector<8x512xf32>
    %cst_84 = arith.constant 1.000000e+00 : f32
    %184 = vector.broadcast %cst_84 : f32 to vector<8x512xf32>
    %185 = arith.mulf %184, %183 : vector<8x512xf32>
    %186 = arith.addf %156, %185 : vector<8x512xf32>
    %cst_85 = arith.constant 0.000000e+00 : f32
    %187 = vector.broadcast %cst_85 : f32 to vector<8x512xf32>
    %188 = arith.maximumf %186, %187 : vector<8x512xf32>
    %c0_86 = arith.constant 0 : index
    %c0_87 = arith.constant 0 : index
    %c0_88 = arith.constant 0 : index
    %189 = vector.load %arg8[%c0_86, %c0_87, %c0_88] : memref<2x8x512xf32, #tpu.memory_space<vmem>>, vector<1x8x512xf32>
    %190 = vector.shape_cast %189 : vector<1x8x512xf32> to vector<8x512xf32>
    %191 = vector.shape_cast %188 : vector<8x512xf32> to vector<1x8x512xf32>
    tpu.vector_store %arg8[%c0_86, %c0_87, %c0_88], %191 {strides = array<i32>} : memref<2x8x512xf32, #tpu.memory_space<vmem>>, vector<1x8x512xf32>,
    %c1_89 = arith.constant 1 : index
    %c0_90 = arith.constant 0 : index
    %c0_91 = arith.constant 0 : index
    %192 = vector.load %arg1[%c1_89, %c0_90, %c0_91] : memref<2x4x512xf32, #tpu.memory_space<vmem>>, vector<1x4x512xf32>
    %193 = vector.shape_cast %192 : vector<1x4x512xf32> to vector<4x512xf32>
    %cst_92 = arith.constant 0.000000e+00 : f32
    %194 = vector.broadcast %cst_92 : f32 to vector<8x512xf32>
    %c0_93 = arith.constant 0 : index
    %c0_94 = arith.constant 0 : index
    %c0_95 = arith.constant 0 : index
    %195 = vector.load %arg2[%c0_93, %c0_94, %c0_95] : memref<9x8x4xf32, #tpu.memory_space<vmem>>, vector<1x8x4xf32>
    %196 = vector.shape_cast %195 : vector<1x8x4xf32> to vector<8x4xf32>
    %197 = vector.extract_strided_slice %193 {offsets = [0, 491], sizes = [4, 21], strides = [1, 1]} : vector<4x512xf32> to vector<4x21xf32>
    %198 = vector.extract_strided_slice %193 {offsets = [0, 0], sizes = [4, 491], strides = [1, 1]} : vector<4x512xf32> to vector<4x491xf32>
    %199 = tpu.concatenate %197, %198 in 1 : vector<4x21xf32>, vector<4x491xf32> -> vector<4x512xf32>
    %cst_96 = arith.constant dense<0.000000e+00> : vector<8x512xf32>
    %200 = tpu.matmul %196, %199, %cst_96 {dimension_numbers = #tpu.dot_dimension_numbers<[1], [0], [0], [1], [0, 0, 1, 1], [], []>} : vector<8x4xf32>, vector<4x512xf32>, vector<8x512xf32> -> vector<8x512xf32>
    %201 = arith.addf %194, %200 : vector<8x512xf32>
    %c1_97 = arith.constant 1 : index
    %c0_98 = arith.constant 0 : index
    %c0_99 = arith.constant 0 : index
    %202 = vector.load %arg2[%c1_97, %c0_98, %c0_99] : memref<9x8x4xf32, #tpu.memory_space<vmem>>, vector<1x8x4xf32>
    %203 = vector.shape_cast %202 : vector<1x8x4xf32> to vector<8x4xf32>
    %204 = vector.extract_strided_slice %193 {offsets = [0, 492], sizes = [4, 20], strides = [1, 1]} : vector<4x512xf32> to vector<4x20xf32>
    %205 = vector.extract_strided_slice %193 {offsets = [0, 0], sizes = [4, 492], strides = [1, 1]} : vector<4x512xf32> to vector<4x492xf32>
    %206 = tpu.concatenate %204, %205 in 1 : vector<4x20xf32>, vector<4x492xf32> -> vector<4x512xf32>
    %cst_100 = arith.constant dense<0.000000e+00> : vector<8x512xf32>
    %207 = tpu.matmul %203, %206, %cst_100 {dimension_numbers = #tpu.dot_dimension_numbers<[1], [0], [0], [1], [0, 0, 1, 1], [], []>} : vector<8x4xf32>, vector<4x512xf32>, vector<8x512xf32> -> vector<8x512xf32>
    %208 = arith.addf %201, %207 : vector<8x512xf32>
    %c2_101 = arith.constant 2 : index
    %c0_102 = arith.constant 0 : index
    %c0_103 = arith.constant 0 : index
    %209 = vector.load %arg2[%c2_101, %c0_102, %c0_103] : memref<9x8x4xf32, #tpu.memory_space<vmem>>, vector<1x8x4xf32>
    %210 = vector.shape_cast %209 : vector<1x8x4xf32> to vector<8x4xf32>
    %211 = vector.extract_strided_slice %193 {offsets = [0, 493], sizes = [4, 19], strides = [1, 1]} : vector<4x512xf32> to vector<4x19xf32>
    %212 = vector.extract_strided_slice %193 {offsets = [0, 0], sizes = [4, 493], strides = [1, 1]} : vector<4x512xf32> to vector<4x493xf32>
    %213 = tpu.concatenate %211, %212 in 1 : vector<4x19xf32>, vector<4x493xf32> -> vector<4x512xf32>
    %cst_104 = arith.constant dense<0.000000e+00> : vector<8x512xf32>
    %214 = tpu.matmul %210, %213, %cst_104 {dimension_numbers = #tpu.dot_dimension_numbers<[1], [0], [0], [1], [0, 0, 1, 1], [], []>} : vector<8x4xf32>, vector<4x512xf32>, vector<8x512xf32> -> vector<8x512xf32>
    %215 = arith.addf %208, %214 : vector<8x512xf32>
    %c3_105 = arith.constant 3 : index
    %c0_106 = arith.constant 0 : index
    %c0_107 = arith.constant 0 : index
    %216 = vector.load %arg2[%c3_105, %c0_106, %c0_107] : memref<9x8x4xf32, #tpu.memory_space<vmem>>, vector<1x8x4xf32>
    %217 = vector.shape_cast %216 : vector<1x8x4xf32> to vector<8x4xf32>
    %218 = vector.extract_strided_slice %193 {offsets = [0, 511], sizes = [4, 1], strides = [1, 1]} : vector<4x512xf32> to vector<4x1xf32>
    %219 = vector.extract_strided_slice %193 {offsets = [0, 0], sizes = [4, 511], strides = [1, 1]} : vector<4x512xf32> to vector<4x511xf32>
    %220 = tpu.concatenate %218, %219 in 1 : vector<4x1xf32>, vector<4x511xf32> -> vector<4x512xf32>
    %cst_108 = arith.constant dense<0.000000e+00> : vector<8x512xf32>
    %221 = tpu.matmul %217, %220, %cst_108 {dimension_numbers = #tpu.dot_dimension_numbers<[1], [0], [0], [1], [0, 0, 1, 1], [], []>} : vector<8x4xf32>, vector<4x512xf32>, vector<8x512xf32> -> vector<8x512xf32>
    %222 = arith.addf %215, %221 : vector<8x512xf32>
    %c4_109 = arith.constant 4 : index
    %c0_110 = arith.constant 0 : index
    %c0_111 = arith.constant 0 : index
    %223 = vector.load %arg2[%c4_109, %c0_110, %c0_111] : memref<9x8x4xf32, #tpu.memory_space<vmem>>, vector<1x8x4xf32>
    %224 = vector.shape_cast %223 : vector<1x8x4xf32> to vector<8x4xf32>
    %cst_112 = arith.constant dense<0.000000e+00> : vector<8x512xf32>
    %225 = tpu.matmul %224, %193, %cst_112 {dimension_numbers = #tpu.dot_dimension_numbers<[1], [0], [0], [1], [0, 0, 1, 1], [], []>} : vector<8x4xf32>, vector<4x512xf32>, vector<8x512xf32> -> vector<8x512xf32>
    %226 = arith.addf %222, %225 : vector<8x512xf32>
    %c5_113 = arith.constant 5 : index
    %c0_114 = arith.constant 0 : index
    %c0_115 = arith.constant 0 : index
    %227 = vector.load %arg2[%c5_113, %c0_114, %c0_115] : memref<9x8x4xf32, #tpu.memory_space<vmem>>, vector<1x8x4xf32>
    %228 = vector.shape_cast %227 : vector<1x8x4xf32> to vector<8x4xf32>
    %229 = vector.extract_strided_slice %193 {offsets = [0, 1], sizes = [4, 511], strides = [1, 1]} : vector<4x512xf32> to vector<4x511xf32>
    %230 = vector.extract_strided_slice %193 {offsets = [0, 0], sizes = [4, 1], strides = [1, 1]} : vector<4x512xf32> to vector<4x1xf32>
    %231 = tpu.concatenate %229, %230 in 1 : vector<4x511xf32>, vector<4x1xf32> -> vector<4x512xf32>
    %cst_116 = arith.constant dense<0.000000e+00> : vector<8x512xf32>
    %232 = tpu.matmul %228, %231, %cst_116 {dimension_numbers = #tpu.dot_dimension_numbers<[1], [0], [0], [1], [0, 0, 1, 1], [], []>} : vector<8x4xf32>, vector<4x512xf32>, vector<8x512xf32> -> vector<8x512xf32>
    %233 = arith.addf %226, %232 : vector<8x512xf32>
    %c6_117 = arith.constant 6 : index
    %c0_118 = arith.constant 0 : index
    %c0_119 = arith.constant 0 : index
    %234 = vector.load %arg2[%c6_117, %c0_118, %c0_119] : memref<9x8x4xf32, #tpu.memory_space<vmem>>, vector<1x8x4xf32>
    %235 = vector.shape_cast %234 : vector<1x8x4xf32> to vector<8x4xf32>
    %236 = vector.extract_strided_slice %193 {offsets = [0, 19], sizes = [4, 493], strides = [1, 1]} : vector<4x512xf32> to vector<4x493xf32>
    %237 = vector.extract_strided_slice %193 {offsets = [0, 0], sizes = [4, 19], strides = [1, 1]} : vector<4x512xf32> to vector<4x19xf32>
    %238 = tpu.concatenate %236, %237 in 1 : vector<4x493xf32>, vector<4x19xf32> -> vector<4x512xf32>
    %cst_120 = arith.constant dense<0.000000e+00> : vector<8x512xf32>
    %239 = tpu.matmul %235, %238, %cst_120 {dimension_numbers = #tpu.dot_dimension_numbers<[1], [0], [0], [1], [0, 0, 1, 1], [], []>} : vector<8x4xf32>, vector<4x512xf32>, vector<8x512xf32> -> vector<8x512xf32>
    %240 = arith.addf %233, %239 : vector<8x512xf32>
    %c7_121 = arith.constant 7 : index
    %c0_122 = arith.constant 0 : index
    %c0_123 = arith.constant 0 : index
    %241 = vector.load %arg2[%c7_121, %c0_122, %c0_123] : memref<9x8x4xf32, #tpu.memory_space<vmem>>, vector<1x8x4xf32>
    %242 = vector.shape_cast %241 : vector<1x8x4xf32> to vector<8x4xf32>
    %243 = vector.extract_strided_slice %193 {offsets = [0, 20], sizes = [4, 492], strides = [1, 1]} : vector<4x512xf32> to vector<4x492xf32>
    %244 = vector.extract_strided_slice %193 {offsets = [0, 0], sizes = [4, 20], strides = [1, 1]} : vector<4x512xf32> to vector<4x20xf32>
    %245 = tpu.concatenate %243, %244 in 1 : vector<4x492xf32>, vector<4x20xf32> -> vector<4x512xf32>
    %cst_124 = arith.constant dense<0.000000e+00> : vector<8x512xf32>
    %246 = tpu.matmul %242, %245, %cst_124 {dimension_numbers = #tpu.dot_dimension_numbers<[1], [0], [0], [1], [0, 0, 1, 1], [], []>} : vector<8x4xf32>, vector<4x512xf32>, vector<8x512xf32> -> vector<8x512xf32>
    %247 = arith.addf %240, %246 : vector<8x512xf32>
    %c8_125 = arith.constant 8 : index
    %c0_126 = arith.constant 0 : index
    %c0_127 = arith.constant 0 : index
    %248 = vector.load %arg2[%c8_125, %c0_126, %c0_127] : memref<9x8x4xf32, #tpu.memory_space<vmem>>, vector<1x8x4xf32>
    %249 = vector.shape_cast %248 : vector<1x8x4xf32> to vector<8x4xf32>
    %250 = vector.extract_strided_slice %193 {offsets = [0, 21], sizes = [4, 491], strides = [1, 1]} : vector<4x512xf32> to vector<4x491xf32>
    %251 = vector.extract_strided_slice %193 {offsets = [0, 0], sizes = [4, 21], strides = [1, 1]} : vector<4x512xf32> to vector<4x21xf32>
    %252 = tpu.concatenate %250, %251 in 1 : vector<4x491xf32>, vector<4x21xf32> -> vector<4x512xf32>
    %cst_128 = arith.constant dense<0.000000e+00> : vector<8x512xf32>
    %253 = tpu.matmul %249, %252, %cst_128 {dimension_numbers = #tpu.dot_dimension_numbers<[1], [0], [0], [1], [0, 0, 1, 1], [], []>} : vector<8x4xf32>, vector<4x512xf32>, vector<8x512xf32> -> vector<8x512xf32>
    %254 = arith.addf %247, %253 : vector<8x512xf32>
    %255 = vector.broadcast %21 : vector<8x1xf32> to vector<8x512xf32>
    %256 = arith.addf %254, %255 : vector<8x512xf32>
    %cst_129 = arith.constant 0.000000e+00 : f32
    %257 = vector.broadcast %cst_129 : f32 to vector<8x512xf32>
    %258 = arith.maximumf %256, %257 : vector<8x512xf32>
    %cst_130 = arith.constant 0.000000e+00 : f32
    %259 = vector.shape_cast %20 : vector<1x512xi1> to vector<1x512xi1>
    %260 = vector.broadcast %259 : vector<1x512xi1> to vector<8x512xi1>
    %261 = vector.broadcast %cst_130 : f32 to vector<8x512xf32>
    %262 = arith.select %260, %258, %261 : vector<8x512xi1>, vector<8x512xf32>
    %cst_131 = arith.constant 0.000000e+00 : f32
    %263 = vector.broadcast %cst_131 : f32 to vector<8x512xf32>
    %c0_132 = arith.constant 0 : index
    %c0_133 = arith.constant 0 : index
    %c0_134 = arith.constant 0 : index
    %264 = vector.load %arg4[%c0_132, %c0_133, %c0_134] : memref<9x8x8xf32, #tpu.memory_space<vmem>>, vector<1x8x8xf32>
    %265 = vector.shape_cast %264 : vector<1x8x8xf32> to vector<8x8xf32>
    %266 = vector.extract_strided_slice %262 {offsets = [0, 491], sizes = [8, 21], strides = [1, 1]} : vector<8x512xf32> to vector<8x21xf32>
    %267 = vector.extract_strided_slice %262 {offsets = [0, 0], sizes = [8, 491], strides = [1, 1]} : vector<8x512xf32> to vector<8x491xf32>
    %268 = tpu.concatenate %266, %267 in 1 : vector<8x21xf32>, vector<8x491xf32> -> vector<8x512xf32>
    %cst_135 = arith.constant dense<0.000000e+00> : vector<8x512xf32>
    %269 = tpu.matmul %265, %268, %cst_135 {dimension_numbers = #tpu.dot_dimension_numbers<[1], [0], [0], [1], [0, 0, 1, 1], [], []>} : vector<8x8xf32>, vector<8x512xf32>, vector<8x512xf32> -> vector<8x512xf32>
    %270 = arith.addf %263, %269 : vector<8x512xf32>
    %c1_136 = arith.constant 1 : index
    %c0_137 = arith.constant 0 : index
    %c0_138 = arith.constant 0 : index
    %271 = vector.load %arg4[%c1_136, %c0_137, %c0_138] : memref<9x8x8xf32, #tpu.memory_space<vmem>>, vector<1x8x8xf32>
    %272 = vector.shape_cast %271 : vector<1x8x8xf32> to vector<8x8xf32>
    %273 = vector.extract_strided_slice %262 {offsets = [0, 492], sizes = [8, 20], strides = [1, 1]} : vector<8x512xf32> to vector<8x20xf32>
    %274 = vector.extract_strided_slice %262 {offsets = [0, 0], sizes = [8, 492], strides = [1, 1]} : vector<8x512xf32> to vector<8x492xf32>
    %275 = tpu.concatenate %273, %274 in 1 : vector<8x20xf32>, vector<8x492xf32> -> vector<8x512xf32>
    %cst_139 = arith.constant dense<0.000000e+00> : vector<8x512xf32>
    %276 = tpu.matmul %272, %275, %cst_139 {dimension_numbers = #tpu.dot_dimension_numbers<[1], [0], [0], [1], [0, 0, 1, 1], [], []>} : vector<8x8xf32>, vector<8x512xf32>, vector<8x512xf32> -> vector<8x512xf32>
    %277 = arith.addf %270, %276 : vector<8x512xf32>
    %c2_140 = arith.constant 2 : index
    %c0_141 = arith.constant 0 : index
    %c0_142 = arith.constant 0 : index
    %278 = vector.load %arg4[%c2_140, %c0_141, %c0_142] : memref<9x8x8xf32, #tpu.memory_space<vmem>>, vector<1x8x8xf32>
    %279 = vector.shape_cast %278 : vector<1x8x8xf32> to vector<8x8xf32>
    %280 = vector.extract_strided_slice %262 {offsets = [0, 493], sizes = [8, 19], strides = [1, 1]} : vector<8x512xf32> to vector<8x19xf32>
    %281 = vector.extract_strided_slice %262 {offsets = [0, 0], sizes = [8, 493], strides = [1, 1]} : vector<8x512xf32> to vector<8x493xf32>
    %282 = tpu.concatenate %280, %281 in 1 : vector<8x19xf32>, vector<8x493xf32> -> vector<8x512xf32>
    %cst_143 = arith.constant dense<0.000000e+00> : vector<8x512xf32>
    %283 = tpu.matmul %279, %282, %cst_143 {dimension_numbers = #tpu.dot_dimension_numbers<[1], [0], [0], [1], [0, 0, 1, 1], [], []>} : vector<8x8xf32>, vector<8x512xf32>, vector<8x512xf32> -> vector<8x512xf32>
    %284 = arith.addf %277, %283 : vector<8x512xf32>
    %c3_144 = arith.constant 3 : index
    %c0_145 = arith.constant 0 : index
    %c0_146 = arith.constant 0 : index
    %285 = vector.load %arg4[%c3_144, %c0_145, %c0_146] : memref<9x8x8xf32, #tpu.memory_space<vmem>>, vector<1x8x8xf32>
    %286 = vector.shape_cast %285 : vector<1x8x8xf32> to vector<8x8xf32>
    %287 = vector.extract_strided_slice %262 {offsets = [0, 511], sizes = [8, 1], strides = [1, 1]} : vector<8x512xf32> to vector<8x1xf32>
    %288 = vector.extract_strided_slice %262 {offsets = [0, 0], sizes = [8, 511], strides = [1, 1]} : vector<8x512xf32> to vector<8x511xf32>
    %289 = tpu.concatenate %287, %288 in 1 : vector<8x1xf32>, vector<8x511xf32> -> vector<8x512xf32>
    %cst_147 = arith.constant dense<0.000000e+00> : vector<8x512xf32>
    %290 = tpu.matmul %286, %289, %cst_147 {dimension_numbers = #tpu.dot_dimension_numbers<[1], [0], [0], [1], [0, 0, 1, 1], [], []>} : vector<8x8xf32>, vector<8x512xf32>, vector<8x512xf32> -> vector<8x512xf32>
    %291 = arith.addf %284, %290 : vector<8x512xf32>
    %c4_148 = arith.constant 4 : index
    %c0_149 = arith.constant 0 : index
    %c0_150 = arith.constant 0 : index
    %292 = vector.load %arg4[%c4_148, %c0_149, %c0_150] : memref<9x8x8xf32, #tpu.memory_space<vmem>>, vector<1x8x8xf32>
    %293 = vector.shape_cast %292 : vector<1x8x8xf32> to vector<8x8xf32>
    %cst_151 = arith.constant dense<0.000000e+00> : vector<8x512xf32>
    %294 = tpu.matmul %293, %262, %cst_151 {dimension_numbers = #tpu.dot_dimension_numbers<[1], [0], [0], [1], [0, 0, 1, 1], [], []>} : vector<8x8xf32>, vector<8x512xf32>, vector<8x512xf32> -> vector<8x512xf32>
    %295 = arith.addf %291, %294 : vector<8x512xf32>
    %c5_152 = arith.constant 5 : index
    %c0_153 = arith.constant 0 : index
    %c0_154 = arith.constant 0 : index
    %296 = vector.load %arg4[%c5_152, %c0_153, %c0_154] : memref<9x8x8xf32, #tpu.memory_space<vmem>>, vector<1x8x8xf32>
    %297 = vector.shape_cast %296 : vector<1x8x8xf32> to vector<8x8xf32>
    %298 = vector.extract_strided_slice %262 {offsets = [0, 1], sizes = [8, 511], strides = [1, 1]} : vector<8x512xf32> to vector<8x511xf32>
    %299 = vector.extract_strided_slice %262 {offsets = [0, 0], sizes = [8, 1], strides = [1, 1]} : vector<8x512xf32> to vector<8x1xf32>
    %300 = tpu.concatenate %298, %299 in 1 : vector<8x511xf32>, vector<8x1xf32> -> vector<8x512xf32>
    %cst_155 = arith.constant dense<0.000000e+00> : vector<8x512xf32>
    %301 = tpu.matmul %297, %300, %cst_155 {dimension_numbers = #tpu.dot_dimension_numbers<[1], [0], [0], [1], [0, 0, 1, 1], [], []>} : vector<8x8xf32>, vector<8x512xf32>, vector<8x512xf32> -> vector<8x512xf32>
    %302 = arith.addf %295, %301 : vector<8x512xf32>
    %c6_156 = arith.constant 6 : index
    %c0_157 = arith.constant 0 : index
    %c0_158 = arith.constant 0 : index
    %303 = vector.load %arg4[%c6_156, %c0_157, %c0_158] : memref<9x8x8xf32, #tpu.memory_space<vmem>>, vector<1x8x8xf32>
    %304 = vector.shape_cast %303 : vector<1x8x8xf32> to vector<8x8xf32>
    %305 = vector.extract_strided_slice %262 {offsets = [0, 19], sizes = [8, 493], strides = [1, 1]} : vector<8x512xf32> to vector<8x493xf32>
    %306 = vector.extract_strided_slice %262 {offsets = [0, 0], sizes = [8, 19], strides = [1, 1]} : vector<8x512xf32> to vector<8x19xf32>
    %307 = tpu.concatenate %305, %306 in 1 : vector<8x493xf32>, vector<8x19xf32> -> vector<8x512xf32>
    %cst_159 = arith.constant dense<0.000000e+00> : vector<8x512xf32>
    %308 = tpu.matmul %304, %307, %cst_159 {dimension_numbers = #tpu.dot_dimension_numbers<[1], [0], [0], [1], [0, 0, 1, 1], [], []>} : vector<8x8xf32>, vector<8x512xf32>, vector<8x512xf32> -> vector<8x512xf32>
    %309 = arith.addf %302, %308 : vector<8x512xf32>
    %c7_160 = arith.constant 7 : index
    %c0_161 = arith.constant 0 : index
    %c0_162 = arith.constant 0 : index
    %310 = vector.load %arg4[%c7_160, %c0_161, %c0_162] : memref<9x8x8xf32, #tpu.memory_space<vmem>>, vector<1x8x8xf32>
    %311 = vector.shape_cast %310 : vector<1x8x8xf32> to vector<8x8xf32>
    %312 = vector.extract_strided_slice %262 {offsets = [0, 20], sizes = [8, 492], strides = [1, 1]} : vector<8x512xf32> to vector<8x492xf32>
    %313 = vector.extract_strided_slice %262 {offsets = [0, 0], sizes = [8, 20], strides = [1, 1]} : vector<8x512xf32> to vector<8x20xf32>
    %314 = tpu.concatenate %312, %313 in 1 : vector<8x492xf32>, vector<8x20xf32> -> vector<8x512xf32>
    %cst_163 = arith.constant dense<0.000000e+00> : vector<8x512xf32>
    %315 = tpu.matmul %311, %314, %cst_163 {dimension_numbers = #tpu.dot_dimension_numbers<[1], [0], [0], [1], [0, 0, 1, 1], [], []>} : vector<8x8xf32>, vector<8x512xf32>, vector<8x512xf32> -> vector<8x512xf32>
    %316 = arith.addf %309, %315 : vector<8x512xf32>
    %c8_164 = arith.constant 8 : index
    %c0_165 = arith.constant 0 : index
    %c0_166 = arith.constant 0 : index
    %317 = vector.load %arg4[%c8_164, %c0_165, %c0_166] : memref<9x8x8xf32, #tpu.memory_space<vmem>>, vector<1x8x8xf32>
    %318 = vector.shape_cast %317 : vector<1x8x8xf32> to vector<8x8xf32>
    %319 = vector.extract_strided_slice %262 {offsets = [0, 21], sizes = [8, 491], strides = [1, 1]} : vector<8x512xf32> to vector<8x491xf32>
    %320 = vector.extract_strided_slice %262 {offsets = [0, 0], sizes = [8, 21], strides = [1, 1]} : vector<8x512xf32> to vector<8x21xf32>
    %321 = tpu.concatenate %319, %320 in 1 : vector<8x491xf32>, vector<8x21xf32> -> vector<8x512xf32>
    %cst_167 = arith.constant dense<0.000000e+00> : vector<8x512xf32>
    %322 = tpu.matmul %318, %321, %cst_167 {dimension_numbers = #tpu.dot_dimension_numbers<[1], [0], [0], [1], [0, 0, 1, 1], [], []>} : vector<8x8xf32>, vector<8x512xf32>, vector<8x512xf32> -> vector<8x512xf32>
    %323 = arith.addf %316, %322 : vector<8x512xf32>
    %324 = vector.broadcast %22 : vector<8x1xf32> to vector<8x512xf32>
    %325 = arith.addf %323, %324 : vector<8x512xf32>
    %c0_168 = arith.constant 0 : index
    %c0_169 = arith.constant 0 : index
    %326 = vector.load %arg6[%c0_168, %c0_169] : memref<8x4xf32, #tpu.memory_space<vmem>>, vector<8x4xf32>
    %327 = vector.extract_strided_slice %326 {offsets = [0, 0], sizes = [8, 1], strides = [1, 1]} : vector<8x4xf32> to vector<8x1xf32>
    %328 = vector.extract_strided_slice %193 {offsets = [0, 0], sizes = [1, 512], strides = [1, 1]} : vector<4x512xf32> to vector<1x512xf32>
    %329 = vector.broadcast %327 : vector<8x1xf32> to vector<8x512xf32>
    %330 = vector.broadcast %328 : vector<1x512xf32> to vector<8x512xf32>
    %331 = arith.mulf %329, %330 : vector<8x512xf32>
    %332 = vector.extract_strided_slice %326 {offsets = [0, 1], sizes = [8, 1], strides = [1, 1]} : vector<8x4xf32> to vector<8x1xf32>
    %333 = vector.extract_strided_slice %193 {offsets = [1, 0], sizes = [1, 512], strides = [1, 1]} : vector<4x512xf32> to vector<1x512xf32>
    %334 = vector.broadcast %332 : vector<8x1xf32> to vector<8x512xf32>
    %335 = vector.broadcast %333 : vector<1x512xf32> to vector<8x512xf32>
    %336 = arith.mulf %334, %335 : vector<8x512xf32>
    %337 = arith.addf %331, %336 : vector<8x512xf32>
    %338 = vector.extract_strided_slice %326 {offsets = [0, 2], sizes = [8, 1], strides = [1, 1]} : vector<8x4xf32> to vector<8x1xf32>
    %339 = vector.extract_strided_slice %193 {offsets = [2, 0], sizes = [1, 512], strides = [1, 1]} : vector<4x512xf32> to vector<1x512xf32>
    %340 = vector.broadcast %338 : vector<8x1xf32> to vector<8x512xf32>
    %341 = vector.broadcast %339 : vector<1x512xf32> to vector<8x512xf32>
    %342 = arith.mulf %340, %341 : vector<8x512xf32>
    %343 = arith.addf %337, %342 : vector<8x512xf32>
    %344 = vector.extract_strided_slice %326 {offsets = [0, 3], sizes = [8, 1], strides = [1, 1]} : vector<8x4xf32> to vector<8x1xf32>
    %345 = vector.extract_strided_slice %193 {offsets = [3, 0], sizes = [1, 512], strides = [1, 1]} : vector<4x512xf32> to vector<1x512xf32>
    %346 = vector.broadcast %344 : vector<8x1xf32> to vector<8x512xf32>
    %347 = vector.broadcast %345 : vector<1x512xf32> to vector<8x512xf32>
    %348 = arith.mulf %346, %347 : vector<8x512xf32>
    %349 = arith.addf %343, %348 : vector<8x512xf32>
    %c0_170 = arith.constant 0 : index
    %c0_171 = arith.constant 0 : index
    %350 = vector.load %arg7[%c0_170, %c0_171] : memref<8x1xf32, #tpu.memory_space<vmem>>, vector<8x1xf32>
    %351 = vector.broadcast %350 : vector<8x1xf32> to vector<8x512xf32>
    %352 = arith.addf %349, %351 : vector<8x512xf32>
    %cst_172 = arith.constant 1.000000e+00 : f32
    %353 = vector.broadcast %cst_172 : f32 to vector<8x512xf32>
    %354 = arith.mulf %353, %352 : vector<8x512xf32>
    %355 = arith.addf %325, %354 : vector<8x512xf32>
    %cst_173 = arith.constant 0.000000e+00 : f32
    %356 = vector.broadcast %cst_173 : f32 to vector<8x512xf32>
    %357 = arith.maximumf %355, %356 : vector<8x512xf32>
    %c1_174 = arith.constant 1 : index
    %c0_175 = arith.constant 0 : index
    %c0_176 = arith.constant 0 : index
    %358 = vector.load %arg8[%c1_174, %c0_175, %c0_176] : memref<2x8x512xf32, #tpu.memory_space<vmem>>, vector<1x8x512xf32>
    %359 = vector.shape_cast %358 : vector<1x8x512xf32> to vector<8x512xf32>
    %360 = vector.shape_cast %357 : vector<8x512xf32> to vector<1x8x512xf32>
    tpu.vector_store %arg8[%c1_174, %c0_175, %c0_176], %360 {strides = array<i32>} : memref<2x8x512xf32, #tpu.memory_space<vmem>>, vector<1x8x512xf32>,
    return
  }
  func.func @transform_0(%arg0: i32) -> (i32, i32, i32) {
    %c0_i32 = arith.constant 0 : i32
    %c0_i32_0 = arith.constant 0 : i32
    %c0_i32_1 = arith.constant 0 : i32
    return %arg0, %c0_i32, %c0_i32_0 : i32, i32, i32
  }
  func.func @transform_1(%arg0: i32) -> (i32, i32, i32) {
    %c0_i32 = arith.constant 0 : i32
    %c0_i32_0 = arith.constant 0 : i32
    %c0_i32_1 = arith.constant 0 : i32
    %c0_i32_2 = arith.constant 0 : i32
    return %c0_i32, %c0_i32_0, %c0_i32_1 : i32, i32, i32
  }
  func.func @transform_2(%arg0: i32) -> (i32, i32) {
    %c0_i32 = arith.constant 0 : i32
    %c0_i32_0 = arith.constant 0 : i32
    %c0_i32_1 = arith.constant 0 : i32
    return %c0_i32, %c0_i32_0 : i32, i32
  }
  func.func @transform_3(%arg0: i32) -> (i32, i32, i32) {
    %c0_i32 = arith.constant 0 : i32
    %c0_i32_0 = arith.constant 0 : i32
    %c0_i32_1 = arith.constant 0 : i32
    %c0_i32_2 = arith.constant 0 : i32
    return %c0_i32, %c0_i32_0, %c0_i32_1 : i32, i32, i32
  }
  func.func @transform_4(%arg0: i32) -> (i32, i32) {
    %c0_i32 = arith.constant 0 : i32
    %c0_i32_0 = arith.constant 0 : i32
    %c0_i32_1 = arith.constant 0 : i32
    return %c0_i32, %c0_i32_0 : i32, i32
  }
  func.func @transform_5(%arg0: i32) -> (i32, i32) {
    %c0_i32 = arith.constant 0 : i32
    %c0_i32_0 = arith.constant 0 : i32
    %c0_i32_1 = arith.constant 0 : i32
    return %c0_i32, %c0_i32_0 : i32, i32
  }
  func.func @transform_6(%arg0: i32) -> (i32, i32) {
    %c0_i32 = arith.constant 0 : i32
    %c0_i32_0 = arith.constant 0 : i32
    %c0_i32_1 = arith.constant 0 : i32
    return %c0_i32, %c0_i32_0 : i32, i32
  }
  func.func @transform_7(%arg0: i32) -> (i32, i32, i32) {
    %c0_i32 = arith.constant 0 : i32
    %c0_i32_0 = arith.constant 0 : i32
    %c0_i32_1 = arith.constant 0 : i32
    return %arg0, %c0_i32, %c0_i32_0 : i32, i32, i32
  }
}

</mosaic_0001>

<llo_original>
// kernel: tpu_custom_call.1
$region0: #{tpu_custom_call.1}
  #allocation0 [shape = 'u32[]', space=smem, size = 0x4, offset = 0x4, fixed_abs, tag = 'smem constant byte address 0x4 - core index']
  #allocation1 [shape = 'u32[72,128]{1,0:T(1,128)}', space=vmem, size = 0x9000, scoped, tag = 'internal scratch']
  %s0 = inlined_call_operand.vmem [shape: f32[2,4,512], index: 0, kind: input, shape index: {}]
  %s1 = inlined_call_operand.vmem [shape: f32[9,8,4], index: 1, kind: input, shape index: {}]
  %s2 = inlined_call_operand.vmem [shape: f32[8,1], index: 2, kind: input, shape index: {}]
  %s3 = inlined_call_operand.vmem [shape: f32[9,8,8], index: 3, kind: input, shape index: {}]
  %s4 = inlined_call_operand.vmem [shape: f32[8,1], index: 4, kind: input, shape index: {}]
  %s5 = inlined_call_operand.vmem [shape: f32[8,4], index: 5, kind: input, shape index: {}]
  %s6 = inlined_call_operand.vmem [shape: f32[8,1], index: 6, kind: input, shape index: {}]
  %s7 = inlined_call_operand.hbm [shape: f32[2,8,512], index: 7, kind: output, shape index: {}]
  %s8 = sld [smem:[#allocation0]]
  $region38: #{tpu_custom_call.1} parent=0
    _
  %s10 = ssub.s32 1, %s8
  %s11 = scalar_select 0, %s10, %s8
  $region1: #{tpu_custom_call.1} parent=0
    #allocation2 [shape = 'u8[32768]{0}', space=vmem, size = 0x8000, scoped, tag = 'output window, operand 0, single buffered']
    #allocation3 [shape = 's32[1]{0}', space=sflag, size = 0x4, scoped, tag = 'scoped memory for tpu_custom_call.1']
    %12 = vsyncpa [#allocation3], 0
    // Predicated region
    $region2: #{tpu_custom_call.1} parent=1 // pred_check
      _
    $region3: #{tpu_custom_call.1} parent=1 // pred_check_branch
      %14 = sbr.rel (0) target = $region5
    $region4: #{tpu_custom_call.1} parent=1 // pred_region
      _
    $region5: #{tpu_custom_call.1} parent=1 // pred_fallthru
      _
    // Predicated region
    $region6: #{tpu_custom_call.1} parent=1 // pred_check
      _
    $region7: #{tpu_custom_call.1} parent=1 // pred_check_branch
      %16 = sbr.rel (0) target = $region9
    $region8: #{tpu_custom_call.1} parent=1 // pred_region
      _
    $region9: #{tpu_custom_call.1} parent=1 // pred_fallthru
      _
    // Predicated region
    $region10: #{tpu_custom_call.1} parent=1 // pred_check
      _
    $region11: #{tpu_custom_call.1} parent=1 // pred_check_branch
      %18 = sbr.rel (0) target = $region13
    $region12: #{tpu_custom_call.1} parent=1 // pred_region
      _
    $region13: #{tpu_custom_call.1} parent=1 // pred_fallthru
      _
    // Predicated region
    $region14: #{tpu_custom_call.1} parent=1 // pred_check
      _
    $region15: #{tpu_custom_call.1} parent=1 // pred_check_branch
      %20 = sbr.rel (0) target = $region17
    $region16: #{tpu_custom_call.1} parent=1 // pred_region
      _
    $region17: #{tpu_custom_call.1} parent=1 // pred_fallthru
      _
    // Predicated region
    $region18: #{tpu_custom_call.1} parent=1 // pred_check
      _
    $region19: #{tpu_custom_call.1} parent=1 // pred_check_branch
      %22 = sbr.rel (0) target = $region21
    $region20: #{tpu_custom_call.1} parent=1 // pred_region
      _
    $region21: #{tpu_custom_call.1} parent=1 // pred_fallthru
      _
    // Predicated region
    $region22: #{tpu_custom_call.1} parent=1 // pred_check
      _
    $region23: #{tpu_custom_call.1} parent=1 // pred_check_branch
      %24 = sbr.rel (0) target = $region25
    $region24: #{tpu_custom_call.1} parent=1 // pred_region
      _
    $region25: #{tpu_custom_call.1} parent=1 // pred_fallthru
      _
    // Predicated region
    $region26: #{tpu_custom_call.1} parent=1 // pred_check
      _
    $region27: #{tpu_custom_call.1} parent=1 // pred_check_branch
      %26 = sbr.rel (0) target = $region29
    $region28: #{tpu_custom_call.1} parent=1 // pred_region
      _
    $region29: #{tpu_custom_call.1} parent=1 // pred_fallthru
      _
    %v27 = vlaneseq
    %v28 = vand.u32 %v27, 127
    %v29 = vadd.s32 %v28, 128
    %v30 = vadd.s32 %v28, 256
    %v31 = vadd.s32 %v28, 384
    %v32 = vcvt.s32.f32 %v28
    %v33 = vcvt.s32.f32 %v29
    %v34 = vcvt.s32.f32 %v30
    %v35 = vcvt.s32.f32 %v31
    %v36 = vadd.f32 %v32, 0.5
    %v37 = vadd.f32 %v33, 0.5
    %v38 = vadd.f32 %v34, 0.5
    %v39 = vadd.f32 %v35, 0.5
    %v40 = vmul.f32 %v36, 0.05
    %v41 = vmul.f32 %v37, 0.05
    %v42 = vmul.f32 %v38, 0.05
    %v43 = vmul.f32 %v39, 0.05
    %v44 = vfloor.f32 %v40
    %v45 = vfloor.f32 %v41
    %v46 = vfloor.f32 %v42
    %v47 = vfloor.f32 %v43
    %v48 = vmul.f32 %v44, 20.0
    %v49 = vmul.f32 %v45, 20.0
    %v50 = vmul.f32 %v46, 20.0
    %v51 = vmul.f32 %v47, 20.0
    %v52 = vsub.f32 %v32, %v48
    %v53 = vsub.f32 %v33, %v49
    %v54 = vsub.f32 %v34, %v50
    %v55 = vsub.f32 %v35, %v51
    %vm56 = vcmp.ge.f32.partialorder %v44, 2.0
    %vm57 = vcmp.ge.f32.partialorder %v45, 2.0
    %vm58 = vcmp.ge.f32.partialorder %v46, 2.0
    %vm59 = vcmp.ge.f32.partialorder %v47, 2.0
    %vm60 = vcmp.lt.f32.partialorder %v44, 18.0
    %vm61 = vcmp.lt.f32.partialorder %v45, 18.0
    %vm62 = vcmp.lt.f32.partialorder %v46, 18.0
    %vm63 = vcmp.lt.f32.partialorder %v47, 18.0
    %vm64 = vmand %vm56, %vm60
    %vm65 = vmand %vm57, %vm61
    %vm66 = vmand %vm58, %vm62
    %vm67 = vmand %vm59, %vm63
    %vm68 = vcmp.ge.f32.partialorder %v52, 2.0
    %vm69 = vcmp.ge.f32.partialorder %v53, 2.0
    %vm70 = vcmp.ge.f32.partialorder %v54, 2.0
    %vm71 = vcmp.ge.f32.partialorder %v55, 2.0
    %vm72 = vmand %vm64, %vm68
    %vm73 = vmand %vm65, %vm69
    %vm74 = vmand %vm66, %vm70
    %vm75 = vmand %vm67, %vm71
    %vm76 = vcmp.lt.f32.partialorder %v52, 18.0
    %vm77 = vcmp.lt.f32.partialorder %v53, 18.0
    %vm78 = vcmp.lt.f32.partialorder %v54, 18.0
    %vm79 = vcmp.lt.f32.partialorder %v55, 18.0
    %vm80 = vmand %vm72, %vm76
    %vm81 = vmand %vm73, %vm77
    %vm82 = vmand %vm74, %vm78
    %vm83 = vmand %vm75, %vm79
    %v84 = vld [vmem:[%s2] sm:$0xff]
    %v85 = vld [vmem:[%s4] sm:$0xff]
    %v86 = vld [vmem:[%s0] sm:$0xff]
    %v87 = vld [vmem:[%s0 + $0x8] sm:$0xff]
    %v88 = vld [vmem:[%s1] sm:$0xff]
    %90 = vst [vmem:[#allocation1] ss:$2 sm:$0xff] %v87
    %v91 = vld.sshfl [vmem:[#allocation1 + $0x8] sm:$0xff pattern:$0x75316420]
    %92 = vrot.lane.b32.xlu0 %v91, 21
    %v93 = vpop.permute.xlu0 %92
    %96 = vst [vmem:[#allocation1] ss:$2 sm:$0xff] %v86
    %s97 = scalar_lea.vmem [#allocation1], 16
    %98 = vst [vmem:[%s97] ss:$2 sm:$0xff] %v87
    %v99 = vld.sshfl [vmem:[#allocation1] sm:$0xff pattern:$0x75316420]
    %v100 = vld.sshfl [vmem:[#allocation1 + $0x8] sm:$0xff pattern:$0x75316420]
    %v101 = vld.sshfl [vmem:[#allocation1 + $0x10] sm:$0xff pattern:$0x75316420]
    %v102 = vld.sshfl [vmem:[#allocation1 + $0x18] sm:$0xff pattern:$0x75316420]
    %103 = vrot.lane.b32.xlu0 %v99, 21
    %v104 = vpop.permute.xlu0 %103
    %105 = vrot.lane.b32.xlu0 %v100, 21
    %v106 = vpop.permute.xlu0 %105
    %107 = vrot.lane.b32.xlu0 %v101, 21
    %v108 = vpop.permute.xlu0 %107
    %109 = vrot.lane.b32.xlu0 %v102, 21
    %v110 = vpop.permute.xlu0 %109
    %vm111 = vcmask 171008
    %v112 = vsel %vm111, %v104, %v106
    %v113 = vsel %vm111, %v106, %v108
    %v114 = vsel %vm111, %v108, %v110
    %v116 = vsel %vm111, %v93, %v104
    %s117 = scalar_lea.vmem %s1, 8
    %v118 = vld [vmem:[%s117] sm:$0xff]
    %119 = vst [vmem:[#allocation1] ss:$2 sm:$0xff] %v87
    %v120 = vld.sshfl [vmem:[#allocation1 + $0x8] sm:$0xff pattern:$0x75316420]
    %121 = vrot.lane.b32.xlu0 %v120, 20
    %v122 = vpop.permute.xlu0 %121
    %124 = vst [vmem:[#allocation1] ss:$2 sm:$0xff] %v86
    %s125 = scalar_lea.vmem [#allocation1], 16
    %126 = vst [vmem:[%s125] ss:$2 sm:$0xff] %v87
    %v127 = vld.sshfl [vmem:[#allocation1] sm:$0xff pattern:$0x75316420]
    %v128 = vld.sshfl [vmem:[#allocation1 + $0x8] sm:$0xff pattern:$0x75316420]
    %v129 = vld.sshfl [vmem:[#allocation1 + $0x10] sm:$0xff pattern:$0x75316420]
    %v130 = vld.sshfl [vmem:[#allocation1 + $0x18] sm:$0xff pattern:$0x75316420]
    %131 = vrot.lane.b32.xlu0 %v127, 20
    %v132 = vpop.permute.xlu0 %131
    %133 = vrot.lane.b32.xlu0 %v128, 20
    %v134 = vpop.permute.xlu0 %133
    %135 = vrot.lane.b32.xlu0 %v129, 20
    %v136 = vpop.permute.xlu0 %135
    %137 = vrot.lane.b32.xlu0 %v130, 20
    %v138 = vpop.permute.xlu0 %137
    %vm139 = vcmask 162816
    %v140 = vsel %vm139, %v132, %v134
    %v141 = vsel %vm139, %v134, %v136
    %v142 = vsel %vm139, %v136, %v138
    %v144 = vsel %vm139, %v122, %v132
    %vm145 = vcmask 31744
    %v147 = vsel %vm145, %v118, 0
    %vm149 = vcmask 1043456
    %v151 = vsel %vm149, %v144, 0
    %v153 = vsel %vm149, %v140, 0
    %v155 = vsel %vm149, %v141, 0
    %v157 = vsel %vm149, %v142, 0
    %159 = vmatpush.msra.mxu0 0.0
    %160 = vmatpush.msra.mxu0 0.0
    %161 = vmatpush.msra.mxu0 0.0
    %162 = vmatpush.msra.mxu0 0.0
    %163 = vmatpush.msra.mxu0 0.0
    %164 = vmatpush.msra.mxu0 0.0
    %165 = vmatpush.msra.mxu0 0.0
    %166 = vmatpush.msra.mxu0 0.0
    %167 = vmatpush.msra.mxu0 0.0
    %168 = vmatpush.msra.mxu0 0.0
    %169 = vmatpush.msra.mxu0 0.0
    %170 = vmatpush.msra.mxu0 0.0
    %171 = vmatpush.msra.mxu0 0.0
    %172 = vmatpush.msra.mxu0 0.0
    %173 = vmatpush.msra.mxu0 0.0
    %174 = vmatpush.msra.mxu0 %v151
    %175 = vmatmul.f32.gmra.mxu0 %v147
    %v176 = vpop.f32.mrf.mxu0
    %v177 = vadd.f32 0.0, %v176
    %178 = vdwg.mxu0
    %179 = vmatpush.msra.mxu0 0.0
    %180 = vmatpush.msra.mxu0 0.0
    %181 = vmatpush.msra.mxu0 0.0
    %182 = vmatpush.msra.mxu0 0.0
    %183 = vmatpush.msra.mxu0 0.0
    %184 = vmatpush.msra.mxu0 0.0
    %185 = vmatpush.msra.mxu0 0.0
    %186 = vmatpush.msra.mxu0 0.0
    %187 = vmatpush.msra.mxu0 0.0
    %188 = vmatpush.msra.mxu0 0.0
    %189 = vmatpush.msra.mxu0 0.0
    %190 = vmatpush.msra.mxu0 0.0
    %191 = vmatpush.msra.mxu0 0.0
    %192 = vmatpush.msra.mxu0 0.0
    %193 = vmatpush.msra.mxu0 0.0
    %194 = vmatpush.msra.mxu0 %v153
    %195 = vmatmul.f32.gmra.mxu0 %v147
    %v196 = vpop.f32.mrf.mxu0
    %v197 = vadd.f32 0.0, %v196
    %198 = vdwg.mxu0
    %199 = vmatpush.msra.mxu0 0.0
    %200 = vmatpush.msra.mxu0 0.0
    %201 = vmatpush.msra.mxu0 0.0
    %202 = vmatpush.msra.mxu0 0.0
    %203 = vmatpush.msra.mxu0 0.0
    %204 = vmatpush.msra.mxu0 0.0
    %205 = vmatpush.msra.mxu0 0.0
    %206 = vmatpush.msra.mxu0 0.0
    %207 = vmatpush.msra.mxu0 0.0
    %208 = vmatpush.msra.mxu0 0.0
    %209 = vmatpush.msra.mxu0 0.0
    %210 = vmatpush.msra.mxu0 0.0
    %211 = vmatpush.msra.mxu0 0.0
    %212 = vmatpush.msra.mxu0 0.0
    %213 = vmatpush.msra.mxu0 0.0
    %214 = vmatpush.msra.mxu0 %v155
    %215 = vmatmul.f32.gmra.mxu0 %v147
    %v216 = vpop.f32.mrf.mxu0
    %v217 = vadd.f32 0.0, %v216
    %218 = vdwg.mxu0
    %219 = vmatpush.msra.mxu0 0.0
    %220 = vmatpush.msra.mxu0 0.0
    %221 = vmatpush.msra.mxu0 0.0
    %222 = vmatpush.msra.mxu0 0.0
    %223 = vmatpush.msra.mxu0 0.0
    %224 = vmatpush.msra.mxu0 0.0
    %225 = vmatpush.msra.mxu0 0.0
    %226 = vmatpush.msra.mxu0 0.0
    %227 = vmatpush.msra.mxu0 0.0
    %228 = vmatpush.msra.mxu0 0.0
    %229 = vmatpush.msra.mxu0 0.0
    %230 = vmatpush.msra.mxu0 0.0
    %231 = vmatpush.msra.mxu0 0.0
    %232 = vmatpush.msra.mxu0 0.0
    %233 = vmatpush.msra.mxu0 0.0
    %234 = vmatpush.msra.mxu0 %v157
    %235 = vmatmul.f32.gmra.mxu0 %v147
    %v236 = vpop.f32.mrf.mxu0
    %v237 = vadd.f32 0.0, %v236
    %238 = vdwg.mxu0
    %v240 = vsel %vm145, %v88, 0
    %v243 = vsel %vm149, %v116, 0
    %v245 = vsel %vm149, %v112, 0
    %v247 = vsel %vm149, %v113, 0
    %v249 = vsel %vm149, %v114, 0
    %251 = vmatpush.msra.mxu0 0.0
    %252 = vmatpush.msra.mxu0 0.0
    %253 = vmatpush.msra.mxu0 0.0
    %254 = vmatpush.msra.mxu0 0.0
    %255 = vmatpush.msra.mxu0 0.0
    %256 = vmatpush.msra.mxu0 0.0
    %257 = vmatpush.msra.mxu0 0.0
    %258 = vmatpush.msra.mxu0 0.0
    %259 = vmatpush.msra.mxu0 0.0
    %260 = vmatpush.msra.mxu0 0.0
    %261 = vmatpush.msra.mxu0 0.0
    %262 = vmatpush.msra.mxu0 0.0
    %263 = vmatpush.msra.mxu0 0.0
    %264 = vmatpush.msra.mxu0 0.0
    %265 = vmatpush.msra.mxu0 0.0
    %266 = vmatpush.msra.mxu0 %v243
    %267 = vmatmul.f32.gmra.mxu0 %v240
    %v268 = vpop.f32.mrf.mxu0
    %v269 = vadd.f32 %v177, %v268
    %270 = vdwg.mxu0
    %271 = vmatpush.msra.mxu0 0.0
    %272 = vmatpush.msra.mxu0 0.0
    %273 = vmatpush.msra.mxu0 0.0
    %274 = vmatpush.msra.mxu0 0.0
    %275 = vmatpush.msra.mxu0 0.0
    %276 = vmatpush.msra.mxu0 0.0
    %277 = vmatpush.msra.mxu0 0.0
    %278 = vmatpush.msra.mxu0 0.0
    %279 = vmatpush.msra.mxu0 0.0
    %280 = vmatpush.msra.mxu0 0.0
    %281 = vmatpush.msra.mxu0 0.0
    %282 = vmatpush.msra.mxu0 0.0
    %283 = vmatpush.msra.mxu0 0.0
    %284 = vmatpush.msra.mxu0 0.0
    %285 = vmatpush.msra.mxu0 0.0
    %286 = vmatpush.msra.mxu0 %v245
    %287 = vmatmul.f32.gmra.mxu0 %v240
    %v288 = vpop.f32.mrf.mxu0
    %v289 = vadd.f32 %v197, %v288
    %290 = vdwg.mxu0
    %291 = vmatpush.msra.mxu0 0.0
    %292 = vmatpush.msra.mxu0 0.0
    %293 = vmatpush.msra.mxu0 0.0
    %294 = vmatpush.msra.mxu0 0.0
    %295 = vmatpush.msra.mxu0 0.0
    %296 = vmatpush.msra.mxu0 0.0
    %297 = vmatpush.msra.mxu0 0.0
    %298 = vmatpush.msra.mxu0 0.0
    %299 = vmatpush.msra.mxu0 0.0
    %300 = vmatpush.msra.mxu0 0.0
    %301 = vmatpush.msra.mxu0 0.0
    %302 = vmatpush.msra.mxu0 0.0
    %303 = vmatpush.msra.mxu0 0.0
    %304 = vmatpush.msra.mxu0 0.0
    %305 = vmatpush.msra.mxu0 0.0
    %306 = vmatpush.msra.mxu0 %v247
    %307 = vmatmul.f32.gmra.mxu0 %v240
    %v308 = vpop.f32.mrf.mxu0
    %v309 = vadd.f32 %v217, %v308
    %310 = vdwg.mxu0
    %311 = vmatpush.msra.mxu0 0.0
    %312 = vmatpush.msra.mxu0 0.0
    %313 = vmatpush.msra.mxu0 0.0
    %314 = vmatpush.msra.mxu0 0.0
    %315 = vmatpush.msra.mxu0 0.0
    %316 = vmatpush.msra.mxu0 0.0
    %317 = vmatpush.msra.mxu0 0.0
    %318 = vmatpush.msra.mxu0 0.0
    %319 = vmatpush.msra.mxu0 0.0
    %320 = vmatpush.msra.mxu0 0.0
    %321 = vmatpush.msra.mxu0 0.0
    %322 = vmatpush.msra.mxu0 0.0
    %323 = vmatpush.msra.mxu0 0.0
    %324 = vmatpush.msra.mxu0 0.0
    %325 = vmatpush.msra.mxu0 0.0
    %326 = vmatpush.msra.mxu0 %v249
    %327 = vmatmul.f32.gmra.mxu0 %v240
    %v328 = vpop.f32.mrf.mxu0
    %v329 = vadd.f32 %v237, %v328
    %330 = vdwg.mxu0
    %s331 = scalar_lea.vmem %s1, 16
    %v332 = vld [vmem:[%s331] sm:$0xff]
    %333 = vst [vmem:[#allocation1] ss:$2 sm:$0xff] %v87
    %v334 = vld.sshfl [vmem:[#allocation1 + $0x8] sm:$0xff pattern:$0x75316420]
    %335 = vrot.lane.b32.xlu0 %v334, 19
    %v336 = vpop.permute.xlu0 %335
    %338 = vst [vmem:[#allocation1] ss:$2 sm:$0xff] %v86
    %s339 = scalar_lea.vmem [#allocation1], 16
    %340 = vst [vmem:[%s339] ss:$2 sm:$0xff] %v87
    %v341 = vld.sshfl [vmem:[#allocation1] sm:$0xff pattern:$0x75316420]
    %v342 = vld.sshfl [vmem:[#allocation1 + $0x8] sm:$0xff pattern:$0x75316420]
    %v343 = vld.sshfl [vmem:[#allocation1 + $0x10] sm:$0xff pattern:$0x75316420]
    %v344 = vld.sshfl [vmem:[#allocation1 + $0x18] sm:$0xff pattern:$0x75316420]
    %345 = vrot.lane.b32.xlu0 %v341, 19
    %v346 = vpop.permute.xlu0 %345
    %347 = vrot.lane.b32.xlu0 %v342, 19
    %v348 = vpop.permute.xlu0 %347
    %349 = vrot.lane.b32.xlu0 %v343, 19
    %v350 = vpop.permute.xlu0 %349
    %351 = vrot.lane.b32.xlu0 %v344, 19
    %v352 = vpop.permute.xlu0 %351
    %vm353 = vcmask 154624
    %v354 = vsel %vm353, %v346, %v348
    %v355 = vsel %vm353, %v348, %v350
    %v356 = vsel %vm353, %v350, %v352
    %v358 = vsel %vm353, %v336, %v346
    %v360 = vsel %vm145, %v332, 0
    %v363 = vsel %vm149, %v358, 0
    %v365 = vsel %vm149, %v354, 0
    %v367 = vsel %vm149, %v355, 0
    %v369 = vsel %vm149, %v356, 0
    %371 = vmatpush.msra.mxu0 0.0
    %372 = vmatpush.msra.mxu0 0.0
    %373 = vmatpush.msra.mxu0 0.0
    %374 = vmatpush.msra.mxu0 0.0
    %375 = vmatpush.msra.mxu0 0.0
    %376 = vmatpush.msra.mxu0 0.0
    %377 = vmatpush.msra.mxu0 0.0
    %378 = vmatpush.msra.mxu0 0.0
    %379 = vmatpush.msra.mxu0 0.0
    %380 = vmatpush.msra.mxu0 0.0
    %381 = vmatpush.msra.mxu0 0.0
    %382 = vmatpush.msra.mxu0 0.0
    %383 = vmatpush.msra.mxu0 0.0
    %384 = vmatpush.msra.mxu0 0.0
    %385 = vmatpush.msra.mxu0 0.0
    %386 = vmatpush.msra.mxu0 %v363
    %387 = vmatmul.f32.gmra.mxu0 %v360
    %v388 = vpop.f32.mrf.mxu0
    %v389 = vadd.f32 0.0, %v388
    %390 = vdwg.mxu0
    %391 = vmatpush.msra.mxu0 0.0
    %392 = vmatpush.msra.mxu0 0.0
    %393 = vmatpush.msra.mxu0 0.0
    %394 = vmatpush.msra.mxu0 0.0
    %395 = vmatpush.msra.mxu0 0.0
    %396 = vmatpush.msra.mxu0 0.0
    %397 = vmatpush.msra.mxu0 0.0
    %398 = vmatpush.msra.mxu0 0.0
    %399 = vmatpush.msra.mxu0 0.0
    %400 = vmatpush.msra.mxu0 0.0
    %401 = vmatpush.msra.mxu0 0.0
    %402 = vmatpush.msra.mxu0 0.0
    %403 = vmatpush.msra.mxu0 0.0
    %404 = vmatpush.msra.mxu0 0.0
    %405 = vmatpush.msra.mxu0 0.0
    %406 = vmatpush.msra.mxu0 %v365
    %407 = vmatmul.f32.gmra.mxu0 %v360
    %v408 = vpop.f32.mrf.mxu0
    %v409 = vadd.f32 0.0, %v408
    %410 = vdwg.mxu0
    %411 = vmatpush.msra.mxu0 0.0
    %412 = vmatpush.msra.mxu0 0.0
    %413 = vmatpush.msra.mxu0 0.0
    %414 = vmatpush.msra.mxu0 0.0
    %415 = vmatpush.msra.mxu0 0.0
    %416 = vmatpush.msra.mxu0 0.0
    %417 = vmatpush.msra.mxu0 0.0
    %418 = vmatpush.msra.mxu0 0.0
    %419 = vmatpush.msra.mxu0 0.0
    %420 = vmatpush.msra.mxu0 0.0
    %421 = vmatpush.msra.mxu0 0.0
    %422 = vmatpush.msra.mxu0 0.0
    %423 = vmatpush.msra.mxu0 0.0
    %424 = vmatpush.msra.mxu0 0.0
    %425 = vmatpush.msra.mxu0 0.0
    %426 = vmatpush.msra.mxu0 %v367
    %427 = vmatmul.f32.gmra.mxu0 %v360
    %v428 = vpop.f32.mrf.mxu0
    %v429 = vadd.f32 0.0, %v428
    %430 = vdwg.mxu0
    %431 = vmatpush.msra.mxu0 0.0
    %432 = vmatpush.msra.mxu0 0.0
    %433 = vmatpush.msra.mxu0 0.0
    %434 = vmatpush.msra.mxu0 0.0
    %435 = vmatpush.msra.mxu0 0.0
    %436 = vmatpush.msra.mxu0 0.0
    %437 = vmatpush.msra.mxu0 0.0
    %438 = vmatpush.msra.mxu0 0.0
    %439 = vmatpush.msra.mxu0 0.0
    %440 = vmatpush.msra.mxu0 0.0
    %441 = vmatpush.msra.mxu0 0.0
    %442 = vmatpush.msra.mxu0 0.0
    %443 = vmatpush.msra.mxu0 0.0
    %444 = vmatpush.msra.mxu0 0.0
    %445 = vmatpush.msra.mxu0 0.0
    %446 = vmatpush.msra.mxu0 %v369
    %447 = vmatmul.f32.gmra.mxu0 %v360
    %v448 = vpop.f32.mrf.mxu0
    %v449 = vadd.f32 0.0, %v448
    %450 = vdwg.mxu0
    %v451 = vadd.f32 %v269, %v389
    %v452 = vadd.f32 %v289, %v409
    %v453 = vadd.f32 %v309, %v429
    %v454 = vadd.f32 %v329, %v449
    %s455 = scalar_lea.vmem %s1, 24
    %v456 = vld [vmem:[%s455] sm:$0xff]
    %457 = vst [vmem:[#allocation1] ss:$2 sm:$0xff] %v87
    %v458 = vld.sshfl [vmem:[#allocation1 + $0x8] sm:$0xff pattern:$0x75316420]
    %459 = vrot.lane.b32.xlu0 %v458, 1
    %v460 = vpop.permute.xlu0 %459
    %462 = vst [vmem:[#allocation1] ss:$2 sm:$0xff] %v86
    %s463 = scalar_lea.vmem [#allocation1], 16
    %464 = vst [vmem:[%s463] ss:$2 sm:$0xff] %v87
    %v465 = vld.sshfl [vmem:[#allocation1] sm:$0xff pattern:$0x75316420]
    %v466 = vld.sshfl [vmem:[#allocation1 + $0x8] sm:$0xff pattern:$0x75316420]
    %v467 = vld.sshfl [vmem:[#allocation1 + $0x10] sm:$0xff pattern:$0x75316420]
    %v468 = vld.sshfl [vmem:[#allocation1 + $0x18] sm:$0xff pattern:$0x75316420]
    %469 = vrot.lane.b32.xlu0 %v465, 1
    %v470 = vpop.permute.xlu0 %469
    %471 = vrot.lane.b32.xlu0 %v466, 1
    %v472 = vpop.permute.xlu0 %471
    %473 = vrot.lane.b32.xlu0 %v467, 1
    %v474 = vpop.permute.xlu0 %473
    %475 = vrot.lane.b32.xlu0 %v468, 1
    %v476 = vpop.permute.xlu0 %475
    %vm477 = vcmask 7168
    %v478 = vsel %vm477, %v470, %v472
    %v479 = vsel %vm477, %v472, %v474
    %v480 = vsel %vm477, %v474, %v476
    %v482 = vsel %vm477, %v460, %v470
    %v484 = vsel %vm145, %v456, 0
    %v487 = vsel %vm149, %v482, 0
    %v489 = vsel %vm149, %v478, 0
    %v491 = vsel %vm149, %v479, 0
    %v493 = vsel %vm149, %v480, 0
    %495 = vmatpush.msra.mxu0 0.0
    %496 = vmatpush.msra.mxu0 0.0
    %497 = vmatpush.msra.mxu0 0.0
    %498 = vmatpush.msra.mxu0 0.0
    %499 = vmatpush.msra.mxu0 0.0
    %500 = vmatpush.msra.mxu0 0.0
    %501 = vmatpush.msra.mxu0 0.0
    %502 = vmatpush.msra.mxu0 0.0
    %503 = vmatpush.msra.mxu0 0.0
    %504 = vmatpush.msra.mxu0 0.0
    %505 = vmatpush.msra.mxu0 0.0
    %506 = vmatpush.msra.mxu0 0.0
    %507 = vmatpush.msra.mxu0 0.0
    %508 = vmatpush.msra.mxu0 0.0
    %509 = vmatpush.msra.mxu0 0.0
    %510 = vmatpush.msra.mxu0 %v487
    %511 = vmatmul.f32.gmra.mxu0 %v484
    %v512 = vpop.f32.mrf.mxu0
    %v513 = vadd.f32 0.0, %v512
    %514 = vdwg.mxu0
    %515 = vmatpush.msra.mxu0 0.0
    %516 = vmatpush.msra.mxu0 0.0
    %517 = vmatpush.msra.mxu0 0.0
    %518 = vmatpush.msra.mxu0 0.0
    %519 = vmatpush.msra.mxu0 0.0
    %520 = vmatpush.msra.mxu0 0.0
    %521 = vmatpush.msra.mxu0 0.0
    %522 = vmatpush.msra.mxu0 0.0
    %523 = vmatpush.msra.mxu0 0.0
    %524 = vmatpush.msra.mxu0 0.0
    %525 = vmatpush.msra.mxu0 0.0
    %526 = vmatpush.msra.mxu0 0.0
    %527 = vmatpush.msra.mxu0 0.0
    %528 = vmatpush.msra.mxu0 0.0
    %529 = vmatpush.msra.mxu0 0.0
    %530 = vmatpush.msra.mxu0 %v489
    %531 = vmatmul.f32.gmra.mxu0 %v484
    %v532 = vpop.f32.mrf.mxu0
    %v533 = vadd.f32 0.0, %v532
    %534 = vdwg.mxu0
    %535 = vmatpush.msra.mxu0 0.0
    %536 = vmatpush.msra.mxu0 0.0
    %537 = vmatpush.msra.mxu0 0.0
    %538 = vmatpush.msra.mxu0 0.0
    %539 = vmatpush.msra.mxu0 0.0
    %540 = vmatpush.msra.mxu0 0.0
    %541 = vmatpush.msra.mxu0 0.0
    %542 = vmatpush.msra.mxu0 0.0
    %543 = vmatpush.msra.mxu0 0.0
    %544 = vmatpush.msra.mxu0 0.0
    %545 = vmatpush.msra.mxu0 0.0
    %546 = vmatpush.msra.mxu0 0.0
    %547 = vmatpush.msra.mxu0 0.0
    %548 = vmatpush.msra.mxu0 0.0
    %549 = vmatpush.msra.mxu0 0.0
    %550 = vmatpush.msra.mxu0 %v491
    %551 = vmatmul.f32.gmra.mxu0 %v484
    %v552 = vpop.f32.mrf.mxu0
    %v553 = vadd.f32 0.0, %v552
    %554 = vdwg.mxu0
    %555 = vmatpush.msra.mxu0 0.0
    %556 = vmatpush.msra.mxu0 0.0
    %557 = vmatpush.msra.mxu0 0.0
    %558 = vmatpush.msra.mxu0 0.0
    %559 = vmatpush.msra.mxu0 0.0
    %560 = vmatpush.msra.mxu0 0.0
    %561 = vmatpush.msra.mxu0 0.0
    %562 = vmatpush.msra.mxu0 0.0
    %563 = vmatpush.msra.mxu0 0.0
    %564 = vmatpush.msra.mxu0 0.0
    %565 = vmatpush.msra.mxu0 0.0
    %566 = vmatpush.msra.mxu0 0.0
    %567 = vmatpush.msra.mxu0 0.0
    %568 = vmatpush.msra.mxu0 0.0
    %569 = vmatpush.msra.mxu0 0.0
    %570 = vmatpush.msra.mxu0 %v493
    %571 = vmatmul.f32.gmra.mxu0 %v484
    %v572 = vpop.f32.mrf.mxu0
    %v573 = vadd.f32 0.0, %v572
    %574 = vdwg.mxu0
    %v575 = vadd.f32 %v451, %v513
    %v576 = vadd.f32 %v452, %v533
    %v577 = vadd.f32 %v453, %v553
    %v578 = vadd.f32 %v454, %v573
    %s579 = scalar_lea.vmem %s1, 32
    %v580 = vld [vmem:[%s579] sm:$0xff]
    %581 = vst [vmem:[#allocation1] ss:$2 sm:$0xff] %v86
    %s582 = scalar_lea.vmem [#allocation1], 16
    %583 = vst [vmem:[%s582] ss:$2 sm:$0xff] %v87
    %v584 = vld.sshfl [vmem:[#allocation1] sm:$0xff pattern:$0x75316420]
    %v585 = vld.sshfl [vmem:[#allocation1 + $0x8] sm:$0xff pattern:$0x75316420]
    %v586 = vld.sshfl [vmem:[#allocation1 + $0x10] sm:$0xff pattern:$0x75316420]
    %v587 = vld.sshfl [vmem:[#allocation1 + $0x18] sm:$0xff pattern:$0x75316420]
    %v589 = vsel %vm145, %v580, 0
    %v591 = vsel %vm149, %v584, 0
    %v593 = vsel %vm149, %v585, 0
    %v595 = vsel %vm149, %v586, 0
    %v597 = vsel %vm149, %v587, 0
    %599 = vmatpush.msra.mxu0 0.0
    %600 = vmatpush.msra.mxu0 0.0
    %601 = vmatpush.msra.mxu0 0.0
    %602 = vmatpush.msra.mxu0 0.0
    %603 = vmatpush.msra.mxu0 0.0
    %604 = vmatpush.msra.mxu0 0.0
    %605 = vmatpush.msra.mxu0 0.0
    %606 = vmatpush.msra.mxu0 0.0
    %607 = vmatpush.msra.mxu0 0.0
    %608 = vmatpush.msra.mxu0 0.0
    %609 = vmatpush.msra.mxu0 0.0
    %610 = vmatpush.msra.mxu0 0.0
    %611 = vmatpush.msra.mxu0 0.0
    %612 = vmatpush.msra.mxu0 0.0
    %613 = vmatpush.msra.mxu0 0.0
    %614 = vmatpush.msra.mxu0 %v591
    %615 = vmatmul.f32.gmra.mxu0 %v589
    %v616 = vpop.f32.mrf.mxu0
    %v617 = vadd.f32 0.0, %v616
    %618 = vdwg.mxu0
    %619 = vmatpush.msra.mxu0 0.0
    %620 = vmatpush.msra.mxu0 0.0
    %621 = vmatpush.msra.mxu0 0.0
    %622 = vmatpush.msra.mxu0 0.0
    %623 = vmatpush.msra.mxu0 0.0
    %624 = vmatpush.msra.mxu0 0.0
    %625 = vmatpush.msra.mxu0 0.0
    %626 = vmatpush.msra.mxu0 0.0
    %627 = vmatpush.msra.mxu0 0.0
    %628 = vmatpush.msra.mxu0 0.0
    %629 = vmatpush.msra.mxu0 0.0
    %630 = vmatpush.msra.mxu0 0.0
    %631 = vmatpush.msra.mxu0 0.0
    %632 = vmatpush.msra.mxu0 0.0
    %633 = vmatpush.msra.mxu0 0.0
    %634 = vmatpush.msra.mxu0 %v593
    %635 = vmatmul.f32.gmra.mxu0 %v589
    %v636 = vpop.f32.mrf.mxu0
    %v637 = vadd.f32 0.0, %v636
    %638 = vdwg.mxu0
    %639 = vmatpush.msra.mxu0 0.0
    %640 = vmatpush.msra.mxu0 0.0
    %641 = vmatpush.msra.mxu0 0.0
    %642 = vmatpush.msra.mxu0 0.0
    %643 = vmatpush.msra.mxu0 0.0
    %644 = vmatpush.msra.mxu0 0.0
    %645 = vmatpush.msra.mxu0 0.0
    %646 = vmatpush.msra.mxu0 0.0
    %647 = vmatpush.msra.mxu0 0.0
    %648 = vmatpush.msra.mxu0 0.0
    %649 = vmatpush.msra.mxu0 0.0
    %650 = vmatpush.msra.mxu0 0.0
    %651 = vmatpush.msra.mxu0 0.0
    %652 = vmatpush.msra.mxu0 0.0
    %653 = vmatpush.msra.mxu0 0.0
    %654 = vmatpush.msra.mxu0 %v595
    %655 = vmatmul.f32.gmra.mxu0 %v589
    %v656 = vpop.f32.mrf.mxu0
    %v657 = vadd.f32 0.0, %v656
    %658 = vdwg.mxu0
    %659 = vmatpush.msra.mxu0 0.0
    %660 = vmatpush.msra.mxu0 0.0
    %661 = vmatpush.msra.mxu0 0.0
    %662 = vmatpush.msra.mxu0 0.0
    %663 = vmatpush.msra.mxu0 0.0
    %664 = vmatpush.msra.mxu0 0.0
    %665 = vmatpush.msra.mxu0 0.0
    %666 = vmatpush.msra.mxu0 0.0
    %667 = vmatpush.msra.mxu0 0.0
    %668 = vmatpush.msra.mxu0 0.0
    %669 = vmatpush.msra.mxu0 0.0
    %670 = vmatpush.msra.mxu0 0.0
    %671 = vmatpush.msra.mxu0 0.0
    %672 = vmatpush.msra.mxu0 0.0
    %673 = vmatpush.msra.mxu0 0.0
    %674 = vmatpush.msra.mxu0 %v597
    %675 = vmatmul.f32.gmra.mxu0 %v589
    %v676 = vpop.f32.mrf.mxu0
    %v677 = vadd.f32 0.0, %v676
    %678 = vdwg.mxu0
    %v679 = vadd.f32 %v575, %v617
    %v680 = vadd.f32 %v576, %v637
    %v681 = vadd.f32 %v577, %v657
    %v682 = vadd.f32 %v578, %v677
    %s683 = scalar_lea.vmem %s1, 40
    %v684 = vld [vmem:[%s683] sm:$0xff]
    %685 = vst [vmem:[#allocation1] ss:$2 sm:$0xff] %v86
    %s686 = scalar_lea.vmem [#allocation1], 16
    %687 = vst [vmem:[%s686] ss:$2 sm:$0xff] %v87
    %v688 = vld.sshfl [vmem:[#allocation1] sm:$0xff pattern:$0x75316420]
    %v689 = vld.sshfl [vmem:[#allocation1 + $0x8] sm:$0xff pattern:$0x75316420]
    %v690 = vld.sshfl [vmem:[#allocation1 + $0x10] sm:$0xff pattern:$0x75316420]
    %v691 = vld.sshfl [vmem:[#allocation1 + $0x18] sm:$0xff pattern:$0x75316420]
    %692 = vrot.lane.b32.xlu0 %v688, 127
    %v693 = vpop.permute.xlu0 %692
    %694 = vrot.lane.b32.xlu0 %v689, 127
    %v695 = vpop.permute.xlu0 %694
    %696 = vrot.lane.b32.xlu0 %v690, 127
    %v697 = vpop.permute.xlu0 %696
    %698 = vrot.lane.b32.xlu0 %v691, 127
    %v699 = vpop.permute.xlu0 %698
    %vm700 = vcmask 1039360
    %v701 = vsel %vm700, %v693, %v695
    %v702 = vsel %vm700, %v695, %v697
    %v703 = vsel %vm700, %v697, %v699
    %705 = vst [vmem:[#allocation1] ss:$2 sm:$0xff] %v86
    %v706 = vld.sshfl [vmem:[#allocation1] sm:$0xff pattern:$0x75316420]
    %707 = vrot.lane.b32.xlu0 %v706, 127
    %v708 = vpop.permute.xlu0 %707
    %v710 = vsel %vm700, %v699, %v708
    %v712 = vsel %vm145, %v684, 0
    %v714 = vsel %vm149, %v701, 0
    %v716 = vsel %vm149, %v702, 0
    %v718 = vsel %vm149, %v703, 0
    %v721 = vsel %vm149, %v710, 0
    %723 = vmatpush.msra.mxu0 0.0
    %724 = vmatpush.msra.mxu0 0.0
    %725 = vmatpush.msra.mxu0 0.0
    %726 = vmatpush.msra.mxu0 0.0
    %727 = vmatpush.msra.mxu0 0.0
    %728 = vmatpush.msra.mxu0 0.0
    %729 = vmatpush.msra.mxu0 0.0
    %730 = vmatpush.msra.mxu0 0.0
    %731 = vmatpush.msra.mxu0 0.0
    %732 = vmatpush.msra.mxu0 0.0
    %733 = vmatpush.msra.mxu0 0.0
    %734 = vmatpush.msra.mxu0 0.0
    %735 = vmatpush.msra.mxu0 0.0
    %736 = vmatpush.msra.mxu0 0.0
    %737 = vmatpush.msra.mxu0 0.0
    %738 = vmatpush.msra.mxu0 %v714
    %739 = vmatmul.f32.gmra.mxu0 %v712
    %v740 = vpop.f32.mrf.mxu0
    %v741 = vadd.f32 0.0, %v740
    %742 = vdwg.mxu0
    %743 = vmatpush.msra.mxu0 0.0
    %744 = vmatpush.msra.mxu0 0.0
    %745 = vmatpush.msra.mxu0 0.0
    %746 = vmatpush.msra.mxu0 0.0
    %747 = vmatpush.msra.mxu0 0.0
    %748 = vmatpush.msra.mxu0 0.0
    %749 = vmatpush.msra.mxu0 0.0
    %750 = vmatpush.msra.mxu0 0.0
    %751 = vmatpush.msra.mxu0 0.0
    %752 = vmatpush.msra.mxu0 0.0
    %753 = vmatpush.msra.mxu0 0.0
    %754 = vmatpush.msra.mxu0 0.0
    %755 = vmatpush.msra.mxu0 0.0
    %756 = vmatpush.msra.mxu0 0.0
    %757 = vmatpush.msra.mxu0 0.0
    %758 = vmatpush.msra.mxu0 %v716
    %759 = vmatmul.f32.gmra.mxu0 %v712
    %v760 = vpop.f32.mrf.mxu0
    %v761 = vadd.f32 0.0, %v760
    %762 = vdwg.mxu0
    %763 = vmatpush.msra.mxu0 0.0
    %764 = vmatpush.msra.mxu0 0.0
    %765 = vmatpush.msra.mxu0 0.0
    %766 = vmatpush.msra.mxu0 0.0
    %767 = vmatpush.msra.mxu0 0.0
    %768 = vmatpush.msra.mxu0 0.0
    %769 = vmatpush.msra.mxu0 0.0
    %770 = vmatpush.msra.mxu0 0.0
    %771 = vmatpush.msra.mxu0 0.0
    %772 = vmatpush.msra.mxu0 0.0
    %773 = vmatpush.msra.mxu0 0.0
    %774 = vmatpush.msra.mxu0 0.0
    %775 = vmatpush.msra.mxu0 0.0
    %776 = vmatpush.msra.mxu0 0.0
    %777 = vmatpush.msra.mxu0 0.0
    %778 = vmatpush.msra.mxu0 %v718
    %779 = vmatmul.f32.gmra.mxu0 %v712
    %v780 = vpop.f32.mrf.mxu0
    %v781 = vadd.f32 0.0, %v780
    %782 = vdwg.mxu0
    %783 = vmatpush.msra.mxu0 0.0
    %784 = vmatpush.msra.mxu0 0.0
    %785 = vmatpush.msra.mxu0 0.0
    %786 = vmatpush.msra.mxu0 0.0
    %787 = vmatpush.msra.mxu0 0.0
    %788 = vmatpush.msra.mxu0 0.0
    %789 = vmatpush.msra.mxu0 0.0
    %790 = vmatpush.msra.mxu0 0.0
    %791 = vmatpush.msra.mxu0 0.0
    %792 = vmatpush.msra.mxu0 0.0
    %793 = vmatpush.msra.mxu0 0.0
    %794 = vmatpush.msra.mxu0 0.0
    %795 = vmatpush.msra.mxu0 0.0
    %796 = vmatpush.msra.mxu0 0.0
    %797 = vmatpush.msra.mxu0 0.0
    %798 = vmatpush.msra.mxu0 %v721
    %799 = vmatmul.f32.gmra.mxu0 %v712
    %v800 = vpop.f32.mrf.mxu0
    %v801 = vadd.f32 0.0, %v800
    %802 = vdwg.mxu0
    %v803 = vadd.f32 %v679, %v741
    %v804 = vadd.f32 %v680, %v761
    %v805 = vadd.f32 %v681, %v781
    %v806 = vadd.f32 %v682, %v801
    %s807 = scalar_lea.vmem %s1, 48
    %v808 = vld [vmem:[%s807] sm:$0xff]
    %809 = vst [vmem:[#allocation1] ss:$2 sm:$0xff] %v86
    %s810 = scalar_lea.vmem [#allocation1], 16
    %811 = vst [vmem:[%s810] ss:$2 sm:$0xff] %v87
    %v812 = vld.sshfl [vmem:[#allocation1] sm:$0xff pattern:$0x75316420]
    %v813 = vld.sshfl [vmem:[#allocation1 + $0x8] sm:$0xff pattern:$0x75316420]
    %v814 = vld.sshfl [vmem:[#allocation1 + $0x10] sm:$0xff pattern:$0x75316420]
    %v815 = vld.sshfl [vmem:[#allocation1 + $0x18] sm:$0xff pattern:$0x75316420]
    %816 = vrot.lane.b32.xlu0 %v812, 109
    %v817 = vpop.permute.xlu0 %816
    %818 = vrot.lane.b32.xlu0 %v813, 109
    %v819 = vpop.permute.xlu0 %818
    %820 = vrot.lane.b32.xlu0 %v814, 109
    %v821 = vpop.permute.xlu0 %820
    %822 = vrot.lane.b32.xlu0 %v815, 109
    %v823 = vpop.permute.xlu0 %822
    %vm824 = vcmask 891904
    %v825 = vsel %vm824, %v817, %v819
    %v826 = vsel %vm824, %v819, %v821
    %v827 = vsel %vm824, %v821, %v823
    %829 = vst [vmem:[#allocation1] ss:$2 sm:$0xff] %v86
    %v830 = vld.sshfl [vmem:[#allocation1] sm:$0xff pattern:$0x75316420]
    %831 = vrot.lane.b32.xlu0 %v830, 109
    %v832 = vpop.permute.xlu0 %831
    %v834 = vsel %vm824, %v823, %v832
    %v836 = vsel %vm145, %v808, 0
    %v838 = vsel %vm149, %v825, 0
    %v840 = vsel %vm149, %v826, 0
    %v842 = vsel %vm149, %v827, 0
    %v845 = vsel %vm149, %v834, 0
    %847 = vmatpush.msra.mxu0 0.0
    %848 = vmatpush.msra.mxu0 0.0
    %849 = vmatpush.msra.mxu0 0.0
    %850 = vmatpush.msra.mxu0 0.0
    %851 = vmatpush.msra.mxu0 0.0
    %852 = vmatpush.msra.mxu0 0.0
    %853 = vmatpush.msra.mxu0 0.0
    %854 = vmatpush.msra.mxu0 0.0
    %855 = vmatpush.msra.mxu0 0.0
    %856 = vmatpush.msra.mxu0 0.0
    %857 = vmatpush.msra.mxu0 0.0
    %858 = vmatpush.msra.mxu0 0.0
    %859 = vmatpush.msra.mxu0 0.0
    %860 = vmatpush.msra.mxu0 0.0
    %861 = vmatpush.msra.mxu0 0.0
    %862 = vmatpush.msra.mxu0 %v838
    %863 = vmatmul.f32.gmra.mxu0 %v836
    %v864 = vpop.f32.mrf.mxu0
    %v865 = vadd.f32 0.0, %v864
    %866 = vdwg.mxu0
    %867 = vmatpush.msra.mxu0 0.0
    %868 = vmatpush.msra.mxu0 0.0
    %869 = vmatpush.msra.mxu0 0.0
    %870 = vmatpush.msra.mxu0 0.0
    %871 = vmatpush.msra.mxu0 0.0
    %872 = vmatpush.msra.mxu0 0.0
    %873 = vmatpush.msra.mxu0 0.0
    %874 = vmatpush.msra.mxu0 0.0
    %875 = vmatpush.msra.mxu0 0.0
    %876 = vmatpush.msra.mxu0 0.0
    %877 = vmatpush.msra.mxu0 0.0
    %878 = vmatpush.msra.mxu0 0.0
    %879 = vmatpush.msra.mxu0 0.0
    %880 = vmatpush.msra.mxu0 0.0
    %881 = vmatpush.msra.mxu0 0.0
    %882 = vmatpush.msra.mxu0 %v840
    %883 = vmatmul.f32.gmra.mxu0 %v836
    %v884 = vpop.f32.mrf.mxu0
    %v885 = vadd.f32 0.0, %v884
    %886 = vdwg.mxu0
    %887 = vmatpush.msra.mxu0 0.0
    %888 = vmatpush.msra.mxu0 0.0
    %889 = vmatpush.msra.mxu0 0.0
    %890 = vmatpush.msra.mxu0 0.0
    %891 = vmatpush.msra.mxu0 0.0
    %892 = vmatpush.msra.mxu0 0.0
    %893 = vmatpush.msra.mxu0 0.0
    %894 = vmatpush.msra.mxu0 0.0
    %895 = vmatpush.msra.mxu0 0.0
    %896 = vmatpush.msra.mxu0 0.0
    %897 = vmatpush.msra.mxu0 0.0
    %898 = vmatpush.msra.mxu0 0.0
    %899 = vmatpush.msra.mxu0 0.0
    %900 = vmatpush.msra.mxu0 0.0
    %901 = vmatpush.msra.mxu0 0.0
    %902 = vmatpush.msra.mxu0 %v842
    %903 = vmatmul.f32.gmra.mxu0 %v836
    %v904 = vpop.f32.mrf.mxu0
    %v905 = vadd.f32 0.0, %v904
    %906 = vdwg.mxu0
    %907 = vmatpush.msra.mxu0 0.0
    %908 = vmatpush.msra.mxu0 0.0
    %909 = vmatpush.msra.mxu0 0.0
    %910 = vmatpush.msra.mxu0 0.0
    %911 = vmatpush.msra.mxu0 0.0
    %912 = vmatpush.msra.mxu0 0.0
    %913 = vmatpush.msra.mxu0 0.0
    %914 = vmatpush.msra.mxu0 0.0
    %915 = vmatpush.msra.mxu0 0.0
    %916 = vmatpush.msra.mxu0 0.0
    %917 = vmatpush.msra.mxu0 0.0
    %918 = vmatpush.msra.mxu0 0.0
    %919 = vmatpush.msra.mxu0 0.0
    %920 = vmatpush.msra.mxu0 0.0
    %921 = vmatpush.msra.mxu0 0.0
    %922 = vmatpush.msra.mxu0 %v845
    %923 = vmatmul.f32.gmra.mxu0 %v836
    %v924 = vpop.f32.mrf.mxu0
    %v925 = vadd.f32 0.0, %v924
    %926 = vdwg.mxu0
    %v927 = vadd.f32 %v803, %v865
    %v928 = vadd.f32 %v804, %v885
    %v929 = vadd.f32 %v805, %v905
    %v930 = vadd.f32 %v806, %v925
    %s931 = scalar_lea.vmem %s1, 56
    %v932 = vld [vmem:[%s931] sm:$0xff]
    %933 = vst [vmem:[#allocation1] ss:$2 sm:$0xff] %v86
    %s934 = scalar_lea.vmem [#allocation1], 16
    %935 = vst [vmem:[%s934] ss:$2 sm:$0xff] %v87
    %v936 = vld.sshfl [vmem:[#allocation1] sm:$0xff pattern:$0x75316420]
    %v937 = vld.sshfl [vmem:[#allocation1 + $0x8] sm:$0xff pattern:$0x75316420]
    %v938 = vld.sshfl [vmem:[#allocation1 + $0x10] sm:$0xff pattern:$0x75316420]
    %v939 = vld.sshfl [vmem:[#allocation1 + $0x18] sm:$0xff pattern:$0x75316420]
    %940 = vrot.lane.b32.xlu0 %v936, 108
    %v941 = vpop.permute.xlu0 %940
    %942 = vrot.lane.b32.xlu0 %v937, 108
    %v943 = vpop.permute.xlu0 %942
    %944 = vrot.lane.b32.xlu0 %v938, 108
    %v945 = vpop.permute.xlu0 %944
    %946 = vrot.lane.b32.xlu0 %v939, 108
    %v947 = vpop.permute.xlu0 %946
    %vm948 = vcmask 883712
    %v949 = vsel %vm948, %v941, %v943
    %v950 = vsel %vm948, %v943, %v945
    %v951 = vsel %vm948, %v945, %v947
    %953 = vst [vmem:[#allocation1] ss:$2 sm:$0xff] %v86
    %v954 = vld.sshfl [vmem:[#allocation1] sm:$0xff pattern:$0x75316420]
    %955 = vrot.lane.b32.xlu0 %v954, 108
    %v956 = vpop.permute.xlu0 %955
    %v958 = vsel %vm948, %v947, %v956
    %v960 = vsel %vm145, %v932, 0
    %v962 = vsel %vm149, %v949, 0
    %v964 = vsel %vm149, %v950, 0
    %v966 = vsel %vm149, %v951, 0
    %v969 = vsel %vm149, %v958, 0
    %971 = vmatpush.msra.mxu0 0.0
    %972 = vmatpush.msra.mxu0 0.0
    %973 = vmatpush.msra.mxu0 0.0
    %974 = vmatpush.msra.mxu0 0.0
    %975 = vmatpush.msra.mxu0 0.0
    %976 = vmatpush.msra.mxu0 0.0
    %977 = vmatpush.msra.mxu0 0.0
    %978 = vmatpush.msra.mxu0 0.0
    %979 = vmatpush.msra.mxu0 0.0
    %980 = vmatpush.msra.mxu0 0.0
    %981 = vmatpush.msra.mxu0 0.0
    %982 = vmatpush.msra.mxu0 0.0
    %983 = vmatpush.msra.mxu0 0.0
    %984 = vmatpush.msra.mxu0 0.0
    %985 = vmatpush.msra.mxu0 0.0
    %986 = vmatpush.msra.mxu0 %v962
    %987 = vmatmul.f32.gmra.mxu0 %v960
    %v988 = vpop.f32.mrf.mxu0
    %v989 = vadd.f32 0.0, %v988
    %990 = vdwg.mxu0
    %991 = vmatpush.msra.mxu0 0.0
    %992 = vmatpush.msra.mxu0 0.0
    %993 = vmatpush.msra.mxu0 0.0
    %994 = vmatpush.msra.mxu0 0.0
    %995 = vmatpush.msra.mxu0 0.0
    %996 = vmatpush.msra.mxu0 0.0
    %997 = vmatpush.msra.mxu0 0.0
    %998 = vmatpush.msra.mxu0 0.0
    %999 = vmatpush.msra.mxu0 0.0
    %1000 = vmatpush.msra.mxu0 0.0
    %1001 = vmatpush.msra.mxu0 0.0
    %1002 = vmatpush.msra.mxu0 0.0
    %1003 = vmatpush.msra.mxu0 0.0
    %1004 = vmatpush.msra.mxu0 0.0
    %1005 = vmatpush.msra.mxu0 0.0
    %1006 = vmatpush.msra.mxu0 %v964
    %1007 = vmatmul.f32.gmra.mxu0 %v960
    %v1008 = vpop.f32.mrf.mxu0
    %v1009 = vadd.f32 0.0, %v1008
    %1010 = vdwg.mxu0
    %1011 = vmatpush.msra.mxu0 0.0
    %1012 = vmatpush.msra.mxu0 0.0
    %1013 = vmatpush.msra.mxu0 0.0
    %1014 = vmatpush.msra.mxu0 0.0
    %1015 = vmatpush.msra.mxu0 0.0
    %1016 = vmatpush.msra.mxu0 0.0
    %1017 = vmatpush.msra.mxu0 0.0
    %1018 = vmatpush.msra.mxu0 0.0
    %1019 = vmatpush.msra.mxu0 0.0
    %1020 = vmatpush.msra.mxu0 0.0
    %1021 = vmatpush.msra.mxu0 0.0
    %1022 = vmatpush.msra.mxu0 0.0
    %1023 = vmatpush.msra.mxu0 0.0
    %1024 = vmatpush.msra.mxu0 0.0
    %1025 = vmatpush.msra.mxu0 0.0
    %1026 = vmatpush.msra.mxu0 %v966
    %1027 = vmatmul.f32.gmra.mxu0 %v960
    %v1028 = vpop.f32.mrf.mxu0
    %v1029 = vadd.f32 0.0, %v1028
    %1030 = vdwg.mxu0
    %1031 = vmatpush.msra.mxu0 0.0
    %1032 = vmatpush.msra.mxu0 0.0
    %1033 = vmatpush.msra.mxu0 0.0
    %1034 = vmatpush.msra.mxu0 0.0
    %1035 = vmatpush.msra.mxu0 0.0
    %1036 = vmatpush.msra.mxu0 0.0
    %1037 = vmatpush.msra.mxu0 0.0
    %1038 = vmatpush.msra.mxu0 0.0
    %1039 = vmatpush.msra.mxu0 0.0
    %1040 = vmatpush.msra.mxu0 0.0
    %1041 = vmatpush.msra.mxu0 0.0
    %1042 = vmatpush.msra.mxu0 0.0
    %1043 = vmatpush.msra.mxu0 0.0
    %1044 = vmatpush.msra.mxu0 0.0
    %1045 = vmatpush.msra.mxu0 0.0
    %1046 = vmatpush.msra.mxu0 %v969
    %1047 = vmatmul.f32.gmra.mxu0 %v960
    %v1048 = vpop.f32.mrf.mxu0
    %v1049 = vadd.f32 0.0, %v1048
    %1050 = vdwg.mxu0
    %v1051 = vadd.f32 %v927, %v989
    %v1052 = vadd.f32 %v928, %v1009
    %v1053 = vadd.f32 %v929, %v1029
    %v1054 = vadd.f32 %v930, %v1049
    %s1055 = scalar_lea.vmem %s1, 64
    %v1056 = vld [vmem:[%s1055] sm:$0xff]
    %1057 = vst [vmem:[#allocation1] ss:$2 sm:$0xff] %v86
    %s1058 = scalar_lea.vmem [#allocation1], 16
    %1059 = vst [vmem:[%s1058] ss:$2 sm:$0xff] %v87
    %v1060 = vld.sshfl [vmem:[#allocation1] sm:$0xff pattern:$0x75316420]
    %v1061 = vld.sshfl [vmem:[#allocation1 + $0x8] sm:$0xff pattern:$0x75316420]
    %v1062 = vld.sshfl [vmem:[#allocation1 + $0x10] sm:$0xff pattern:$0x75316420]
    %v1063 = vld.sshfl [vmem:[#allocation1 + $0x18] sm:$0xff pattern:$0x75316420]
    %1064 = vrot.lane.b32.xlu0 %v1060, 107
    %v1065 = vpop.permute.xlu0 %1064
    %1066 = vrot.lane.b32.xlu0 %v1061, 107
    %v1067 = vpop.permute.xlu0 %1066
    %1068 = vrot.lane.b32.xlu0 %v1062, 107
    %v1069 = vpop.permute.xlu0 %1068
    %1070 = vrot.lane.b32.xlu0 %v1063, 107
    %v1071 = vpop.permute.xlu0 %1070
    %vm1072 = vcmask 875520
    %v1073 = vsel %vm1072, %v1065, %v1067
    %v1074 = vsel %vm1072, %v1067, %v1069
    %v1075 = vsel %vm1072, %v1069, %v1071
    %1077 = vst [vmem:[#allocation1] ss:$2 sm:$0xff] %v86
    %v1078 = vld.sshfl [vmem:[#allocation1] sm:$0xff pattern:$0x75316420]
    %1079 = vrot.lane.b32.xlu0 %v1078, 107
    %v1080 = vpop.permute.xlu0 %1079
    %v1082 = vsel %vm1072, %v1071, %v1080
    %v1084 = vsel %vm145, %v1056, 0
    %v1086 = vsel %vm149, %v1073, 0
    %v1088 = vsel %vm149, %v1074, 0
    %v1090 = vsel %vm149, %v1075, 0
    %v1093 = vsel %vm149, %v1082, 0
    %1095 = vmatpush.msra.mxu0 0.0
    %1096 = vmatpush.msra.mxu0 0.0
    %1097 = vmatpush.msra.mxu0 0.0
    %1098 = vmatpush.msra.mxu0 0.0
    %1099 = vmatpush.msra.mxu0 0.0
    %1100 = vmatpush.msra.mxu0 0.0
    %1101 = vmatpush.msra.mxu0 0.0
    %1102 = vmatpush.msra.mxu0 0.0
    %1103 = vmatpush.msra.mxu0 0.0
    %1104 = vmatpush.msra.mxu0 0.0
    %1105 = vmatpush.msra.mxu0 0.0
    %1106 = vmatpush.msra.mxu0 0.0
    %1107 = vmatpush.msra.mxu0 0.0
    %1108 = vmatpush.msra.mxu0 0.0
    %1109 = vmatpush.msra.mxu0 0.0
    %1110 = vmatpush.msra.mxu0 %v1086
    %1111 = vmatmul.f32.gmra.mxu0 %v1084
    %v1112 = vpop.f32.mrf.mxu0
    %v1113 = vadd.f32 0.0, %v1112
    %1114 = vdwg.mxu0
    %1115 = vmatpush.msra.mxu0 0.0
    %1116 = vmatpush.msra.mxu0 0.0
    %1117 = vmatpush.msra.mxu0 0.0
    %1118 = vmatpush.msra.mxu0 0.0
    %1119 = vmatpush.msra.mxu0 0.0
    %1120 = vmatpush.msra.mxu0 0.0
    %1121 = vmatpush.msra.mxu0 0.0
    %1122 = vmatpush.msra.mxu0 0.0
    %1123 = vmatpush.msra.mxu0 0.0
    %1124 = vmatpush.msra.mxu0 0.0
    %1125 = vmatpush.msra.mxu0 0.0
    %1126 = vmatpush.msra.mxu0 0.0
    %1127 = vmatpush.msra.mxu0 0.0
    %1128 = vmatpush.msra.mxu0 0.0
    %1129 = vmatpush.msra.mxu0 0.0
    %1130 = vmatpush.msra.mxu0 %v1088
    %1131 = vmatmul.f32.gmra.mxu0 %v1084
    %v1132 = vpop.f32.mrf.mxu0
    %v1133 = vadd.f32 0.0, %v1132
    %1134 = vdwg.mxu0
    %1135 = vmatpush.msra.mxu0 0.0
    %1136 = vmatpush.msra.mxu0 0.0
    %1137 = vmatpush.msra.mxu0 0.0
    %1138 = vmatpush.msra.mxu0 0.0
    %1139 = vmatpush.msra.mxu0 0.0
    %1140 = vmatpush.msra.mxu0 0.0
    %1141 = vmatpush.msra.mxu0 0.0
    %1142 = vmatpush.msra.mxu0 0.0
    %1143 = vmatpush.msra.mxu0 0.0
    %1144 = vmatpush.msra.mxu0 0.0
    %1145 = vmatpush.msra.mxu0 0.0
    %1146 = vmatpush.msra.mxu0 0.0
    %1147 = vmatpush.msra.mxu0 0.0
    %1148 = vmatpush.msra.mxu0 0.0
    %1149 = vmatpush.msra.mxu0 0.0
    %1150 = vmatpush.msra.mxu0 %v1090
    %1151 = vmatmul.f32.gmra.mxu0 %v1084
    %v1152 = vpop.f32.mrf.mxu0
    %v1153 = vadd.f32 0.0, %v1152
    %1154 = vdwg.mxu0
    %1155 = vmatpush.msra.mxu0 0.0
    %1156 = vmatpush.msra.mxu0 0.0
    %1157 = vmatpush.msra.mxu0 0.0
    %1158 = vmatpush.msra.mxu0 0.0
    %1159 = vmatpush.msra.mxu0 0.0
    %1160 = vmatpush.msra.mxu0 0.0
    %1161 = vmatpush.msra.mxu0 0.0
    %1162 = vmatpush.msra.mxu0 0.0
    %1163 = vmatpush.msra.mxu0 0.0
    %1164 = vmatpush.msra.mxu0 0.0
    %1165 = vmatpush.msra.mxu0 0.0
    %1166 = vmatpush.msra.mxu0 0.0
    %1167 = vmatpush.msra.mxu0 0.0
    %1168 = vmatpush.msra.mxu0 0.0
    %1169 = vmatpush.msra.mxu0 0.0
    %1170 = vmatpush.msra.mxu0 %v1093
    %1171 = vmatmul.f32.gmra.mxu0 %v1084
    %v1172 = vpop.f32.mrf.mxu0
    %v1173 = vadd.f32 0.0, %v1172
    %1174 = vdwg.mxu0
    %v1175 = vadd.f32 %v1051, %v1113
    %v1176 = vadd.f32 %v1052, %v1133
    %v1177 = vadd.f32 %v1053, %v1153
    %v1178 = vadd.f32 %v1054, %v1173
    %1180 = vset.pattern.permute.xlu0 0
    %1181 = vperm.xlu0 %1180, %v84
    %v1182 = vpop.permute.xlu0 %1181
    %v1184 = vadd.f32 %v1175, %v1182
    %v1185 = vadd.f32 %v1176, %v1182
    %v1186 = vadd.f32 %v1177, %v1182
    %v1187 = vadd.f32 %v1178, %v1182
    %v1188 = vmax.f32 %v1184, 0.0
    %v1189 = vmax.f32 %v1185, 0.0
    %v1190 = vmax.f32 %v1186, 0.0
    %v1191 = vmax.f32 %v1187, 0.0
    %v1192 = vsel %vm80, 1, 0
    %v1193 = vsel %vm81, 1, 0
    %v1194 = vsel %vm82, 1, 0
    %v1195 = vsel %vm83, 1, 0
    %vm1196 = vcmp.eq.s32.totalorder %v1192, 1
    %vm1197 = vcmp.eq.s32.totalorder %v1193, 1
    %vm1198 = vcmp.eq.s32.totalorder %v1194, 1
    %vm1199 = vcmp.eq.s32.totalorder %v1195, 1
    %v1200 = vsel %vm1196, %v1188, 0.0
    %v1201 = vsel %vm1197, %v1189, 0.0
    %v1202 = vsel %vm1198, %v1190, 0.0
    %v1203 = vsel %vm1199, %v1191, 0.0
    %v1204 = vld [vmem:[%s3] sm:$0xff]
    %1206 = vrot.lane.b32.xlu0 %v1203, 21
    %v1207 = vpop.permute.xlu0 %1206
    %1212 = vrot.lane.b32.xlu0 %v1200, 21
    %v1213 = vpop.permute.xlu0 %1212
    %1214 = vrot.lane.b32.xlu0 %v1201, 21
    %v1215 = vpop.permute.xlu0 %1214
    %1216 = vrot.lane.b32.xlu0 %v1202, 21
    %v1217 = vpop.permute.xlu0 %1216
    %v1218 = vsel %vm111, %v1213, %v1215
    %v1219 = vsel %vm111, %v1215, %v1217
    %v1220 = vsel %vm111, %v1217, %v1207
    %v1225 = vsel %vm111, %v1207, %v1213
    %s1226 = scalar_lea.vmem %s3, 8
    %v1227 = vld [vmem:[%s1226] sm:$0xff]
    %1228 = vrot.lane.b32.xlu0 %v1203, 20
    %v1229 = vpop.permute.xlu0 %1228
    %1231 = vrot.lane.b32.xlu0 %v1200, 20
    %v1232 = vpop.permute.xlu0 %1231
    %1233 = vrot.lane.b32.xlu0 %v1201, 20
    %v1234 = vpop.permute.xlu0 %1233
    %1235 = vrot.lane.b32.xlu0 %v1202, 20
    %v1236 = vpop.permute.xlu0 %1235
    %v1237 = vsel %vm139, %v1232, %v1234
    %v1238 = vsel %vm139, %v1234, %v1236
    %v1239 = vsel %vm139, %v1236, %v1229
    %v1244 = vsel %vm139, %v1229, %v1232
    %vm1245 = vcmask 64512
    %v1247 = vsel %vm1245, %v1227, 0
    %1249 = vmatpush.msra.mxu0 0.0
    %1250 = vmatpush.msra.mxu0 0.0
    %1251 = vmatpush.msra.mxu0 0.0
    %1252 = vmatpush.msra.mxu0 0.0
    %1253 = vmatpush.msra.mxu0 0.0
    %1254 = vmatpush.msra.mxu0 0.0
    %1255 = vmatpush.msra.mxu0 0.0
    %1256 = vmatpush.msra.mxu0 0.0
    %1257 = vmatpush.msra.mxu0 0.0
    %1258 = vmatpush.msra.mxu0 0.0
    %1259 = vmatpush.msra.mxu0 0.0
    %1260 = vmatpush.msra.mxu0 0.0
    %1261 = vmatpush.msra.mxu0 0.0
    %1262 = vmatpush.msra.mxu0 0.0
    %1263 = vmatpush.msra.mxu0 0.0
    %1264 = vmatpush.msra.mxu0 %v1244
    %1265 = vmatmul.f32.gmra.mxu0 %v1247
    %v1266 = vpop.f32.mrf.mxu0
    %v1267 = vadd.f32 0.0, %v1266
    %1268 = vdwg.mxu0
    %1269 = vmatpush.msra.mxu0 0.0
    %1270 = vmatpush.msra.mxu0 0.0
    %1271 = vmatpush.msra.mxu0 0.0
    %1272 = vmatpush.msra.mxu0 0.0
    %1273 = vmatpush.msra.mxu0 0.0
    %1274 = vmatpush.msra.mxu0 0.0
    %1275 = vmatpush.msra.mxu0 0.0
    %1276 = vmatpush.msra.mxu0 0.0
    %1277 = vmatpush.msra.mxu0 0.0
    %1278 = vmatpush.msra.mxu0 0.0
    %1279 = vmatpush.msra.mxu0 0.0
    %1280 = vmatpush.msra.mxu0 0.0
    %1281 = vmatpush.msra.mxu0 0.0
    %1282 = vmatpush.msra.mxu0 0.0
    %1283 = vmatpush.msra.mxu0 0.0
    %1284 = vmatpush.msra.mxu0 %v1237
    %1285 = vmatmul.f32.gmra.mxu0 %v1247
    %v1286 = vpop.f32.mrf.mxu0
    %v1287 = vadd.f32 0.0, %v1286
    %1288 = vdwg.mxu0
    %1289 = vmatpush.msra.mxu0 0.0
    %1290 = vmatpush.msra.mxu0 0.0
    %1291 = vmatpush.msra.mxu0 0.0
    %1292 = vmatpush.msra.mxu0 0.0
    %1293 = vmatpush.msra.mxu0 0.0
    %1294 = vmatpush.msra.mxu0 0.0
    %1295 = vmatpush.msra.mxu0 0.0
    %1296 = vmatpush.msra.mxu0 0.0
    %1297 = vmatpush.msra.mxu0 0.0
    %1298 = vmatpush.msra.mxu0 0.0
    %1299 = vmatpush.msra.mxu0 0.0
    %1300 = vmatpush.msra.mxu0 0.0
    %1301 = vmatpush.msra.mxu0 0.0
    %1302 = vmatpush.msra.mxu0 0.0
    %1303 = vmatpush.msra.mxu0 0.0
    %1304 = vmatpush.msra.mxu0 %v1238
    %1305 = vmatmul.f32.gmra.mxu0 %v1247
    %v1306 = vpop.f32.mrf.mxu0
    %v1307 = vadd.f32 0.0, %v1306
    %1308 = vdwg.mxu0
    %1309 = vmatpush.msra.mxu0 0.0
    %1310 = vmatpush.msra.mxu0 0.0
    %1311 = vmatpush.msra.mxu0 0.0
    %1312 = vmatpush.msra.mxu0 0.0
    %1313 = vmatpush.msra.mxu0 0.0
    %1314 = vmatpush.msra.mxu0 0.0
    %1315 = vmatpush.msra.mxu0 0.0
    %1316 = vmatpush.msra.mxu0 0.0
    %1317 = vmatpush.msra.mxu0 0.0
    %1318 = vmatpush.msra.mxu0 0.0
    %1319 = vmatpush.msra.mxu0 0.0
    %1320 = vmatpush.msra.mxu0 0.0
    %1321 = vmatpush.msra.mxu0 0.0
    %1322 = vmatpush.msra.mxu0 0.0
    %1323 = vmatpush.msra.mxu0 0.0
    %1324 = vmatpush.msra.mxu0 %v1239
    %1325 = vmatmul.f32.gmra.mxu0 %v1247
    %v1326 = vpop.f32.mrf.mxu0
    %v1327 = vadd.f32 0.0, %v1326
    %1328 = vdwg.mxu0
    %v1330 = vsel %vm1245, %v1204, 0
    %1332 = vmatpush.msra.mxu0 0.0
    %1333 = vmatpush.msra.mxu0 0.0
    %1334 = vmatpush.msra.mxu0 0.0
    %1335 = vmatpush.msra.mxu0 0.0
    %1336 = vmatpush.msra.mxu0 0.0
    %1337 = vmatpush.msra.mxu0 0.0
    %1338 = vmatpush.msra.mxu0 0.0
    %1339 = vmatpush.msra.mxu0 0.0
    %1340 = vmatpush.msra.mxu0 0.0
    %1341 = vmatpush.msra.mxu0 0.0
    %1342 = vmatpush.msra.mxu0 0.0
    %1343 = vmatpush.msra.mxu0 0.0
    %1344 = vmatpush.msra.mxu0 0.0
    %1345 = vmatpush.msra.mxu0 0.0
    %1346 = vmatpush.msra.mxu0 0.0
    %1347 = vmatpush.msra.mxu0 %v1225
    %1348 = vmatmul.f32.gmra.mxu0 %v1330
    %v1349 = vpop.f32.mrf.mxu0
    %v1350 = vadd.f32 %v1267, %v1349
    %1351 = vdwg.mxu0
    %1352 = vmatpush.msra.mxu0 0.0
    %1353 = vmatpush.msra.mxu0 0.0
    %1354 = vmatpush.msra.mxu0 0.0
    %1355 = vmatpush.msra.mxu0 0.0
    %1356 = vmatpush.msra.mxu0 0.0
    %1357 = vmatpush.msra.mxu0 0.0
    %1358 = vmatpush.msra.mxu0 0.0
    %1359 = vmatpush.msra.mxu0 0.0
    %1360 = vmatpush.msra.mxu0 0.0
    %1361 = vmatpush.msra.mxu0 0.0
    %1362 = vmatpush.msra.mxu0 0.0
    %1363 = vmatpush.msra.mxu0 0.0
    %1364 = vmatpush.msra.mxu0 0.0
    %1365 = vmatpush.msra.mxu0 0.0
    %1366 = vmatpush.msra.mxu0 0.0
    %1367 = vmatpush.msra.mxu0 %v1218
    %1368 = vmatmul.f32.gmra.mxu0 %v1330
    %v1369 = vpop.f32.mrf.mxu0
    %v1370 = vadd.f32 %v1287, %v1369
    %1371 = vdwg.mxu0
    %1372 = vmatpush.msra.mxu0 0.0
    %1373 = vmatpush.msra.mxu0 0.0
    %1374 = vmatpush.msra.mxu0 0.0
    %1375 = vmatpush.msra.mxu0 0.0
    %1376 = vmatpush.msra.mxu0 0.0
    %1377 = vmatpush.msra.mxu0 0.0
    %1378 = vmatpush.msra.mxu0 0.0
    %1379 = vmatpush.msra.mxu0 0.0
    %1380 = vmatpush.msra.mxu0 0.0
    %1381 = vmatpush.msra.mxu0 0.0
    %1382 = vmatpush.msra.mxu0 0.0
    %1383 = vmatpush.msra.mxu0 0.0
    %1384 = vmatpush.msra.mxu0 0.0
    %1385 = vmatpush.msra.mxu0 0.0
    %1386 = vmatpush.msra.mxu0 0.0
    %1387 = vmatpush.msra.mxu0 %v1219
    %1388 = vmatmul.f32.gmra.mxu0 %v1330
    %v1389 = vpop.f32.mrf.mxu0
    %v1390 = vadd.f32 %v1307, %v1389
    %1391 = vdwg.mxu0
    %1392 = vmatpush.msra.mxu0 0.0
    %1393 = vmatpush.msra.mxu0 0.0
    %1394 = vmatpush.msra.mxu0 0.0
    %1395 = vmatpush.msra.mxu0 0.0
    %1396 = vmatpush.msra.mxu0 0.0
    %1397 = vmatpush.msra.mxu0 0.0
    %1398 = vmatpush.msra.mxu0 0.0
    %1399 = vmatpush.msra.mxu0 0.0
    %1400 = vmatpush.msra.mxu0 0.0
    %1401 = vmatpush.msra.mxu0 0.0
    %1402 = vmatpush.msra.mxu0 0.0
    %1403 = vmatpush.msra.mxu0 0.0
    %1404 = vmatpush.msra.mxu0 0.0
    %1405 = vmatpush.msra.mxu0 0.0
    %1406 = vmatpush.msra.mxu0 0.0
    %1407 = vmatpush.msra.mxu0 %v1220
    %1408 = vmatmul.f32.gmra.mxu0 %v1330
    %v1409 = vpop.f32.mrf.mxu0
    %v1410 = vadd.f32 %v1327, %v1409
    %1411 = vdwg.mxu0
    %s1412 = scalar_lea.vmem %s3, 16
    %v1413 = vld [vmem:[%s1412] sm:$0xff]
    %1414 = vrot.lane.b32.xlu0 %v1203, 19
    %v1415 = vpop.permute.xlu0 %1414
    %1417 = vrot.lane.b32.xlu0 %v1200, 19
    %v1418 = vpop.permute.xlu0 %1417
    %1419 = vrot.lane.b32.xlu0 %v1201, 19
    %v1420 = vpop.permute.xlu0 %1419
    %1421 = vrot.lane.b32.xlu0 %v1202, 19
    %v1422 = vpop.permute.xlu0 %1421
    %v1423 = vsel %vm353, %v1418, %v1420
    %v1424 = vsel %vm353, %v1420, %v1422
    %v1425 = vsel %vm353, %v1422, %v1415
    %v1430 = vsel %vm353, %v1415, %v1418
    %v1432 = vsel %vm1245, %v1413, 0
    %1434 = vmatpush.msra.mxu0 0.0
    %1435 = vmatpush.msra.mxu0 0.0
    %1436 = vmatpush.msra.mxu0 0.0
    %1437 = vmatpush.msra.mxu0 0.0
    %1438 = vmatpush.msra.mxu0 0.0
    %1439 = vmatpush.msra.mxu0 0.0
    %1440 = vmatpush.msra.mxu0 0.0
    %1441 = vmatpush.msra.mxu0 0.0
    %1442 = vmatpush.msra.mxu0 0.0
    %1443 = vmatpush.msra.mxu0 0.0
    %1444 = vmatpush.msra.mxu0 0.0
    %1445 = vmatpush.msra.mxu0 0.0
    %1446 = vmatpush.msra.mxu0 0.0
    %1447 = vmatpush.msra.mxu0 0.0
    %1448 = vmatpush.msra.mxu0 0.0
    %1449 = vmatpush.msra.mxu0 %v1430
    %1450 = vmatmul.f32.gmra.mxu0 %v1432
    %v1451 = vpop.f32.mrf.mxu0
    %v1452 = vadd.f32 0.0, %v1451
    %1453 = vdwg.mxu0
    %1454 = vmatpush.msra.mxu0 0.0
    %1455 = vmatpush.msra.mxu0 0.0
    %1456 = vmatpush.msra.mxu0 0.0
    %1457 = vmatpush.msra.mxu0 0.0
    %1458 = vmatpush.msra.mxu0 0.0
    %1459 = vmatpush.msra.mxu0 0.0
    %1460 = vmatpush.msra.mxu0 0.0
    %1461 = vmatpush.msra.mxu0 0.0
    %1462 = vmatpush.msra.mxu0 0.0
    %1463 = vmatpush.msra.mxu0 0.0
    %1464 = vmatpush.msra.mxu0 0.0
    %1465 = vmatpush.msra.mxu0 0.0
    %1466 = vmatpush.msra.mxu0 0.0
    %1467 = vmatpush.msra.mxu0 0.0
    %1468 = vmatpush.msra.mxu0 0.0
    %1469 = vmatpush.msra.mxu0 %v1423
    %1470 = vmatmul.f32.gmra.mxu0 %v1432
    %v1471 = vpop.f32.mrf.mxu0
    %v1472 = vadd.f32 0.0, %v1471
    %1473 = vdwg.mxu0
    %1474 = vmatpush.msra.mxu0 0.0
    %1475 = vmatpush.msra.mxu0 0.0
    %1476 = vmatpush.msra.mxu0 0.0
    %1477 = vmatpush.msra.mxu0 0.0
    %1478 = vmatpush.msra.mxu0 0.0
    %1479 = vmatpush.msra.mxu0 0.0
    %1480 = vmatpush.msra.mxu0 0.0
    %1481 = vmatpush.msra.mxu0 0.0
    %1482 = vmatpush.msra.mxu0 0.0
    %1483 = vmatpush.msra.mxu0 0.0
    %1484 = vmatpush.msra.mxu0 0.0
    %1485 = vmatpush.msra.mxu0 0.0
    %1486 = vmatpush.msra.mxu0 0.0
    %1487 = vmatpush.msra.mxu0 0.0
    %1488 = vmatpush.msra.mxu0 0.0
    %1489 = vmatpush.msra.mxu0 %v1424
    %1490 = vmatmul.f32.gmra.mxu0 %v1432
    %v1491 = vpop.f32.mrf.mxu0
    %v1492 = vadd.f32 0.0, %v1491
    %1493 = vdwg.mxu0
    %1494 = vmatpush.msra.mxu0 0.0
    %1495 = vmatpush.msra.mxu0 0.0
    %1496 = vmatpush.msra.mxu0 0.0
    %1497 = vmatpush.msra.mxu0 0.0
    %1498 = vmatpush.msra.mxu0 0.0
    %1499 = vmatpush.msra.mxu0 0.0
    %1500 = vmatpush.msra.mxu0 0.0
    %1501 = vmatpush.msra.mxu0 0.0
    %1502 = vmatpush.msra.mxu0 0.0
    %1503 = vmatpush.msra.mxu0 0.0
    %1504 = vmatpush.msra.mxu0 0.0
    %1505 = vmatpush.msra.mxu0 0.0
    %1506 = vmatpush.msra.mxu0 0.0
    %1507 = vmatpush.msra.mxu0 0.0
    %1508 = vmatpush.msra.mxu0 0.0
    %1509 = vmatpush.msra.mxu0 %v1425
    %1510 = vmatmul.f32.gmra.mxu0 %v1432
    %v1511 = vpop.f32.mrf.mxu0
    %v1512 = vadd.f32 0.0, %v1511
    %1513 = vdwg.mxu0
    %v1514 = vadd.f32 %v1350, %v1452
    %v1515 = vadd.f32 %v1370, %v1472
    %v1516 = vadd.f32 %v1390, %v1492
    %v1517 = vadd.f32 %v1410, %v1512
    %s1518 = scalar_lea.vmem %s3, 24
    %v1519 = vld [vmem:[%s1518] sm:$0xff]
    %1520 = vrot.lane.b32.xlu0 %v1203, 1
    %v1521 = vpop.permute.xlu0 %1520
    %1523 = vrot.lane.b32.xlu0 %v1200, 1
    %v1524 = vpop.permute.xlu0 %1523
    %1525 = vrot.lane.b32.xlu0 %v1201, 1
    %v1526 = vpop.permute.xlu0 %1525
    %1527 = vrot.lane.b32.xlu0 %v1202, 1
    %v1528 = vpop.permute.xlu0 %1527
    %v1529 = vsel %vm477, %v1524, %v1526
    %v1530 = vsel %vm477, %v1526, %v1528
    %v1531 = vsel %vm477, %v1528, %v1521
    %v1536 = vsel %vm477, %v1521, %v1524
    %v1538 = vsel %vm1245, %v1519, 0
    %1540 = vmatpush.msra.mxu0 0.0
    %1541 = vmatpush.msra.mxu0 0.0
    %1542 = vmatpush.msra.mxu0 0.0
    %1543 = vmatpush.msra.mxu0 0.0
    %1544 = vmatpush.msra.mxu0 0.0
    %1545 = vmatpush.msra.mxu0 0.0
    %1546 = vmatpush.msra.mxu0 0.0
    %1547 = vmatpush.msra.mxu0 0.0
    %1548 = vmatpush.msra.mxu0 0.0
    %1549 = vmatpush.msra.mxu0 0.0
    %1550 = vmatpush.msra.mxu0 0.0
    %1551 = vmatpush.msra.mxu0 0.0
    %1552 = vmatpush.msra.mxu0 0.0
    %1553 = vmatpush.msra.mxu0 0.0
    %1554 = vmatpush.msra.mxu0 0.0
    %1555 = vmatpush.msra.mxu0 %v1536
    %1556 = vmatmul.f32.gmra.mxu0 %v1538
    %v1557 = vpop.f32.mrf.mxu0
    %v1558 = vadd.f32 0.0, %v1557
    %1559 = vdwg.mxu0
    %1560 = vmatpush.msra.mxu0 0.0
    %1561 = vmatpush.msra.mxu0 0.0
    %1562 = vmatpush.msra.mxu0 0.0
    %1563 = vmatpush.msra.mxu0 0.0
    %1564 = vmatpush.msra.mxu0 0.0
    %1565 = vmatpush.msra.mxu0 0.0
    %1566 = vmatpush.msra.mxu0 0.0
    %1567 = vmatpush.msra.mxu0 0.0
    %1568 = vmatpush.msra.mxu0 0.0
    %1569 = vmatpush.msra.mxu0 0.0
    %1570 = vmatpush.msra.mxu0 0.0
    %1571 = vmatpush.msra.mxu0 0.0
    %1572 = vmatpush.msra.mxu0 0.0
    %1573 = vmatpush.msra.mxu0 0.0
    %1574 = vmatpush.msra.mxu0 0.0
    %1575 = vmatpush.msra.mxu0 %v1529
    %1576 = vmatmul.f32.gmra.mxu0 %v1538
    %v1577 = vpop.f32.mrf.mxu0
    %v1578 = vadd.f32 0.0, %v1577
    %1579 = vdwg.mxu0
    %1580 = vmatpush.msra.mxu0 0.0
    %1581 = vmatpush.msra.mxu0 0.0
    %1582 = vmatpush.msra.mxu0 0.0
    %1583 = vmatpush.msra.mxu0 0.0
    %1584 = vmatpush.msra.mxu0 0.0
    %1585 = vmatpush.msra.mxu0 0.0
    %1586 = vmatpush.msra.mxu0 0.0
    %1587 = vmatpush.msra.mxu0 0.0
    %1588 = vmatpush.msra.mxu0 0.0
    %1589 = vmatpush.msra.mxu0 0.0
    %1590 = vmatpush.msra.mxu0 0.0
    %1591 = vmatpush.msra.mxu0 0.0
    %1592 = vmatpush.msra.mxu0 0.0
    %1593 = vmatpush.msra.mxu0 0.0
    %1594 = vmatpush.msra.mxu0 0.0
    %1595 = vmatpush.msra.mxu0 %v1530
    %1596 = vmatmul.f32.gmra.mxu0 %v1538
    %v1597 = vpop.f32.mrf.mxu0
    %v1598 = vadd.f32 0.0, %v1597
    %1599 = vdwg.mxu0
    %1600 = vmatpush.msra.mxu0 0.0
    %1601 = vmatpush.msra.mxu0 0.0
    %1602 = vmatpush.msra.mxu0 0.0
    %1603 = vmatpush.msra.mxu0 0.0
    %1604 = vmatpush.msra.mxu0 0.0
    %1605 = vmatpush.msra.mxu0 0.0
    %1606 = vmatpush.msra.mxu0 0.0
    %1607 = vmatpush.msra.mxu0 0.0
    %1608 = vmatpush.msra.mxu0 0.0
    %1609 = vmatpush.msra.mxu0 0.0
    %1610 = vmatpush.msra.mxu0 0.0
    %1611 = vmatpush.msra.mxu0 0.0
    %1612 = vmatpush.msra.mxu0 0.0
    %1613 = vmatpush.msra.mxu0 0.0
    %1614 = vmatpush.msra.mxu0 0.0
    %1615 = vmatpush.msra.mxu0 %v1531
    %1616 = vmatmul.f32.gmra.mxu0 %v1538
    %v1617 = vpop.f32.mrf.mxu0
    %v1618 = vadd.f32 0.0, %v1617
    %1619 = vdwg.mxu0
    %v1620 = vadd.f32 %v1514, %v1558
    %v1621 = vadd.f32 %v1515, %v1578
    %v1622 = vadd.f32 %v1516, %v1598
    %v1623 = vadd.f32 %v1517, %v1618
    %s1624 = scalar_lea.vmem %s3, 32
    %v1625 = vld [vmem:[%s1624] sm:$0xff]
    %v1627 = vsel %vm1245, %v1625, 0
    %1629 = vmatpush.msra.mxu0 0.0
    %1630 = vmatpush.msra.mxu0 0.0
    %1631 = vmatpush.msra.mxu0 0.0
    %1632 = vmatpush.msra.mxu0 0.0
    %1633 = vmatpush.msra.mxu0 0.0
    %1634 = vmatpush.msra.mxu0 0.0
    %1635 = vmatpush.msra.mxu0 0.0
    %1636 = vmatpush.msra.mxu0 0.0
    %1637 = vmatpush.msra.mxu0 0.0
    %1638 = vmatpush.msra.mxu0 0.0
    %1639 = vmatpush.msra.mxu0 0.0
    %1640 = vmatpush.msra.mxu0 0.0
    %1641 = vmatpush.msra.mxu0 0.0
    %1642 = vmatpush.msra.mxu0 0.0
    %1643 = vmatpush.msra.mxu0 0.0
    %1644 = vmatpush.msra.mxu0 %v1200
    %1645 = vmatmul.f32.gmra.mxu0 %v1627
    %v1646 = vpop.f32.mrf.mxu0
    %v1647 = vadd.f32 0.0, %v1646
    %1648 = vdwg.mxu0
    %1649 = vmatpush.msra.mxu0 0.0
    %1650 = vmatpush.msra.mxu0 0.0
    %1651 = vmatpush.msra.mxu0 0.0
    %1652 = vmatpush.msra.mxu0 0.0
    %1653 = vmatpush.msra.mxu0 0.0
    %1654 = vmatpush.msra.mxu0 0.0
    %1655 = vmatpush.msra.mxu0 0.0
    %1656 = vmatpush.msra.mxu0 0.0
    %1657 = vmatpush.msra.mxu0 0.0
    %1658 = vmatpush.msra.mxu0 0.0
    %1659 = vmatpush.msra.mxu0 0.0
    %1660 = vmatpush.msra.mxu0 0.0
    %1661 = vmatpush.msra.mxu0 0.0
    %1662 = vmatpush.msra.mxu0 0.0
    %1663 = vmatpush.msra.mxu0 0.0
    %1664 = vmatpush.msra.mxu0 %v1201
    %1665 = vmatmul.f32.gmra.mxu0 %v1627
    %v1666 = vpop.f32.mrf.mxu0
    %v1667 = vadd.f32 0.0, %v1666
    %1668 = vdwg.mxu0
    %1669 = vmatpush.msra.mxu0 0.0
    %1670 = vmatpush.msra.mxu0 0.0
    %1671 = vmatpush.msra.mxu0 0.0
    %1672 = vmatpush.msra.mxu0 0.0
    %1673 = vmatpush.msra.mxu0 0.0
    %1674 = vmatpush.msra.mxu0 0.0
    %1675 = vmatpush.msra.mxu0 0.0
    %1676 = vmatpush.msra.mxu0 0.0
    %1677 = vmatpush.msra.mxu0 0.0
    %1678 = vmatpush.msra.mxu0 0.0
    %1679 = vmatpush.msra.mxu0 0.0
    %1680 = vmatpush.msra.mxu0 0.0
    %1681 = vmatpush.msra.mxu0 0.0
    %1682 = vmatpush.msra.mxu0 0.0
    %1683 = vmatpush.msra.mxu0 0.0
    %1684 = vmatpush.msra.mxu0 %v1202
    %1685 = vmatmul.f32.gmra.mxu0 %v1627
    %v1686 = vpop.f32.mrf.mxu0
    %v1687 = vadd.f32 0.0, %v1686
    %1688 = vdwg.mxu0
    %1689 = vmatpush.msra.mxu0 0.0
    %1690 = vmatpush.msra.mxu0 0.0
    %1691 = vmatpush.msra.mxu0 0.0
    %1692 = vmatpush.msra.mxu0 0.0
    %1693 = vmatpush.msra.mxu0 0.0
    %1694 = vmatpush.msra.mxu0 0.0
    %1695 = vmatpush.msra.mxu0 0.0
    %1696 = vmatpush.msra.mxu0 0.0
    %1697 = vmatpush.msra.mxu0 0.0
    %1698 = vmatpush.msra.mxu0 0.0
    %1699 = vmatpush.msra.mxu0 0.0
    %1700 = vmatpush.msra.mxu0 0.0
    %1701 = vmatpush.msra.mxu0 0.0
    %1702 = vmatpush.msra.mxu0 0.0
    %1703 = vmatpush.msra.mxu0 0.0
    %1704 = vmatpush.msra.mxu0 %v1203
    %1705 = vmatmul.f32.gmra.mxu0 %v1627
    %v1706 = vpop.f32.mrf.mxu0
    %v1707 = vadd.f32 0.0, %v1706
    %1708 = vdwg.mxu0
    %v1709 = vadd.f32 %v1620, %v1647
    %v1710 = vadd.f32 %v1621, %v1667
    %v1711 = vadd.f32 %v1622, %v1687
    %v1712 = vadd.f32 %v1623, %v1707
    %s1713 = scalar_lea.vmem %s3, 40
    %v1714 = vld [vmem:[%s1713] sm:$0xff]
    %1715 = vrot.lane.b32.xlu0 %v1200, 127
    %v1716 = vpop.permute.xlu0 %1715
    %1717 = vrot.lane.b32.xlu0 %v1201, 127
    %v1718 = vpop.permute.xlu0 %1717
    %1719 = vrot.lane.b32.xlu0 %v1202, 127
    %v1720 = vpop.permute.xlu0 %1719
    %1721 = vrot.lane.b32.xlu0 %v1203, 127
    %v1722 = vpop.permute.xlu0 %1721
    %v1723 = vsel %vm700, %v1716, %v1718
    %v1724 = vsel %vm700, %v1718, %v1720
    %v1725 = vsel %vm700, %v1720, %v1722
    %v1731 = vsel %vm700, %v1722, %v1716
    %v1733 = vsel %vm1245, %v1714, 0
    %1735 = vmatpush.msra.mxu0 0.0
    %1736 = vmatpush.msra.mxu0 0.0
    %1737 = vmatpush.msra.mxu0 0.0
    %1738 = vmatpush.msra.mxu0 0.0
    %1739 = vmatpush.msra.mxu0 0.0
    %1740 = vmatpush.msra.mxu0 0.0
    %1741 = vmatpush.msra.mxu0 0.0
    %1742 = vmatpush.msra.mxu0 0.0
    %1743 = vmatpush.msra.mxu0 0.0
    %1744 = vmatpush.msra.mxu0 0.0
    %1745 = vmatpush.msra.mxu0 0.0
    %1746 = vmatpush.msra.mxu0 0.0
    %1747 = vmatpush.msra.mxu0 0.0
    %1748 = vmatpush.msra.mxu0 0.0
    %1749 = vmatpush.msra.mxu0 0.0
    %1750 = vmatpush.msra.mxu0 %v1723
    %1751 = vmatmul.f32.gmra.mxu0 %v1733
    %v1752 = vpop.f32.mrf.mxu0
    %v1753 = vadd.f32 0.0, %v1752
    %1754 = vdwg.mxu0
    %1755 = vmatpush.msra.mxu0 0.0
    %1756 = vmatpush.msra.mxu0 0.0
    %1757 = vmatpush.msra.mxu0 0.0
    %1758 = vmatpush.msra.mxu0 0.0
    %1759 = vmatpush.msra.mxu0 0.0
    %1760 = vmatpush.msra.mxu0 0.0
    %1761 = vmatpush.msra.mxu0 0.0
    %1762 = vmatpush.msra.mxu0 0.0
    %1763 = vmatpush.msra.mxu0 0.0
    %1764 = vmatpush.msra.mxu0 0.0
    %1765 = vmatpush.msra.mxu0 0.0
    %1766 = vmatpush.msra.mxu0 0.0
    %1767 = vmatpush.msra.mxu0 0.0
    %1768 = vmatpush.msra.mxu0 0.0
    %1769 = vmatpush.msra.mxu0 0.0
    %1770 = vmatpush.msra.mxu0 %v1724
    %1771 = vmatmul.f32.gmra.mxu0 %v1733
    %v1772 = vpop.f32.mrf.mxu0
    %v1773 = vadd.f32 0.0, %v1772
    %1774 = vdwg.mxu0
    %1775 = vmatpush.msra.mxu0 0.0
    %1776 = vmatpush.msra.mxu0 0.0
    %1777 = vmatpush.msra.mxu0 0.0
    %1778 = vmatpush.msra.mxu0 0.0
    %1779 = vmatpush.msra.mxu0 0.0
    %1780 = vmatpush.msra.mxu0 0.0
    %1781 = vmatpush.msra.mxu0 0.0
    %1782 = vmatpush.msra.mxu0 0.0
    %1783 = vmatpush.msra.mxu0 0.0
    %1784 = vmatpush.msra.mxu0 0.0
    %1785 = vmatpush.msra.mxu0 0.0
    %1786 = vmatpush.msra.mxu0 0.0
    %1787 = vmatpush.msra.mxu0 0.0
    %1788 = vmatpush.msra.mxu0 0.0
    %1789 = vmatpush.msra.mxu0 0.0
    %1790 = vmatpush.msra.mxu0 %v1725
    %1791 = vmatmul.f32.gmra.mxu0 %v1733
    %v1792 = vpop.f32.mrf.mxu0
    %v1793 = vadd.f32 0.0, %v1792
    %1794 = vdwg.mxu0
    %1795 = vmatpush.msra.mxu0 0.0
    %1796 = vmatpush.msra.mxu0 0.0
    %1797 = vmatpush.msra.mxu0 0.0
    %1798 = vmatpush.msra.mxu0 0.0
    %1799 = vmatpush.msra.mxu0 0.0
    %1800 = vmatpush.msra.mxu0 0.0
    %1801 = vmatpush.msra.mxu0 0.0
    %1802 = vmatpush.msra.mxu0 0.0
    %1803 = vmatpush.msra.mxu0 0.0
    %1804 = vmatpush.msra.mxu0 0.0
    %1805 = vmatpush.msra.mxu0 0.0
    %1806 = vmatpush.msra.mxu0 0.0
    %1807 = vmatpush.msra.mxu0 0.0
    %1808 = vmatpush.msra.mxu0 0.0
    %1809 = vmatpush.msra.mxu0 0.0
    %1810 = vmatpush.msra.mxu0 %v1731
    %1811 = vmatmul.f32.gmra.mxu0 %v1733
    %v1812 = vpop.f32.mrf.mxu0
    %v1813 = vadd.f32 0.0, %v1812
    %1814 = vdwg.mxu0
    %v1815 = vadd.f32 %v1709, %v1753
    %v1816 = vadd.f32 %v1710, %v1773
    %v1817 = vadd.f32 %v1711, %v1793
    %v1818 = vadd.f32 %v1712, %v1813
    %s1819 = scalar_lea.vmem %s3, 48
    %v1820 = vld [vmem:[%s1819] sm:$0xff]
    %1821 = vrot.lane.b32.xlu0 %v1200, 109
    %v1822 = vpop.permute.xlu0 %1821
    %1823 = vrot.lane.b32.xlu0 %v1201, 109
    %v1824 = vpop.permute.xlu0 %1823
    %1825 = vrot.lane.b32.xlu0 %v1202, 109
    %v1826 = vpop.permute.xlu0 %1825
    %1827 = vrot.lane.b32.xlu0 %v1203, 109
    %v1828 = vpop.permute.xlu0 %1827
    %v1829 = vsel %vm824, %v1822, %v1824
    %v1830 = vsel %vm824, %v1824, %v1826
    %v1831 = vsel %vm824, %v1826, %v1828
    %v1837 = vsel %vm824, %v1828, %v1822
    %v1839 = vsel %vm1245, %v1820, 0
    %1841 = vmatpush.msra.mxu0 0.0
    %1842 = vmatpush.msra.mxu0 0.0
    %1843 = vmatpush.msra.mxu0 0.0
    %1844 = vmatpush.msra.mxu0 0.0
    %1845 = vmatpush.msra.mxu0 0.0
    %1846 = vmatpush.msra.mxu0 0.0
    %1847 = vmatpush.msra.mxu0 0.0
    %1848 = vmatpush.msra.mxu0 0.0
    %1849 = vmatpush.msra.mxu0 0.0
    %1850 = vmatpush.msra.mxu0 0.0
    %1851 = vmatpush.msra.mxu0 0.0
    %1852 = vmatpush.msra.mxu0 0.0
    %1853 = vmatpush.msra.mxu0 0.0
    %1854 = vmatpush.msra.mxu0 0.0
    %1855 = vmatpush.msra.mxu0 0.0
    %1856 = vmatpush.msra.mxu0 %v1829
    %1857 = vmatmul.f32.gmra.mxu0 %v1839
    %v1858 = vpop.f32.mrf.mxu0
    %v1859 = vadd.f32 0.0, %v1858
    %1860 = vdwg.mxu0
    %1861 = vmatpush.msra.mxu0 0.0
    %1862 = vmatpush.msra.mxu0 0.0
    %1863 = vmatpush.msra.mxu0 0.0
    %1864 = vmatpush.msra.mxu0 0.0
    %1865 = vmatpush.msra.mxu0 0.0
    %1866 = vmatpush.msra.mxu0 0.0
    %1867 = vmatpush.msra.mxu0 0.0
    %1868 = vmatpush.msra.mxu0 0.0
    %1869 = vmatpush.msra.mxu0 0.0
    %1870 = vmatpush.msra.mxu0 0.0
    %1871 = vmatpush.msra.mxu0 0.0
    %1872 = vmatpush.msra.mxu0 0.0
    %1873 = vmatpush.msra.mxu0 0.0
    %1874 = vmatpush.msra.mxu0 0.0
    %1875 = vmatpush.msra.mxu0 0.0
    %1876 = vmatpush.msra.mxu0 %v1830
    %1877 = vmatmul.f32.gmra.mxu0 %v1839
    %v1878 = vpop.f32.mrf.mxu0
    %v1879 = vadd.f32 0.0, %v1878
    %1880 = vdwg.mxu0
    %1881 = vmatpush.msra.mxu0 0.0
    %1882 = vmatpush.msra.mxu0 0.0
    %1883 = vmatpush.msra.mxu0 0.0
    %1884 = vmatpush.msra.mxu0 0.0
    %1885 = vmatpush.msra.mxu0 0.0
    %1886 = vmatpush.msra.mxu0 0.0
    %1887 = vmatpush.msra.mxu0 0.0
    %1888 = vmatpush.msra.mxu0 0.0
    %1889 = vmatpush.msra.mxu0 0.0
    %1890 = vmatpush.msra.mxu0 0.0
    %1891 = vmatpush.msra.mxu0 0.0
    %1892 = vmatpush.msra.mxu0 0.0
    %1893 = vmatpush.msra.mxu0 0.0
    %1894 = vmatpush.msra.mxu0 0.0
    %1895 = vmatpush.msra.mxu0 0.0
    %1896 = vmatpush.msra.mxu0 %v1831
    %1897 = vmatmul.f32.gmra.mxu0 %v1839
    %v1898 = vpop.f32.mrf.mxu0
    %v1899 = vadd.f32 0.0, %v1898
    %1900 = vdwg.mxu0
    %1901 = vmatpush.msra.mxu0 0.0
    %1902 = vmatpush.msra.mxu0 0.0
    %1903 = vmatpush.msra.mxu0 0.0
    %1904 = vmatpush.msra.mxu0 0.0
    %1905 = vmatpush.msra.mxu0 0.0
    %1906 = vmatpush.msra.mxu0 0.0
    %1907 = vmatpush.msra.mxu0 0.0
    %1908 = vmatpush.msra.mxu0 0.0
    %1909 = vmatpush.msra.mxu0 0.0
    %1910 = vmatpush.msra.mxu0 0.0
    %1911 = vmatpush.msra.mxu0 0.0
    %1912 = vmatpush.msra.mxu0 0.0
    %1913 = vmatpush.msra.mxu0 0.0
    %1914 = vmatpush.msra.mxu0 0.0
    %1915 = vmatpush.msra.mxu0 0.0
    %1916 = vmatpush.msra.mxu0 %v1837
    %1917 = vmatmul.f32.gmra.mxu0 %v1839
    %v1918 = vpop.f32.mrf.mxu0
    %v1919 = vadd.f32 0.0, %v1918
    %1920 = vdwg.mxu0
    %v1921 = vadd.f32 %v1815, %v1859
    %v1922 = vadd.f32 %v1816, %v1879
    %v1923 = vadd.f32 %v1817, %v1899
    %v1924 = vadd.f32 %v1818, %v1919
    %s1925 = scalar_lea.vmem %s3, 56
    %v1926 = vld [vmem:[%s1925] sm:$0xff]
    %1927 = vrot.lane.b32.xlu0 %v1200, 108
    %v1928 = vpop.permute.xlu0 %1927
    %1929 = vrot.lane.b32.xlu0 %v1201, 108
    %v1930 = vpop.permute.xlu0 %1929
    %1931 = vrot.lane.b32.xlu0 %v1202, 108
    %v1932 = vpop.permute.xlu0 %1931
    %1933 = vrot.lane.b32.xlu0 %v1203, 108
    %v1934 = vpop.permute.xlu0 %1933
    %v1935 = vsel %vm948, %v1928, %v1930
    %v1936 = vsel %vm948, %v1930, %v1932
    %v1937 = vsel %vm948, %v1932, %v1934
    %v1943 = vsel %vm948, %v1934, %v1928
    %v1945 = vsel %vm1245, %v1926, 0
    %1947 = vmatpush.msra.mxu0 0.0
    %1948 = vmatpush.msra.mxu0 0.0
    %1949 = vmatpush.msra.mxu0 0.0
    %1950 = vmatpush.msra.mxu0 0.0
    %1951 = vmatpush.msra.mxu0 0.0
    %1952 = vmatpush.msra.mxu0 0.0
    %1953 = vmatpush.msra.mxu0 0.0
    %1954 = vmatpush.msra.mxu0 0.0
    %1955 = vmatpush.msra.mxu0 0.0
    %1956 = vmatpush.msra.mxu0 0.0
    %1957 = vmatpush.msra.mxu0 0.0
    %1958 = vmatpush.msra.mxu0 0.0
    %1959 = vmatpush.msra.mxu0 0.0
    %1960 = vmatpush.msra.mxu0 0.0
    %1961 = vmatpush.msra.mxu0 0.0
    %1962 = vmatpush.msra.mxu0 %v1935
    %1963 = vmatmul.f32.gmra.mxu0 %v1945
    %v1964 = vpop.f32.mrf.mxu0
    %v1965 = vadd.f32 0.0, %v1964
    %1966 = vdwg.mxu0
    %1967 = vmatpush.msra.mxu0 0.0
    %1968 = vmatpush.msra.mxu0 0.0
    %1969 = vmatpush.msra.mxu0 0.0
    %1970 = vmatpush.msra.mxu0 0.0
    %1971 = vmatpush.msra.mxu0 0.0
    %1972 = vmatpush.msra.mxu0 0.0
    %1973 = vmatpush.msra.mxu0 0.0
    %1974 = vmatpush.msra.mxu0 0.0
    %1975 = vmatpush.msra.mxu0 0.0
    %1976 = vmatpush.msra.mxu0 0.0
    %1977 = vmatpush.msra.mxu0 0.0
    %1978 = vmatpush.msra.mxu0 0.0
    %1979 = vmatpush.msra.mxu0 0.0
    %1980 = vmatpush.msra.mxu0 0.0
    %1981 = vmatpush.msra.mxu0 0.0
    %1982 = vmatpush.msra.mxu0 %v1936
    %1983 = vmatmul.f32.gmra.mxu0 %v1945
    %v1984 = vpop.f32.mrf.mxu0
    %v1985 = vadd.f32 0.0, %v1984
    %1986 = vdwg.mxu0
    %1987 = vmatpush.msra.mxu0 0.0
    %1988 = vmatpush.msra.mxu0 0.0
    %1989 = vmatpush.msra.mxu0 0.0
    %1990 = vmatpush.msra.mxu0 0.0
    %1991 = vmatpush.msra.mxu0 0.0
    %1992 = vmatpush.msra.mxu0 0.0
    %1993 = vmatpush.msra.mxu0 0.0
    %1994 = vmatpush.msra.mxu0 0.0
    %1995 = vmatpush.msra.mxu0 0.0
    %1996 = vmatpush.msra.mxu0 0.0
    %1997 = vmatpush.msra.mxu0 0.0
    %1998 = vmatpush.msra.mxu0 0.0
    %1999 = vmatpush.msra.mxu0 0.0
    %2000 = vmatpush.msra.mxu0 0.0
    %2001 = vmatpush.msra.mxu0 0.0
    %2002 = vmatpush.msra.mxu0 %v1937
    %2003 = vmatmul.f32.gmra.mxu0 %v1945
    %v2004 = vpop.f32.mrf.mxu0
    %v2005 = vadd.f32 0.0, %v2004
    %2006 = vdwg.mxu0
    %2007 = vmatpush.msra.mxu0 0.0
    %2008 = vmatpush.msra.mxu0 0.0
    %2009 = vmatpush.msra.mxu0 0.0
    %2010 = vmatpush.msra.mxu0 0.0
    %2011 = vmatpush.msra.mxu0 0.0
    %2012 = vmatpush.msra.mxu0 0.0
    %2013 = vmatpush.msra.mxu0 0.0
    %2014 = vmatpush.msra.mxu0 0.0
    %2015 = vmatpush.msra.mxu0 0.0
    %2016 = vmatpush.msra.mxu0 0.0
    %2017 = vmatpush.msra.mxu0 0.0
    %2018 = vmatpush.msra.mxu0 0.0
    %2019 = vmatpush.msra.mxu0 0.0
    %2020 = vmatpush.msra.mxu0 0.0
    %2021 = vmatpush.msra.mxu0 0.0
    %2022 = vmatpush.msra.mxu0 %v1943
    %2023 = vmatmul.f32.gmra.mxu0 %v1945
    %v2024 = vpop.f32.mrf.mxu0
    %v2025 = vadd.f32 0.0, %v2024
    %2026 = vdwg.mxu0
    %v2027 = vadd.f32 %v1921, %v1965
    %v2028 = vadd.f32 %v1922, %v1985
    %v2029 = vadd.f32 %v1923, %v2005
    %v2030 = vadd.f32 %v1924, %v2025
    %s2031 = scalar_lea.vmem %s3, 64
    %v2032 = vld [vmem:[%s2031] sm:$0xff]
    %2033 = vrot.lane.b32.xlu0 %v1200, 107
    %v2034 = vpop.permute.xlu0 %2033
    %2035 = vrot.lane.b32.xlu0 %v1201, 107
    %v2036 = vpop.permute.xlu0 %2035
    %2037 = vrot.lane.b32.xlu0 %v1202, 107
    %v2038 = vpop.permute.xlu0 %2037
    %2039 = vrot.lane.b32.xlu0 %v1203, 107
    %v2040 = vpop.permute.xlu0 %2039
    %v2041 = vsel %vm1072, %v2034, %v2036
    %v2042 = vsel %vm1072, %v2036, %v2038
    %v2043 = vsel %vm1072, %v2038, %v2040
    %v2049 = vsel %vm1072, %v2040, %v2034
    %v2051 = vsel %vm1245, %v2032, 0
    %2053 = vmatpush.msra.mxu0 0.0
    %2054 = vmatpush.msra.mxu0 0.0
    %2055 = vmatpush.msra.mxu0 0.0
    %2056 = vmatpush.msra.mxu0 0.0
    %2057 = vmatpush.msra.mxu0 0.0
    %2058 = vmatpush.msra.mxu0 0.0
    %2059 = vmatpush.msra.mxu0 0.0
    %2060 = vmatpush.msra.mxu0 0.0
    %2061 = vmatpush.msra.mxu0 0.0
    %2062 = vmatpush.msra.mxu0 0.0
    %2063 = vmatpush.msra.mxu0 0.0
    %2064 = vmatpush.msra.mxu0 0.0
    %2065 = vmatpush.msra.mxu0 0.0
    %2066 = vmatpush.msra.mxu0 0.0
    %2067 = vmatpush.msra.mxu0 0.0
    %2068 = vmatpush.msra.mxu0 %v2041
    %2069 = vmatmul.f32.gmra.mxu0 %v2051
    %v2070 = vpop.f32.mrf.mxu0
    %v2071 = vadd.f32 0.0, %v2070
    %2072 = vdwg.mxu0
    %2073 = vmatpush.msra.mxu0 0.0
    %2074 = vmatpush.msra.mxu0 0.0
    %2075 = vmatpush.msra.mxu0 0.0
    %2076 = vmatpush.msra.mxu0 0.0
    %2077 = vmatpush.msra.mxu0 0.0
    %2078 = vmatpush.msra.mxu0 0.0
    %2079 = vmatpush.msra.mxu0 0.0
    %2080 = vmatpush.msra.mxu0 0.0
    %2081 = vmatpush.msra.mxu0 0.0
    %2082 = vmatpush.msra.mxu0 0.0
    %2083 = vmatpush.msra.mxu0 0.0
    %2084 = vmatpush.msra.mxu0 0.0
    %2085 = vmatpush.msra.mxu0 0.0
    %2086 = vmatpush.msra.mxu0 0.0
    %2087 = vmatpush.msra.mxu0 0.0
    %2088 = vmatpush.msra.mxu0 %v2042
    %2089 = vmatmul.f32.gmra.mxu0 %v2051
    %v2090 = vpop.f32.mrf.mxu0
    %v2091 = vadd.f32 0.0, %v2090
    %2092 = vdwg.mxu0
    %2093 = vmatpush.msra.mxu0 0.0
    %2094 = vmatpush.msra.mxu0 0.0
    %2095 = vmatpush.msra.mxu0 0.0
    %2096 = vmatpush.msra.mxu0 0.0
    %2097 = vmatpush.msra.mxu0 0.0
    %2098 = vmatpush.msra.mxu0 0.0
    %2099 = vmatpush.msra.mxu0 0.0
    %2100 = vmatpush.msra.mxu0 0.0
    %2101 = vmatpush.msra.mxu0 0.0
    %2102 = vmatpush.msra.mxu0 0.0
    %2103 = vmatpush.msra.mxu0 0.0
    %2104 = vmatpush.msra.mxu0 0.0
    %2105 = vmatpush.msra.mxu0 0.0
    %2106 = vmatpush.msra.mxu0 0.0
    %2107 = vmatpush.msra.mxu0 0.0
    %2108 = vmatpush.msra.mxu0 %v2043
    %2109 = vmatmul.f32.gmra.mxu0 %v2051
    %v2110 = vpop.f32.mrf.mxu0
    %v2111 = vadd.f32 0.0, %v2110
    %2112 = vdwg.mxu0
    %2113 = vmatpush.msra.mxu0 0.0
    %2114 = vmatpush.msra.mxu0 0.0
    %2115 = vmatpush.msra.mxu0 0.0
    %2116 = vmatpush.msra.mxu0 0.0
    %2117 = vmatpush.msra.mxu0 0.0
    %2118 = vmatpush.msra.mxu0 0.0
    %2119 = vmatpush.msra.mxu0 0.0
    %2120 = vmatpush.msra.mxu0 0.0
    %2121 = vmatpush.msra.mxu0 0.0
    %2122 = vmatpush.msra.mxu0 0.0
    %2123 = vmatpush.msra.mxu0 0.0
    %2124 = vmatpush.msra.mxu0 0.0
    %2125 = vmatpush.msra.mxu0 0.0
    %2126 = vmatpush.msra.mxu0 0.0
    %2127 = vmatpush.msra.mxu0 0.0
    %2128 = vmatpush.msra.mxu0 %v2049
    %2129 = vmatmul.f32.gmra.mxu0 %v2051
    %v2130 = vpop.f32.mrf.mxu0
    %v2131 = vadd.f32 0.0, %v2130
    %2132 = vdwg.mxu0
    %v2133 = vadd.f32 %v2027, %v2071
    %v2134 = vadd.f32 %v2028, %v2091
    %v2135 = vadd.f32 %v2029, %v2111
    %v2136 = vadd.f32 %v2030, %v2131
    %2138 = vset.pattern.permute.xlu0 0
    %2139 = vperm.xlu0 %2138, %v85
    %v2140 = vpop.permute.xlu0 %2139
    %v2142 = vadd.f32 %v2133, %v2140
    %v2143 = vadd.f32 %v2134, %v2140
    %v2144 = vadd.f32 %v2135, %v2140
    %v2145 = vadd.f32 %v2136, %v2140
    %v2146 = vld [vmem:[%s5] sm:$0xff]
    %2148 = vset.pattern.permute.xlu0 0
    %2149 = vperm.xlu0 %2148, %v2146
    %v2150 = vpop.permute.xlu0 %2149
    %v2152 = vperm.slane %v86, 0
    %v2153 = vperm.slane %v86, 4
    %v2154 = vperm.slane %v87, 0
    %v2155 = vperm.slane %v87, 4
    %v2160 = vperm.slane %v2152, 0
    %v2161 = vperm.slane %v2153, 0
    %v2162 = vperm.slane %v2154, 0
    %v2163 = vperm.slane %v2155, 0
    %v2164 = vmul.f32 %v2150, %v2160
    %v2165 = vmul.f32 %v2150, %v2161
    %v2166 = vmul.f32 %v2150, %v2162
    %v2167 = vmul.f32 %v2150, %v2163
    %2168 = vset.pattern.permute.xlu0 1
    %2169 = vperm.xlu0 %2168, %v2146
    %v2170 = vpop.permute.xlu0 %2169
    %v2172 = vperm.slane %v86, 1
    %v2173 = vperm.slane %v86, 5
    %v2174 = vperm.slane %v87, 1
    %v2175 = vperm.slane %v87, 5
    %v2180 = vperm.slane %v2172, 1
    %v2181 = vperm.slane %v2173, 1
    %v2182 = vperm.slane %v2174, 1
    %v2183 = vperm.slane %v2175, 1
    %v2184 = vmul.f32 %v2170, %v2180
    %v2185 = vmul.f32 %v2170, %v2181
    %v2186 = vmul.f32 %v2170, %v2182
    %v2187 = vmul.f32 %v2170, %v2183
    %v2188 = vadd.f32 %v2164, %v2184
    %v2189 = vadd.f32 %v2165, %v2185
    %v2190 = vadd.f32 %v2166, %v2186
    %v2191 = vadd.f32 %v2167, %v2187
    %2192 = vset.pattern.permute.xlu0 2
    %2193 = vperm.xlu0 %2192, %v2146
    %v2194 = vpop.permute.xlu0 %2193
    %v2196 = vperm.slane %v86, 2
    %v2197 = vperm.slane %v86, 6
    %v2198 = vperm.slane %v87, 2
    %v2199 = vperm.slane %v87, 6
    %v2204 = vperm.slane %v2196, 2
    %v2205 = vperm.slane %v2197, 2
    %v2206 = vperm.slane %v2198, 2
    %v2207 = vperm.slane %v2199, 2
    %v2208 = vmul.f32 %v2194, %v2204
    %v2209 = vmul.f32 %v2194, %v2205
    %v2210 = vmul.f32 %v2194, %v2206
    %v2211 = vmul.f32 %v2194, %v2207
    %v2212 = vadd.f32 %v2188, %v2208
    %v2213 = vadd.f32 %v2189, %v2209
    %v2214 = vadd.f32 %v2190, %v2210
    %v2215 = vadd.f32 %v2191, %v2211
    %2216 = vset.pattern.permute.xlu0 3
    %2217 = vperm.xlu0 %2216, %v2146
    %v2218 = vpop.permute.xlu0 %2217
    %v2220 = vperm.slane %v86, 3
    %v2221 = vperm.slane %v86, 7
    %v2222 = vperm.slane %v87, 3
    %v2223 = vperm.slane %v87, 7
    %v2228 = vperm.slane %v2220, 3
    %v2229 = vperm.slane %v2221, 3
    %v2230 = vperm.slane %v2222, 3
    %v2231 = vperm.slane %v2223, 3
    %v2232 = vmul.f32 %v2218, %v2228
    %v2233 = vmul.f32 %v2218, %v2229
    %v2234 = vmul.f32 %v2218, %v2230
    %v2235 = vmul.f32 %v2218, %v2231
    %v2236 = vadd.f32 %v2212, %v2232
    %v2237 = vadd.f32 %v2213, %v2233
    %v2238 = vadd.f32 %v2214, %v2234
    %v2239 = vadd.f32 %v2215, %v2235
    %v2240 = vld [vmem:[%s6] sm:$0xff]
    %2242 = vset.pattern.permute.xlu0 0
    %2243 = vperm.xlu0 %2242, %v2240
    %v2244 = vpop.permute.xlu0 %2243
    %v2246 = vadd.f32 %v2236, %v2244
    %v2247 = vadd.f32 %v2237, %v2244
    %v2248 = vadd.f32 %v2238, %v2244
    %v2249 = vadd.f32 %v2239, %v2244
    %v2250 = vadd.f32 %v2142, %v2246
    %v2251 = vadd.f32 %v2143, %v2247
    %v2252 = vadd.f32 %v2144, %v2248
    %v2253 = vadd.f32 %v2145, %v2249
    %v2254 = vmax.f32 %v2250, 0.0
    %v2255 = vmax.f32 %v2251, 0.0
    %v2256 = vmax.f32 %v2252, 0.0
    %v2257 = vmax.f32 %v2253, 0.0
    %2258 = vst [vmem:[#allocation2] sm:$0xff] %v2254
    %2259 = vst [vmem:[#allocation2 + $0x8] sm:$0xff] %v2255
    %2260 = vst [vmem:[#allocation2 + $0x10] sm:$0xff] %v2256
    %2261 = vst [vmem:[#allocation2 + $0x18] sm:$0xff] %v2257
    %s2262 = scalar_lea.vmem %s0, 16
    %v2263 = vld [vmem:[%s2262] sm:$0xff]
    %v2264 = vld [vmem:[%s2262 + $0x8] sm:$0xff]
    %v2265 = vld [vmem:[%s1] sm:$0xff]
    %2267 = vst [vmem:[#allocation1] ss:$2 sm:$0xff] %v2264
    %v2268 = vld.sshfl [vmem:[#allocation1 + $0x8] sm:$0xff pattern:$0x75316420]
    %2269 = vrot.lane.b32.xlu0 %v2268, 21
    %v2270 = vpop.permute.xlu0 %2269
    %2273 = vst [vmem:[#allocation1] ss:$2 sm:$0xff] %v2263
    %s2274 = scalar_lea.vmem [#allocation1], 16
    %2275 = vst [vmem:[%s2274] ss:$2 sm:$0xff] %v2264
    %v2276 = vld.sshfl [vmem:[#allocation1] sm:$0xff pattern:$0x75316420]
    %v2277 = vld.sshfl [vmem:[#allocation1 + $0x8] sm:$0xff pattern:$0x75316420]
    %v2278 = vld.sshfl [vmem:[#allocation1 + $0x10] sm:$0xff pattern:$0x75316420]
    %v2279 = vld.sshfl [vmem:[#allocation1 + $0x18] sm:$0xff pattern:$0x75316420]
    %2280 = vrot.lane.b32.xlu0 %v2276, 21
    %v2281 = vpop.permute.xlu0 %2280
    %2282 = vrot.lane.b32.xlu0 %v2277, 21
    %v2283 = vpop.permute.xlu0 %2282
    %2284 = vrot.lane.b32.xlu0 %v2278, 21
    %v2285 = vpop.permute.xlu0 %2284
    %2286 = vrot.lane.b32.xlu0 %v2279, 21
    %v2287 = vpop.permute.xlu0 %2286
    %v2288 = vsel %vm111, %v2281, %v2283
    %v2289 = vsel %vm111, %v2283, %v2285
    %v2290 = vsel %vm111, %v2285, %v2287
    %v2292 = vsel %vm111, %v2270, %v2281
    %v2293 = vld [vmem:[%s117] sm:$0xff]
    %2294 = vst [vmem:[#allocation1] ss:$2 sm:$0xff] %v2264
    %v2295 = vld.sshfl [vmem:[#allocation1 + $0x8] sm:$0xff pattern:$0x75316420]
    %2296 = vrot.lane.b32.xlu0 %v2295, 20
    %v2297 = vpop.permute.xlu0 %2296
    %2299 = vst [vmem:[#allocation1] ss:$2 sm:$0xff] %v2263
    %s2300 = scalar_lea.vmem [#allocation1], 16
    %2301 = vst [vmem:[%s2300] ss:$2 sm:$0xff] %v2264
    %v2302 = vld.sshfl [vmem:[#allocation1] sm:$0xff pattern:$0x75316420]
    %v2303 = vld.sshfl [vmem:[#allocation1 + $0x8] sm:$0xff pattern:$0x75316420]
    %v2304 = vld.sshfl [vmem:[#allocation1 + $0x10] sm:$0xff pattern:$0x75316420]
    %v2305 = vld.sshfl [vmem:[#allocation1 + $0x18] sm:$0xff pattern:$0x75316420]
    %2306 = vrot.lane.b32.xlu0 %v2302, 20
    %v2307 = vpop.permute.xlu0 %2306
    %2308 = vrot.lane.b32.xlu0 %v2303, 20
    %v2309 = vpop.permute.xlu0 %2308
    %2310 = vrot.lane.b32.xlu0 %v2304, 20
    %v2311 = vpop.permute.xlu0 %2310
    %2312 = vrot.lane.b32.xlu0 %v2305, 20
    %v2313 = vpop.permute.xlu0 %2312
    %v2314 = vsel %vm139, %v2307, %v2309
    %v2315 = vsel %vm139, %v2309, %v2311
    %v2316 = vsel %vm139, %v2311, %v2313
    %v2318 = vsel %vm139, %v2297, %v2307
    %v2320 = vsel %vm145, %v2293, 0
    %v2323 = vsel %vm149, %v2318, 0
    %v2325 = vsel %vm149, %v2314, 0
    %v2327 = vsel %vm149, %v2315, 0
    %v2329 = vsel %vm149, %v2316, 0
    %2331 = vmatpush.msra.mxu0 0.0
    %2332 = vmatpush.msra.mxu0 0.0
    %2333 = vmatpush.msra.mxu0 0.0
    %2334 = vmatpush.msra.mxu0 0.0
    %2335 = vmatpush.msra.mxu0 0.0
    %2336 = vmatpush.msra.mxu0 0.0
    %2337 = vmatpush.msra.mxu0 0.0
    %2338 = vmatpush.msra.mxu0 0.0
    %2339 = vmatpush.msra.mxu0 0.0
    %2340 = vmatpush.msra.mxu0 0.0
    %2341 = vmatpush.msra.mxu0 0.0
    %2342 = vmatpush.msra.mxu0 0.0
    %2343 = vmatpush.msra.mxu0 0.0
    %2344 = vmatpush.msra.mxu0 0.0
    %2345 = vmatpush.msra.mxu0 0.0
    %2346 = vmatpush.msra.mxu0 %v2323
    %2347 = vmatmul.f32.gmra.mxu0 %v2320
    %v2348 = vpop.f32.mrf.mxu0
    %v2349 = vadd.f32 0.0, %v2348
    %2350 = vdwg.mxu0
    %2351 = vmatpush.msra.mxu0 0.0
    %2352 = vmatpush.msra.mxu0 0.0
    %2353 = vmatpush.msra.mxu0 0.0
    %2354 = vmatpush.msra.mxu0 0.0
    %2355 = vmatpush.msra.mxu0 0.0
    %2356 = vmatpush.msra.mxu0 0.0
    %2357 = vmatpush.msra.mxu0 0.0
    %2358 = vmatpush.msra.mxu0 0.0
    %2359 = vmatpush.msra.mxu0 0.0
    %2360 = vmatpush.msra.mxu0 0.0
    %2361 = vmatpush.msra.mxu0 0.0
    %2362 = vmatpush.msra.mxu0 0.0
    %2363 = vmatpush.msra.mxu0 0.0
    %2364 = vmatpush.msra.mxu0 0.0
    %2365 = vmatpush.msra.mxu0 0.0
    %2366 = vmatpush.msra.mxu0 %v2325
    %2367 = vmatmul.f32.gmra.mxu0 %v2320
    %v2368 = vpop.f32.mrf.mxu0
    %v2369 = vadd.f32 0.0, %v2368
    %2370 = vdwg.mxu0
    %2371 = vmatpush.msra.mxu0 0.0
    %2372 = vmatpush.msra.mxu0 0.0
    %2373 = vmatpush.msra.mxu0 0.0
    %2374 = vmatpush.msra.mxu0 0.0
    %2375 = vmatpush.msra.mxu0 0.0
    %2376 = vmatpush.msra.mxu0 0.0
    %2377 = vmatpush.msra.mxu0 0.0
    %2378 = vmatpush.msra.mxu0 0.0
    %2379 = vmatpush.msra.mxu0 0.0
    %2380 = vmatpush.msra.mxu0 0.0
    %2381 = vmatpush.msra.mxu0 0.0
    %2382 = vmatpush.msra.mxu0 0.0
    %2383 = vmatpush.msra.mxu0 0.0
    %2384 = vmatpush.msra.mxu0 0.0
    %2385 = vmatpush.msra.mxu0 0.0
    %2386 = vmatpush.msra.mxu0 %v2327
    %2387 = vmatmul.f32.gmra.mxu0 %v2320
    %v2388 = vpop.f32.mrf.mxu0
    %v2389 = vadd.f32 0.0, %v2388
    %2390 = vdwg.mxu0
    %2391 = vmatpush.msra.mxu0 0.0
    %2392 = vmatpush.msra.mxu0 0.0
    %2393 = vmatpush.msra.mxu0 0.0
    %2394 = vmatpush.msra.mxu0 0.0
    %2395 = vmatpush.msra.mxu0 0.0
    %2396 = vmatpush.msra.mxu0 0.0
    %2397 = vmatpush.msra.mxu0 0.0
    %2398 = vmatpush.msra.mxu0 0.0
    %2399 = vmatpush.msra.mxu0 0.0
    %2400 = vmatpush.msra.mxu0 0.0
    %2401 = vmatpush.msra.mxu0 0.0
    %2402 = vmatpush.msra.mxu0 0.0
    %2403 = vmatpush.msra.mxu0 0.0
    %2404 = vmatpush.msra.mxu0 0.0
    %2405 = vmatpush.msra.mxu0 0.0
    %2406 = vmatpush.msra.mxu0 %v2329
    %2407 = vmatmul.f32.gmra.mxu0 %v2320
    %v2408 = vpop.f32.mrf.mxu0
    %v2409 = vadd.f32 0.0, %v2408
    %2410 = vdwg.mxu0
    %v2412 = vsel %vm145, %v2265, 0
    %v2415 = vsel %vm149, %v2292, 0
    %v2417 = vsel %vm149, %v2288, 0
    %v2419 = vsel %vm149, %v2289, 0
    %v2421 = vsel %vm149, %v2290, 0
    %2423 = vmatpush.msra.mxu0 0.0
    %2424 = vmatpush.msra.mxu0 0.0
    %2425 = vmatpush.msra.mxu0 0.0
    %2426 = vmatpush.msra.mxu0 0.0
    %2427 = vmatpush.msra.mxu0 0.0
    %2428 = vmatpush.msra.mxu0 0.0
    %2429 = vmatpush.msra.mxu0 0.0
    %2430 = vmatpush.msra.mxu0 0.0
    %2431 = vmatpush.msra.mxu0 0.0
    %2432 = vmatpush.msra.mxu0 0.0
    %2433 = vmatpush.msra.mxu0 0.0
    %2434 = vmatpush.msra.mxu0 0.0
    %2435 = vmatpush.msra.mxu0 0.0
    %2436 = vmatpush.msra.mxu0 0.0
    %2437 = vmatpush.msra.mxu0 0.0
    %2438 = vmatpush.msra.mxu0 %v2415
    %2439 = vmatmul.f32.gmra.mxu0 %v2412
    %v2440 = vpop.f32.mrf.mxu0
    %v2441 = vadd.f32 %v2349, %v2440
    %2442 = vdwg.mxu0
    %2443 = vmatpush.msra.mxu0 0.0
    %2444 = vmatpush.msra.mxu0 0.0
    %2445 = vmatpush.msra.mxu0 0.0
    %2446 = vmatpush.msra.mxu0 0.0
    %2447 = vmatpush.msra.mxu0 0.0
    %2448 = vmatpush.msra.mxu0 0.0
    %2449 = vmatpush.msra.mxu0 0.0
    %2450 = vmatpush.msra.mxu0 0.0
    %2451 = vmatpush.msra.mxu0 0.0
    %2452 = vmatpush.msra.mxu0 0.0
    %2453 = vmatpush.msra.mxu0 0.0
    %2454 = vmatpush.msra.mxu0 0.0
    %2455 = vmatpush.msra.mxu0 0.0
    %2456 = vmatpush.msra.mxu0 0.0
    %2457 = vmatpush.msra.mxu0 0.0
    %2458 = vmatpush.msra.mxu0 %v2417
    %2459 = vmatmul.f32.gmra.mxu0 %v2412
    %v2460 = vpop.f32.mrf.mxu0
    %v2461 = vadd.f32 %v2369, %v2460
    %2462 = vdwg.mxu0
    %2463 = vmatpush.msra.mxu0 0.0
    %2464 = vmatpush.msra.mxu0 0.0
    %2465 = vmatpush.msra.mxu0 0.0
    %2466 = vmatpush.msra.mxu0 0.0
    %2467 = vmatpush.msra.mxu0 0.0
    %2468 = vmatpush.msra.mxu0 0.0
    %2469 = vmatpush.msra.mxu0 0.0
    %2470 = vmatpush.msra.mxu0 0.0
    %2471 = vmatpush.msra.mxu0 0.0
    %2472 = vmatpush.msra.mxu0 0.0
    %2473 = vmatpush.msra.mxu0 0.0
    %2474 = vmatpush.msra.mxu0 0.0
    %2475 = vmatpush.msra.mxu0 0.0
    %2476 = vmatpush.msra.mxu0 0.0
    %2477 = vmatpush.msra.mxu0 0.0
    %2478 = vmatpush.msra.mxu0 %v2419
    %2479 = vmatmul.f32.gmra.mxu0 %v2412
    %v2480 = vpop.f32.mrf.mxu0
    %v2481 = vadd.f32 %v2389, %v2480
    %2482 = vdwg.mxu0
    %2483 = vmatpush.msra.mxu0 0.0
    %2484 = vmatpush.msra.mxu0 0.0
    %2485 = vmatpush.msra.mxu0 0.0
    %2486 = vmatpush.msra.mxu0 0.0
    %2487 = vmatpush.msra.mxu0 0.0
    %2488 = vmatpush.msra.mxu0 0.0
    %2489 = vmatpush.msra.mxu0 0.0
    %2490 = vmatpush.msra.mxu0 0.0
    %2491 = vmatpush.msra.mxu0 0.0
    %2492 = vmatpush.msra.mxu0 0.0
    %2493 = vmatpush.msra.mxu0 0.0
    %2494 = vmatpush.msra.mxu0 0.0
    %2495 = vmatpush.msra.mxu0 0.0
    %2496 = vmatpush.msra.mxu0 0.0
    %2497 = vmatpush.msra.mxu0 0.0
    %2498 = vmatpush.msra.mxu0 %v2421
    %2499 = vmatmul.f32.gmra.mxu0 %v2412
    %v2500 = vpop.f32.mrf.mxu0
    %v2501 = vadd.f32 %v2409, %v2500
    %2502 = vdwg.mxu0
    %v2503 = vld [vmem:[%s331] sm:$0xff]
    %2504 = vst [vmem:[#allocation1] ss:$2 sm:$0xff] %v2264
    %v2505 = vld.sshfl [vmem:[#allocation1 + $0x8] sm:$0xff pattern:$0x75316420]
    %2506 = vrot.lane.b32.xlu0 %v2505, 19
    %v2507 = vpop.permute.xlu0 %2506
    %2509 = vst [vmem:[#allocation1] ss:$2 sm:$0xff] %v2263
    %s2510 = scalar_lea.vmem [#allocation1], 16
    %2511 = vst [vmem:[%s2510] ss:$2 sm:$0xff] %v2264
    %v2512 = vld.sshfl [vmem:[#allocation1] sm:$0xff pattern:$0x75316420]
    %v2513 = vld.sshfl [vmem:[#allocation1 + $0x8] sm:$0xff pattern:$0x75316420]
    %v2514 = vld.sshfl [vmem:[#allocation1 + $0x10] sm:$0xff pattern:$0x75316420]
    %v2515 = vld.sshfl [vmem:[#allocation1 + $0x18] sm:$0xff pattern:$0x75316420]
    %2516 = vrot.lane.b32.xlu0 %v2512, 19
    %v2517 = vpop.permute.xlu0 %2516
    %2518 = vrot.lane.b32.xlu0 %v2513, 19
    %v2519 = vpop.permute.xlu0 %2518
    %2520 = vrot.lane.b32.xlu0 %v2514, 19
    %v2521 = vpop.permute.xlu0 %2520
    %2522 = vrot.lane.b32.xlu0 %v2515, 19
    %v2523 = vpop.permute.xlu0 %2522
    %v2524 = vsel %vm353, %v2517, %v2519
    %v2525 = vsel %vm353, %v2519, %v2521
    %v2526 = vsel %vm353, %v2521, %v2523
    %v2528 = vsel %vm353, %v2507, %v2517
    %v2530 = vsel %vm145, %v2503, 0
    %v2533 = vsel %vm149, %v2528, 0
    %v2535 = vsel %vm149, %v2524, 0
    %v2537 = vsel %vm149, %v2525, 0
    %v2539 = vsel %vm149, %v2526, 0
    %2541 = vmatpush.msra.mxu0 0.0
    %2542 = vmatpush.msra.mxu0 0.0
    %2543 = vmatpush.msra.mxu0 0.0
    %2544 = vmatpush.msra.mxu0 0.0
    %2545 = vmatpush.msra.mxu0 0.0
    %2546 = vmatpush.msra.mxu0 0.0
    %2547 = vmatpush.msra.mxu0 0.0
    %2548 = vmatpush.msra.mxu0 0.0
    %2549 = vmatpush.msra.mxu0 0.0
    %2550 = vmatpush.msra.mxu0 0.0
    %2551 = vmatpush.msra.mxu0 0.0
    %2552 = vmatpush.msra.mxu0 0.0
    %2553 = vmatpush.msra.mxu0 0.0
    %2554 = vmatpush.msra.mxu0 0.0
    %2555 = vmatpush.msra.mxu0 0.0
    %2556 = vmatpush.msra.mxu0 %v2533
    %2557 = vmatmul.f32.gmra.mxu0 %v2530
    %v2558 = vpop.f32.mrf.mxu0
    %v2559 = vadd.f32 0.0, %v2558
    %2560 = vdwg.mxu0
    %2561 = vmatpush.msra.mxu0 0.0
    %2562 = vmatpush.msra.mxu0 0.0
    %2563 = vmatpush.msra.mxu0 0.0
    %2564 = vmatpush.msra.mxu0 0.0
    %2565 = vmatpush.msra.mxu0 0.0
    %2566 = vmatpush.msra.mxu0 0.0
    %2567 = vmatpush.msra.mxu0 0.0
    %2568 = vmatpush.msra.mxu0 0.0
    %2569 = vmatpush.msra.mxu0 0.0
    %2570 = vmatpush.msra.mxu0 0.0
    %2571 = vmatpush.msra.mxu0 0.0
    %2572 = vmatpush.msra.mxu0 0.0
    %2573 = vmatpush.msra.mxu0 0.0
    %2574 = vmatpush.msra.mxu0 0.0
    %2575 = vmatpush.msra.mxu0 0.0
    %2576 = vmatpush.msra.mxu0 %v2535
    %2577 = vmatmul.f32.gmra.mxu0 %v2530
    %v2578 = vpop.f32.mrf.mxu0
    %v2579 = vadd.f32 0.0, %v2578
    %2580 = vdwg.mxu0
    %2581 = vmatpush.msra.mxu0 0.0
    %2582 = vmatpush.msra.mxu0 0.0
    %2583 = vmatpush.msra.mxu0 0.0
    %2584 = vmatpush.msra.mxu0 0.0
    %2585 = vmatpush.msra.mxu0 0.0
    %2586 = vmatpush.msra.mxu0 0.0
    %2587 = vmatpush.msra.mxu0 0.0
    %2588 = vmatpush.msra.mxu0 0.0
    %2589 = vmatpush.msra.mxu0 0.0
    %2590 = vmatpush.msra.mxu0 0.0
    %2591 = vmatpush.msra.mxu0 0.0
    %2592 = vmatpush.msra.mxu0 0.0
    %2593 = vmatpush.msra.mxu0 0.0
    %2594 = vmatpush.msra.mxu0 0.0
    %2595 = vmatpush.msra.mxu0 0.0
    %2596 = vmatpush.msra.mxu0 %v2537
    %2597 = vmatmul.f32.gmra.mxu0 %v2530
    %v2598 = vpop.f32.mrf.mxu0
    %v2599 = vadd.f32 0.0, %v2598
    %2600 = vdwg.mxu0
    %2601 = vmatpush.msra.mxu0 0.0
    %2602 = vmatpush.msra.mxu0 0.0
    %2603 = vmatpush.msra.mxu0 0.0
    %2604 = vmatpush.msra.mxu0 0.0
    %2605 = vmatpush.msra.mxu0 0.0
    %2606 = vmatpush.msra.mxu0 0.0
    %2607 = vmatpush.msra.mxu0 0.0
    %2608 = vmatpush.msra.mxu0 0.0
    %2609 = vmatpush.msra.mxu0 0.0
    %2610 = vmatpush.msra.mxu0 0.0
    %2611 = vmatpush.msra.mxu0 0.0
    %2612 = vmatpush.msra.mxu0 0.0
    %2613 = vmatpush.msra.mxu0 0.0
    %2614 = vmatpush.msra.mxu0 0.0
    %2615 = vmatpush.msra.mxu0 0.0
    %2616 = vmatpush.msra.mxu0 %v2539
    %2617 = vmatmul.f32.gmra.mxu0 %v2530
    %v2618 = vpop.f32.mrf.mxu0
    %v2619 = vadd.f32 0.0, %v2618
    %2620 = vdwg.mxu0
    %v2621 = vadd.f32 %v2441, %v2559
    %v2622 = vadd.f32 %v2461, %v2579
    %v2623 = vadd.f32 %v2481, %v2599
    %v2624 = vadd.f32 %v2501, %v2619
    %v2625 = vld [vmem:[%s455] sm:$0xff]
    %2626 = vst [vmem:[#allocation1] ss:$2 sm:$0xff] %v2264
    %v2627 = vld.sshfl [vmem:[#allocation1 + $0x8] sm:$0xff pattern:$0x75316420]
    %2628 = vrot.lane.b32.xlu0 %v2627, 1
    %v2629 = vpop.permute.xlu0 %2628
    %2631 = vst [vmem:[#allocation1] ss:$2 sm:$0xff] %v2263
    %s2632 = scalar_lea.vmem [#allocation1], 16
    %2633 = vst [vmem:[%s2632] ss:$2 sm:$0xff] %v2264
    %v2634 = vld.sshfl [vmem:[#allocation1] sm:$0xff pattern:$0x75316420]
    %v2635 = vld.sshfl [vmem:[#allocation1 + $0x8] sm:$0xff pattern:$0x75316420]
    %v2636 = vld.sshfl [vmem:[#allocation1 + $0x10] sm:$0xff pattern:$0x75316420]
    %v2637 = vld.sshfl [vmem:[#allocation1 + $0x18] sm:$0xff pattern:$0x75316420]
    %2638 = vrot.lane.b32.xlu0 %v2634, 1
    %v2639 = vpop.permute.xlu0 %2638
    %2640 = vrot.lane.b32.xlu0 %v2635, 1
    %v2641 = vpop.permute.xlu0 %2640
    %2642 = vrot.lane.b32.xlu0 %v2636, 1
    %v2643 = vpop.permute.xlu0 %2642
    %2644 = vrot.lane.b32.xlu0 %v2637, 1
    %v2645 = vpop.permute.xlu0 %2644
    %v2646 = vsel %vm477, %v2639, %v2641
    %v2647 = vsel %vm477, %v2641, %v2643
    %v2648 = vsel %vm477, %v2643, %v2645
    %v2650 = vsel %vm477, %v2629, %v2639
    %v2652 = vsel %vm145, %v2625, 0
    %v2655 = vsel %vm149, %v2650, 0
    %v2657 = vsel %vm149, %v2646, 0
    %v2659 = vsel %vm149, %v2647, 0
    %v2661 = vsel %vm149, %v2648, 0
    %2663 = vmatpush.msra.mxu0 0.0
    %2664 = vmatpush.msra.mxu0 0.0
    %2665 = vmatpush.msra.mxu0 0.0
    %2666 = vmatpush.msra.mxu0 0.0
    %2667 = vmatpush.msra.mxu0 0.0
    %2668 = vmatpush.msra.mxu0 0.0
    %2669 = vmatpush.msra.mxu0 0.0
    %2670 = vmatpush.msra.mxu0 0.0
    %2671 = vmatpush.msra.mxu0 0.0
    %2672 = vmatpush.msra.mxu0 0.0
    %2673 = vmatpush.msra.mxu0 0.0
    %2674 = vmatpush.msra.mxu0 0.0
    %2675 = vmatpush.msra.mxu0 0.0
    %2676 = vmatpush.msra.mxu0 0.0
    %2677 = vmatpush.msra.mxu0 0.0
    %2678 = vmatpush.msra.mxu0 %v2655
    %2679 = vmatmul.f32.gmra.mxu0 %v2652
    %v2680 = vpop.f32.mrf.mxu0
    %v2681 = vadd.f32 0.0, %v2680
    %2682 = vdwg.mxu0
    %2683 = vmatpush.msra.mxu0 0.0
    %2684 = vmatpush.msra.mxu0 0.0
    %2685 = vmatpush.msra.mxu0 0.0
    %2686 = vmatpush.msra.mxu0 0.0
    %2687 = vmatpush.msra.mxu0 0.0
    %2688 = vmatpush.msra.mxu0 0.0
    %2689 = vmatpush.msra.mxu0 0.0
    %2690 = vmatpush.msra.mxu0 0.0
    %2691 = vmatpush.msra.mxu0 0.0
    %2692 = vmatpush.msra.mxu0 0.0
    %2693 = vmatpush.msra.mxu0 0.0
    %2694 = vmatpush.msra.mxu0 0.0
    %2695 = vmatpush.msra.mxu0 0.0
    %2696 = vmatpush.msra.mxu0 0.0
    %2697 = vmatpush.msra.mxu0 0.0
    %2698 = vmatpush.msra.mxu0 %v2657
    %2699 = vmatmul.f32.gmra.mxu0 %v2652
    %v2700 = vpop.f32.mrf.mxu0
    %v2701 = vadd.f32 0.0, %v2700
    %2702 = vdwg.mxu0
    %2703 = vmatpush.msra.mxu0 0.0
    %2704 = vmatpush.msra.mxu0 0.0
    %2705 = vmatpush.msra.mxu0 0.0
    %2706 = vmatpush.msra.mxu0 0.0
    %2707 = vmatpush.msra.mxu0 0.0
    %2708 = vmatpush.msra.mxu0 0.0
    %2709 = vmatpush.msra.mxu0 0.0
    %2710 = vmatpush.msra.mxu0 0.0
    %2711 = vmatpush.msra.mxu0 0.0
    %2712 = vmatpush.msra.mxu0 0.0
    %2713 = vmatpush.msra.mxu0 0.0
    %2714 = vmatpush.msra.mxu0 0.0
    %2715 = vmatpush.msra.mxu0 0.0
    %2716 = vmatpush.msra.mxu0 0.0
    %2717 = vmatpush.msra.mxu0 0.0
    %2718 = vmatpush.msra.mxu0 %v2659
    %2719 = vmatmul.f32.gmra.mxu0 %v2652
    %v2720 = vpop.f32.mrf.mxu0
    %v2721 = vadd.f32 0.0, %v2720
    %2722 = vdwg.mxu0
    %2723 = vmatpush.msra.mxu0 0.0
    %2724 = vmatpush.msra.mxu0 0.0
    %2725 = vmatpush.msra.mxu0 0.0
    %2726 = vmatpush.msra.mxu0 0.0
    %2727 = vmatpush.msra.mxu0 0.0
    %2728 = vmatpush.msra.mxu0 0.0
    %2729 = vmatpush.msra.mxu0 0.0
    %2730 = vmatpush.msra.mxu0 0.0
    %2731 = vmatpush.msra.mxu0 0.0
    %2732 = vmatpush.msra.mxu0 0.0
    %2733 = vmatpush.msra.mxu0 0.0
    %2734 = vmatpush.msra.mxu0 0.0
    %2735 = vmatpush.msra.mxu0 0.0
    %2736 = vmatpush.msra.mxu0 0.0
    %2737 = vmatpush.msra.mxu0 0.0
    %2738 = vmatpush.msra.mxu0 %v2661
    %2739 = vmatmul.f32.gmra.mxu0 %v2652
    %v2740 = vpop.f32.mrf.mxu0
    %v2741 = vadd.f32 0.0, %v2740
    %2742 = vdwg.mxu0
    %v2743 = vadd.f32 %v2621, %v2681
    %v2744 = vadd.f32 %v2622, %v2701
    %v2745 = vadd.f32 %v2623, %v2721
    %v2746 = vadd.f32 %v2624, %v2741
    %v2747 = vld [vmem:[%s579] sm:$0xff]
    %2748 = vst [vmem:[#allocation1] ss:$2 sm:$0xff] %v2263
    %s2749 = scalar_lea.vmem [#allocation1], 16
    %2750 = vst [vmem:[%s2749] ss:$2 sm:$0xff] %v2264
    %v2751 = vld.sshfl [vmem:[#allocation1] sm:$0xff pattern:$0x75316420]
    %v2752 = vld.sshfl [vmem:[#allocation1 + $0x8] sm:$0xff pattern:$0x75316420]
    %v2753 = vld.sshfl [vmem:[#allocation1 + $0x10] sm:$0xff pattern:$0x75316420]
    %v2754 = vld.sshfl [vmem:[#allocation1 + $0x18] sm:$0xff pattern:$0x75316420]
    %v2756 = vsel %vm145, %v2747, 0
    %v2758 = vsel %vm149, %v2751, 0
    %v2760 = vsel %vm149, %v2752, 0
    %v2762 = vsel %vm149, %v2753, 0
    %v2764 = vsel %vm149, %v2754, 0
    %2766 = vmatpush.msra.mxu0 0.0
    %2767 = vmatpush.msra.mxu0 0.0
    %2768 = vmatpush.msra.mxu0 0.0
    %2769 = vmatpush.msra.mxu0 0.0
    %2770 = vmatpush.msra.mxu0 0.0
    %2771 = vmatpush.msra.mxu0 0.0
    %2772 = vmatpush.msra.mxu0 0.0
    %2773 = vmatpush.msra.mxu0 0.0
    %2774 = vmatpush.msra.mxu0 0.0
    %2775 = vmatpush.msra.mxu0 0.0
    %2776 = vmatpush.msra.mxu0 0.0
    %2777 = vmatpush.msra.mxu0 0.0
    %2778 = vmatpush.msra.mxu0 0.0
    %2779 = vmatpush.msra.mxu0 0.0
    %2780 = vmatpush.msra.mxu0 0.0
    %2781 = vmatpush.msra.mxu0 %v2758
    %2782 = vmatmul.f32.gmra.mxu0 %v2756
    %v2783 = vpop.f32.mrf.mxu0
    %v2784 = vadd.f32 0.0, %v2783
    %2785 = vdwg.mxu0
    %2786 = vmatpush.msra.mxu0 0.0
    %2787 = vmatpush.msra.mxu0 0.0
    %2788 = vmatpush.msra.mxu0 0.0
    %2789 = vmatpush.msra.mxu0 0.0
    %2790 = vmatpush.msra.mxu0 0.0
    %2791 = vmatpush.msra.mxu0 0.0
    %2792 = vmatpush.msra.mxu0 0.0
    %2793 = vmatpush.msra.mxu0 0.0
    %2794 = vmatpush.msra.mxu0 0.0
    %2795 = vmatpush.msra.mxu0 0.0
    %2796 = vmatpush.msra.mxu0 0.0
    %2797 = vmatpush.msra.mxu0 0.0
    %2798 = vmatpush.msra.mxu0 0.0
    %2799 = vmatpush.msra.mxu0 0.0
    %2800 = vmatpush.msra.mxu0 0.0
    %2801 = vmatpush.msra.mxu0 %v2760
    %2802 = vmatmul.f32.gmra.mxu0 %v2756
    %v2803 = vpop.f32.mrf.mxu0
    %v2804 = vadd.f32 0.0, %v2803
    %2805 = vdwg.mxu0
    %2806 = vmatpush.msra.mxu0 0.0
    %2807 = vmatpush.msra.mxu0 0.0
    %2808 = vmatpush.msra.mxu0 0.0
    %2809 = vmatpush.msra.mxu0 0.0
    %2810 = vmatpush.msra.mxu0 0.0
    %2811 = vmatpush.msra.mxu0 0.0
    %2812 = vmatpush.msra.mxu0 0.0
    %2813 = vmatpush.msra.mxu0 0.0
    %2814 = vmatpush.msra.mxu0 0.0
    %2815 = vmatpush.msra.mxu0 0.0
    %2816 = vmatpush.msra.mxu0 0.0
    %2817 = vmatpush.msra.mxu0 0.0
    %2818 = vmatpush.msra.mxu0 0.0
    %2819 = vmatpush.msra.mxu0 0.0
    %2820 = vmatpush.msra.mxu0 0.0
    %2821 = vmatpush.msra.mxu0 %v2762
    %2822 = vmatmul.f32.gmra.mxu0 %v2756
    %v2823 = vpop.f32.mrf.mxu0
    %v2824 = vadd.f32 0.0, %v2823
    %2825 = vdwg.mxu0
    %2826 = vmatpush.msra.mxu0 0.0
    %2827 = vmatpush.msra.mxu0 0.0
    %2828 = vmatpush.msra.mxu0 0.0
    %2829 = vmatpush.msra.mxu0 0.0
    %2830 = vmatpush.msra.mxu0 0.0
    %2831 = vmatpush.msra.mxu0 0.0
    %2832 = vmatpush.msra.mxu0 0.0
    %2833 = vmatpush.msra.mxu0 0.0
    %2834 = vmatpush.msra.mxu0 0.0
    %2835 = vmatpush.msra.mxu0 0.0
    %2836 = vmatpush.msra.mxu0 0.0
    %2837 = vmatpush.msra.mxu0 0.0
    %2838 = vmatpush.msra.mxu0 0.0
    %2839 = vmatpush.msra.mxu0 0.0
    %2840 = vmatpush.msra.mxu0 0.0
    %2841 = vmatpush.msra.mxu0 %v2764
    %2842 = vmatmul.f32.gmra.mxu0 %v2756
    %v2843 = vpop.f32.mrf.mxu0
    %v2844 = vadd.f32 0.0, %v2843
    %2845 = vdwg.mxu0
    %v2846 = vadd.f32 %v2743, %v2784
    %v2847 = vadd.f32 %v2744, %v2804
    %v2848 = vadd.f32 %v2745, %v2824
    %v2849 = vadd.f32 %v2746, %v2844
    %v2850 = vld [vmem:[%s683] sm:$0xff]
    %2851 = vst [vmem:[#allocation1] ss:$2 sm:$0xff] %v2263
    %s2852 = scalar_lea.vmem [#allocation1], 16
    %2853 = vst [vmem:[%s2852] ss:$2 sm:$0xff] %v2264
    %v2854 = vld.sshfl [vmem:[#allocation1] sm:$0xff pattern:$0x75316420]
    %v2855 = vld.sshfl [vmem:[#allocation1 + $0x8] sm:$0xff pattern:$0x75316420]
    %v2856 = vld.sshfl [vmem:[#allocation1 + $0x10] sm:$0xff pattern:$0x75316420]
    %v2857 = vld.sshfl [vmem:[#allocation1 + $0x18] sm:$0xff pattern:$0x75316420]
    %2858 = vrot.lane.b32.xlu0 %v2854, 127
    %v2859 = vpop.permute.xlu0 %2858
    %2860 = vrot.lane.b32.xlu0 %v2855, 127
    %v2861 = vpop.permute.xlu0 %2860
    %2862 = vrot.lane.b32.xlu0 %v2856, 127
    %v2863 = vpop.permute.xlu0 %2862
    %2864 = vrot.lane.b32.xlu0 %v2857, 127
    %v2865 = vpop.permute.xlu0 %2864
    %v2866 = vsel %vm700, %v2859, %v2861
    %v2867 = vsel %vm700, %v2861, %v2863
    %v2868 = vsel %vm700, %v2863, %v2865
    %2870 = vst [vmem:[#allocation1] ss:$2 sm:$0xff] %v2263
    %v2871 = vld.sshfl [vmem:[#allocation1] sm:$0xff pattern:$0x75316420]
    %2872 = vrot.lane.b32.xlu0 %v2871, 127
    %v2873 = vpop.permute.xlu0 %2872
    %v2875 = vsel %vm700, %v2865, %v2873
    %v2877 = vsel %vm145, %v2850, 0
    %v2879 = vsel %vm149, %v2866, 0
    %v2881 = vsel %vm149, %v2867, 0
    %v2883 = vsel %vm149, %v2868, 0
    %v2886 = vsel %vm149, %v2875, 0
    %2888 = vmatpush.msra.mxu0 0.0
    %2889 = vmatpush.msra.mxu0 0.0
    %2890 = vmatpush.msra.mxu0 0.0
    %2891 = vmatpush.msra.mxu0 0.0
    %2892 = vmatpush.msra.mxu0 0.0
    %2893 = vmatpush.msra.mxu0 0.0
    %2894 = vmatpush.msra.mxu0 0.0
    %2895 = vmatpush.msra.mxu0 0.0
    %2896 = vmatpush.msra.mxu0 0.0
    %2897 = vmatpush.msra.mxu0 0.0
    %2898 = vmatpush.msra.mxu0 0.0
    %2899 = vmatpush.msra.mxu0 0.0
    %2900 = vmatpush.msra.mxu0 0.0
    %2901 = vmatpush.msra.mxu0 0.0
    %2902 = vmatpush.msra.mxu0 0.0
    %2903 = vmatpush.msra.mxu0 %v2879
    %2904 = vmatmul.f32.gmra.mxu0 %v2877
    %v2905 = vpop.f32.mrf.mxu0
    %v2906 = vadd.f32 0.0, %v2905
    %2907 = vdwg.mxu0
    %2908 = vmatpush.msra.mxu0 0.0
    %2909 = vmatpush.msra.mxu0 0.0
    %2910 = vmatpush.msra.mxu0 0.0
    %2911 = vmatpush.msra.mxu0 0.0
    %2912 = vmatpush.msra.mxu0 0.0
    %2913 = vmatpush.msra.mxu0 0.0
    %2914 = vmatpush.msra.mxu0 0.0
    %2915 = vmatpush.msra.mxu0 0.0
    %2916 = vmatpush.msra.mxu0 0.0
    %2917 = vmatpush.msra.mxu0 0.0
    %2918 = vmatpush.msra.mxu0 0.0
    %2919 = vmatpush.msra.mxu0 0.0
    %2920 = vmatpush.msra.mxu0 0.0
    %2921 = vmatpush.msra.mxu0 0.0
    %2922 = vmatpush.msra.mxu0 0.0
    %2923 = vmatpush.msra.mxu0 %v2881
    %2924 = vmatmul.f32.gmra.mxu0 %v2877
    %v2925 = vpop.f32.mrf.mxu0
    %v2926 = vadd.f32 0.0, %v2925
    %2927 = vdwg.mxu0
    %2928 = vmatpush.msra.mxu0 0.0
    %2929 = vmatpush.msra.mxu0 0.0
    %2930 = vmatpush.msra.mxu0 0.0
    %2931 = vmatpush.msra.mxu0 0.0
    %2932 = vmatpush.msra.mxu0 0.0
    %2933 = vmatpush.msra.mxu0 0.0
    %2934 = vmatpush.msra.mxu0 0.0
    %2935 = vmatpush.msra.mxu0 0.0
    %2936 = vmatpush.msra.mxu0 0.0
    %2937 = vmatpush.msra.mxu0 0.0
    %2938 = vmatpush.msra.mxu0 0.0
    %2939 = vmatpush.msra.mxu0 0.0
    %2940 = vmatpush.msra.mxu0 0.0
    %2941 = vmatpush.msra.mxu0 0.0
    %2942 = vmatpush.msra.mxu0 0.0
    %2943 = vmatpush.msra.mxu0 %v2883
    %2944 = vmatmul.f32.gmra.mxu0 %v2877
    %v2945 = vpop.f32.mrf.mxu0
    %v2946 = vadd.f32 0.0, %v2945
    %2947 = vdwg.mxu0
    %2948 = vmatpush.msra.mxu0 0.0
    %2949 = vmatpush.msra.mxu0 0.0
    %2950 = vmatpush.msra.mxu0 0.0
    %2951 = vmatpush.msra.mxu0 0.0
    %2952 = vmatpush.msra.mxu0 0.0
    %2953 = vmatpush.msra.mxu0 0.0
    %2954 = vmatpush.msra.mxu0 0.0
    %2955 = vmatpush.msra.mxu0 0.0
    %2956 = vmatpush.msra.mxu0 0.0
    %2957 = vmatpush.msra.mxu0 0.0
    %2958 = vmatpush.msra.mxu0 0.0
    %2959 = vmatpush.msra.mxu0 0.0
    %2960 = vmatpush.msra.mxu0 0.0
    %2961 = vmatpush.msra.mxu0 0.0
    %2962 = vmatpush.msra.mxu0 0.0
    %2963 = vmatpush.msra.mxu0 %v2886
    %2964 = vmatmul.f32.gmra.mxu0 %v2877
    %v2965 = vpop.f32.mrf.mxu0
    %v2966 = vadd.f32 0.0, %v2965
    %2967 = vdwg.mxu0
    %v2968 = vadd.f32 %v2846, %v2906
    %v2969 = vadd.f32 %v2847, %v2926
    %v2970 = vadd.f32 %v2848, %v2946
    %v2971 = vadd.f32 %v2849, %v2966
    %v2972 = vld [vmem:[%s807] sm:$0xff]
    %2973 = vst [vmem:[#allocation1] ss:$2 sm:$0xff] %v2263
    %s2974 = scalar_lea.vmem [#allocation1], 16
    %2975 = vst [vmem:[%s2974] ss:$2 sm:$0xff] %v2264
    %v2976 = vld.sshfl [vmem:[#allocation1] sm:$0xff pattern:$0x75316420]
    %v2977 = vld.sshfl [vmem:[#allocation1 + $0x8] sm:$0xff pattern:$0x75316420]
    %v2978 = vld.sshfl [vmem:[#allocation1 + $0x10] sm:$0xff pattern:$0x75316420]
    %v2979 = vld.sshfl [vmem:[#allocation1 + $0x18] sm:$0xff pattern:$0x75316420]
    %2980 = vrot.lane.b32.xlu0 %v2976, 109
    %v2981 = vpop.permute.xlu0 %2980
    %2982 = vrot.lane.b32.xlu0 %v2977, 109
    %v2983 = vpop.permute.xlu0 %2982
    %2984 = vrot.lane.b32.xlu0 %v2978, 109
    %v2985 = vpop.permute.xlu0 %2984
    %2986 = vrot.lane.b32.xlu0 %v2979, 109
    %v2987 = vpop.permute.xlu0 %2986
    %v2988 = vsel %vm824, %v2981, %v2983
    %v2989 = vsel %vm824, %v2983, %v2985
    %v2990 = vsel %vm824, %v2985, %v2987
    %2992 = vst [vmem:[#allocation1] ss:$2 sm:$0xff] %v2263
    %v2993 = vld.sshfl [vmem:[#allocation1] sm:$0xff pattern:$0x75316420]
    %2994 = vrot.lane.b32.xlu0 %v2993, 109
    %v2995 = vpop.permute.xlu0 %2994
    %v2997 = vsel %vm824, %v2987, %v2995
    %v2999 = vsel %vm145, %v2972, 0
    %v3001 = vsel %vm149, %v2988, 0
    %v3003 = vsel %vm149, %v2989, 0
    %v3005 = vsel %vm149, %v2990, 0
    %v3008 = vsel %vm149, %v2997, 0
    %3010 = vmatpush.msra.mxu0 0.0
    %3011 = vmatpush.msra.mxu0 0.0
    %3012 = vmatpush.msra.mxu0 0.0
    %3013 = vmatpush.msra.mxu0 0.0
    %3014 = vmatpush.msra.mxu0 0.0
    %3015 = vmatpush.msra.mxu0 0.0
    %3016 = vmatpush.msra.mxu0 0.0
    %3017 = vmatpush.msra.mxu0 0.0
    %3018 = vmatpush.msra.mxu0 0.0
    %3019 = vmatpush.msra.mxu0 0.0
    %3020 = vmatpush.msra.mxu0 0.0
    %3021 = vmatpush.msra.mxu0 0.0
    %3022 = vmatpush.msra.mxu0 0.0
    %3023 = vmatpush.msra.mxu0 0.0
    %3024 = vmatpush.msra.mxu0 0.0
    %3025 = vmatpush.msra.mxu0 %v3001
    %3026 = vmatmul.f32.gmra.mxu0 %v2999
    %v3027 = vpop.f32.mrf.mxu0
    %v3028 = vadd.f32 0.0, %v3027
    %3029 = vdwg.mxu0
    %3030 = vmatpush.msra.mxu0 0.0
    %3031 = vmatpush.msra.mxu0 0.0
    %3032 = vmatpush.msra.mxu0 0.0
    %3033 = vmatpush.msra.mxu0 0.0
    %3034 = vmatpush.msra.mxu0 0.0
    %3035 = vmatpush.msra.mxu0 0.0
    %3036 = vmatpush.msra.mxu0 0.0
    %3037 = vmatpush.msra.mxu0 0.0
    %3038 = vmatpush.msra.mxu0 0.0
    %3039 = vmatpush.msra.mxu0 0.0
    %3040 = vmatpush.msra.mxu0 0.0
    %3041 = vmatpush.msra.mxu0 0.0
    %3042 = vmatpush.msra.mxu0 0.0
    %3043 = vmatpush.msra.mxu0 0.0
    %3044 = vmatpush.msra.mxu0 0.0
    %3045 = vmatpush.msra.mxu0 %v3003
    %3046 = vmatmul.f32.gmra.mxu0 %v2999
    %v3047 = vpop.f32.mrf.mxu0
    %v3048 = vadd.f32 0.0, %v3047
    %3049 = vdwg.mxu0
    %3050 = vmatpush.msra.mxu0 0.0
    %3051 = vmatpush.msra.mxu0 0.0
    %3052 = vmatpush.msra.mxu0 0.0
    %3053 = vmatpush.msra.mxu0 0.0
    %3054 = vmatpush.msra.mxu0 0.0
    %3055 = vmatpush.msra.mxu0 0.0
    %3056 = vmatpush.msra.mxu0 0.0
    %3057 = vmatpush.msra.mxu0 0.0
    %3058 = vmatpush.msra.mxu0 0.0
    %3059 = vmatpush.msra.mxu0 0.0
    %3060 = vmatpush.msra.mxu0 0.0
    %3061 = vmatpush.msra.mxu0 0.0
    %3062 = vmatpush.msra.mxu0 0.0
    %3063 = vmatpush.msra.mxu0 0.0
    %3064 = vmatpush.msra.mxu0 0.0
    %3065 = vmatpush.msra.mxu0 %v3005
    %3066 = vmatmul.f32.gmra.mxu0 %v2999
    %v3067 = vpop.f32.mrf.mxu0
    %v3068 = vadd.f32 0.0, %v3067
    %3069 = vdwg.mxu0
    %3070 = vmatpush.msra.mxu0 0.0
    %3071 = vmatpush.msra.mxu0 0.0
    %3072 = vmatpush.msra.mxu0 0.0
    %3073 = vmatpush.msra.mxu0 0.0
    %3074 = vmatpush.msra.mxu0 0.0
    %3075 = vmatpush.msra.mxu0 0.0
    %3076 = vmatpush.msra.mxu0 0.0
    %3077 = vmatpush.msra.mxu0 0.0
    %3078 = vmatpush.msra.mxu0 0.0
    %3079 = vmatpush.msra.mxu0 0.0
    %3080 = vmatpush.msra.mxu0 0.0
    %3081 = vmatpush.msra.mxu0 0.0
    %3082 = vmatpush.msra.mxu0 0.0
    %3083 = vmatpush.msra.mxu0 0.0
    %3084 = vmatpush.msra.mxu0 0.0
    %3085 = vmatpush.msra.mxu0 %v3008
    %3086 = vmatmul.f32.gmra.mxu0 %v2999
    %v3087 = vpop.f32.mrf.mxu0
    %v3088 = vadd.f32 0.0, %v3087
    %3089 = vdwg.mxu0
    %v3090 = vadd.f32 %v2968, %v3028
    %v3091 = vadd.f32 %v2969, %v3048
    %v3092 = vadd.f32 %v2970, %v3068
    %v3093 = vadd.f32 %v2971, %v3088
    %v3094 = vld [vmem:[%s931] sm:$0xff]
    %3095 = vst [vmem:[#allocation1] ss:$2 sm:$0xff] %v2263
    %s3096 = scalar_lea.vmem [#allocation1], 16
    %3097 = vst [vmem:[%s3096] ss:$2 sm:$0xff] %v2264
    %v3098 = vld.sshfl [vmem:[#allocation1] sm:$0xff pattern:$0x75316420]
    %v3099 = vld.sshfl [vmem:[#allocation1 + $0x8] sm:$0xff pattern:$0x75316420]
    %v3100 = vld.sshfl [vmem:[#allocation1 + $0x10] sm:$0xff pattern:$0x75316420]
    %v3101 = vld.sshfl [vmem:[#allocation1 + $0x18] sm:$0xff pattern:$0x75316420]
    %3102 = vrot.lane.b32.xlu0 %v3098, 108
    %v3103 = vpop.permute.xlu0 %3102
    %3104 = vrot.lane.b32.xlu0 %v3099, 108
    %v3105 = vpop.permute.xlu0 %3104
    %3106 = vrot.lane.b32.xlu0 %v3100, 108
    %v3107 = vpop.permute.xlu0 %3106
    %3108 = vrot.lane.b32.xlu0 %v3101, 108
    %v3109 = vpop.permute.xlu0 %3108
    %v3110 = vsel %vm948, %v3103, %v3105
    %v3111 = vsel %vm948, %v3105, %v3107
    %v3112 = vsel %vm948, %v3107, %v3109
    %3114 = vst [vmem:[#allocation1] ss:$2 sm:$0xff] %v2263
    %v3115 = vld.sshfl [vmem:[#allocation1] sm:$0xff pattern:$0x75316420]
    %3116 = vrot.lane.b32.xlu0 %v3115, 108
    %v3117 = vpop.permute.xlu0 %3116
    %v3119 = vsel %vm948, %v3109, %v3117
    %v3121 = vsel %vm145, %v3094, 0
    %v3123 = vsel %vm149, %v3110, 0
    %v3125 = vsel %vm149, %v3111, 0
    %v3127 = vsel %vm149, %v3112, 0
    %v3130 = vsel %vm149, %v3119, 0
    %3132 = vmatpush.msra.mxu0 0.0
    %3133 = vmatpush.msra.mxu0 0.0
    %3134 = vmatpush.msra.mxu0 0.0
    %3135 = vmatpush.msra.mxu0 0.0
    %3136 = vmatpush.msra.mxu0 0.0
    %3137 = vmatpush.msra.mxu0 0.0
    %3138 = vmatpush.msra.mxu0 0.0
    %3139 = vmatpush.msra.mxu0 0.0
    %3140 = vmatpush.msra.mxu0 0.0
    %3141 = vmatpush.msra.mxu0 0.0
    %3142 = vmatpush.msra.mxu0 0.0
    %3143 = vmatpush.msra.mxu0 0.0
    %3144 = vmatpush.msra.mxu0 0.0
    %3145 = vmatpush.msra.mxu0 0.0
    %3146 = vmatpush.msra.mxu0 0.0
    %3147 = vmatpush.msra.mxu0 %v3123
    %3148 = vmatmul.f32.gmra.mxu0 %v3121
    %v3149 = vpop.f32.mrf.mxu0
    %v3150 = vadd.f32 0.0, %v3149
    %3151 = vdwg.mxu0
    %3152 = vmatpush.msra.mxu0 0.0
    %3153 = vmatpush.msra.mxu0 0.0
    %3154 = vmatpush.msra.mxu0 0.0
    %3155 = vmatpush.msra.mxu0 0.0
    %3156 = vmatpush.msra.mxu0 0.0
    %3157 = vmatpush.msra.mxu0 0.0
    %3158 = vmatpush.msra.mxu0 0.0
    %3159 = vmatpush.msra.mxu0 0.0
    %3160 = vmatpush.msra.mxu0 0.0
    %3161 = vmatpush.msra.mxu0 0.0
    %3162 = vmatpush.msra.mxu0 0.0
    %3163 = vmatpush.msra.mxu0 0.0
    %3164 = vmatpush.msra.mxu0 0.0
    %3165 = vmatpush.msra.mxu0 0.0
    %3166 = vmatpush.msra.mxu0 0.0
    %3167 = vmatpush.msra.mxu0 %v3125
    %3168 = vmatmul.f32.gmra.mxu0 %v3121
    %v3169 = vpop.f32.mrf.mxu0
    %v3170 = vadd.f32 0.0, %v3169
    %3171 = vdwg.mxu0
    %3172 = vmatpush.msra.mxu0 0.0
    %3173 = vmatpush.msra.mxu0 0.0
    %3174 = vmatpush.msra.mxu0 0.0
    %3175 = vmatpush.msra.mxu0 0.0
    %3176 = vmatpush.msra.mxu0 0.0
    %3177 = vmatpush.msra.mxu0 0.0
    %3178 = vmatpush.msra.mxu0 0.0
    %3179 = vmatpush.msra.mxu0 0.0
    %3180 = vmatpush.msra.mxu0 0.0
    %3181 = vmatpush.msra.mxu0 0.0
    %3182 = vmatpush.msra.mxu0 0.0
    %3183 = vmatpush.msra.mxu0 0.0
    %3184 = vmatpush.msra.mxu0 0.0
    %3185 = vmatpush.msra.mxu0 0.0
    %3186 = vmatpush.msra.mxu0 0.0
    %3187 = vmatpush.msra.mxu0 %v3127
    %3188 = vmatmul.f32.gmra.mxu0 %v3121
    %v3189 = vpop.f32.mrf.mxu0
    %v3190 = vadd.f32 0.0, %v3189
    %3191 = vdwg.mxu0
    %3192 = vmatpush.msra.mxu0 0.0
    %3193 = vmatpush.msra.mxu0 0.0
    %3194 = vmatpush.msra.mxu0 0.0
    %3195 = vmatpush.msra.mxu0 0.0
    %3196 = vmatpush.msra.mxu0 0.0
    %3197 = vmatpush.msra.mxu0 0.0
    %3198 = vmatpush.msra.mxu0 0.0
    %3199 = vmatpush.msra.mxu0 0.0
    %3200 = vmatpush.msra.mxu0 0.0
    %3201 = vmatpush.msra.mxu0 0.0
    %3202 = vmatpush.msra.mxu0 0.0
    %3203 = vmatpush.msra.mxu0 0.0
    %3204 = vmatpush.msra.mxu0 0.0
    %3205 = vmatpush.msra.mxu0 0.0
    %3206 = vmatpush.msra.mxu0 0.0
    %3207 = vmatpush.msra.mxu0 %v3130
    %3208 = vmatmul.f32.gmra.mxu0 %v3121
    %v3209 = vpop.f32.mrf.mxu0
    %v3210 = vadd.f32 0.0, %v3209
    %3211 = vdwg.mxu0
    %v3212 = vadd.f32 %v3090, %v3150
    %v3213 = vadd.f32 %v3091, %v3170
    %v3214 = vadd.f32 %v3092, %v3190
    %v3215 = vadd.f32 %v3093, %v3210
    %v3216 = vld [vmem:[%s1055] sm:$0xff]
    %3217 = vst [vmem:[#allocation1] ss:$2 sm:$0xff] %v2263
    %s3218 = scalar_lea.vmem [#allocation1], 16
    %3219 = vst [vmem:[%s3218] ss:$2 sm:$0xff] %v2264
    %v3220 = vld.sshfl [vmem:[#allocation1] sm:$0xff pattern:$0x75316420]
    %v3221 = vld.sshfl [vmem:[#allocation1 + $0x8] sm:$0xff pattern:$0x75316420]
    %v3222 = vld.sshfl [vmem:[#allocation1 + $0x10] sm:$0xff pattern:$0x75316420]
    %v3223 = vld.sshfl [vmem:[#allocation1 + $0x18] sm:$0xff pattern:$0x75316420]
    %3224 = vrot.lane.b32.xlu0 %v3220, 107
    %v3225 = vpop.permute.xlu0 %3224
    %3226 = vrot.lane.b32.xlu0 %v3221, 107
    %v3227 = vpop.permute.xlu0 %3226
    %3228 = vrot.lane.b32.xlu0 %v3222, 107
    %v3229 = vpop.permute.xlu0 %3228
    %3230 = vrot.lane.b32.xlu0 %v3223, 107
    %v3231 = vpop.permute.xlu0 %3230
    %v3232 = vsel %vm1072, %v3225, %v3227
    %v3233 = vsel %vm1072, %v3227, %v3229
    %v3234 = vsel %vm1072, %v3229, %v3231
    %3236 = vst [vmem:[#allocation1] ss:$2 sm:$0xff] %v2263
    %v3237 = vld.sshfl [vmem:[#allocation1] sm:$0xff pattern:$0x75316420]
    %3238 = vrot.lane.b32.xlu0 %v3237, 107
    %v3239 = vpop.permute.xlu0 %3238
    %v3241 = vsel %vm1072, %v3231, %v3239
    %v3243 = vsel %vm145, %v3216, 0
    %v3245 = vsel %vm149, %v3232, 0
    %v3247 = vsel %vm149, %v3233, 0
    %v3249 = vsel %vm149, %v3234, 0
    %v3252 = vsel %vm149, %v3241, 0
    %3254 = vmatpush.msra.mxu0 0.0
    %3255 = vmatpush.msra.mxu0 0.0
    %3256 = vmatpush.msra.mxu0 0.0
    %3257 = vmatpush.msra.mxu0 0.0
    %3258 = vmatpush.msra.mxu0 0.0
    %3259 = vmatpush.msra.mxu0 0.0
    %3260 = vmatpush.msra.mxu0 0.0
    %3261 = vmatpush.msra.mxu0 0.0
    %3262 = vmatpush.msra.mxu0 0.0
    %3263 = vmatpush.msra.mxu0 0.0
    %3264 = vmatpush.msra.mxu0 0.0
    %3265 = vmatpush.msra.mxu0 0.0
    %3266 = vmatpush.msra.mxu0 0.0
    %3267 = vmatpush.msra.mxu0 0.0
    %3268 = vmatpush.msra.mxu0 0.0
    %3269 = vmatpush.msra.mxu0 %v3245
    %3270 = vmatmul.f32.gmra.mxu0 %v3243
    %v3271 = vpop.f32.mrf.mxu0
    %v3272 = vadd.f32 0.0, %v3271
    %3273 = vdwg.mxu0
    %3274 = vmatpush.msra.mxu0 0.0
    %3275 = vmatpush.msra.mxu0 0.0
    %3276 = vmatpush.msra.mxu0 0.0
    %3277 = vmatpush.msra.mxu0 0.0
    %3278 = vmatpush.msra.mxu0 0.0
    %3279 = vmatpush.msra.mxu0 0.0
    %3280 = vmatpush.msra.mxu0 0.0
    %3281 = vmatpush.msra.mxu0 0.0
    %3282 = vmatpush.msra.mxu0 0.0
    %3283 = vmatpush.msra.mxu0 0.0
    %3284 = vmatpush.msra.mxu0 0.0
    %3285 = vmatpush.msra.mxu0 0.0
    %3286 = vmatpush.msra.mxu0 0.0
    %3287 = vmatpush.msra.mxu0 0.0
    %3288 = vmatpush.msra.mxu0 0.0
    %3289 = vmatpush.msra.mxu0 %v3247
    %3290 = vmatmul.f32.gmra.mxu0 %v3243
    %v3291 = vpop.f32.mrf.mxu0
    %v3292 = vadd.f32 0.0, %v3291
    %3293 = vdwg.mxu0
    %3294 = vmatpush.msra.mxu0 0.0
    %3295 = vmatpush.msra.mxu0 0.0
    %3296 = vmatpush.msra.mxu0 0.0
    %3297 = vmatpush.msra.mxu0 0.0
    %3298 = vmatpush.msra.mxu0 0.0
    %3299 = vmatpush.msra.mxu0 0.0
    %3300 = vmatpush.msra.mxu0 0.0
    %3301 = vmatpush.msra.mxu0 0.0
    %3302 = vmatpush.msra.mxu0 0.0
    %3303 = vmatpush.msra.mxu0 0.0
    %3304 = vmatpush.msra.mxu0 0.0
    %3305 = vmatpush.msra.mxu0 0.0
    %3306 = vmatpush.msra.mxu0 0.0
    %3307 = vmatpush.msra.mxu0 0.0
    %3308 = vmatpush.msra.mxu0 0.0
    %3309 = vmatpush.msra.mxu0 %v3249
    %3310 = vmatmul.f32.gmra.mxu0 %v3243
    %v3311 = vpop.f32.mrf.mxu0
    %v3312 = vadd.f32 0.0, %v3311
    %3313 = vdwg.mxu0
    %3314 = vmatpush.msra.mxu0 0.0
    %3315 = vmatpush.msra.mxu0 0.0
    %3316 = vmatpush.msra.mxu0 0.0
    %3317 = vmatpush.msra.mxu0 0.0
    %3318 = vmatpush.msra.mxu0 0.0
    %3319 = vmatpush.msra.mxu0 0.0
    %3320 = vmatpush.msra.mxu0 0.0
    %3321 = vmatpush.msra.mxu0 0.0
    %3322 = vmatpush.msra.mxu0 0.0
    %3323 = vmatpush.msra.mxu0 0.0
    %3324 = vmatpush.msra.mxu0 0.0
    %3325 = vmatpush.msra.mxu0 0.0
    %3326 = vmatpush.msra.mxu0 0.0
    %3327 = vmatpush.msra.mxu0 0.0
    %3328 = vmatpush.msra.mxu0 0.0
    %3329 = vmatpush.msra.mxu0 %v3252
    %3330 = vmatmul.f32.gmra.mxu0 %v3243
    %v3331 = vpop.f32.mrf.mxu0
    %v3332 = vadd.f32 0.0, %v3331
    %3333 = vdwg.mxu0
    %v3334 = vadd.f32 %v3212, %v3272
    %v3335 = vadd.f32 %v3213, %v3292
    %v3336 = vadd.f32 %v3214, %v3312
    %v3337 = vadd.f32 %v3215, %v3332
    %v3338 = vadd.f32 %v3334, %v1182
    %v3339 = vadd.f32 %v3335, %v1182
    %v3340 = vadd.f32 %v3336, %v1182
    %v3341 = vadd.f32 %v3337, %v1182
    %v3342 = vmax.f32 %v3338, 0.0
    %v3343 = vmax.f32 %v3339, 0.0
    %v3344 = vmax.f32 %v3340, 0.0
    %v3345 = vmax.f32 %v3341, 0.0
    %v3346 = vsel %vm1196, %v3342, 0.0
    %v3347 = vsel %vm1197, %v3343, 0.0
    %v3348 = vsel %vm1198, %v3344, 0.0
    %v3349 = vsel %vm1199, %v3345, 0.0
    %v3350 = vld [vmem:[%s3] sm:$0xff]
    %3352 = vrot.lane.b32.xlu0 %v3349, 21
    %v3353 = vpop.permute.xlu0 %3352
    %3358 = vrot.lane.b32.xlu0 %v3346, 21
    %v3359 = vpop.permute.xlu0 %3358
    %3360 = vrot.lane.b32.xlu0 %v3347, 21
    %v3361 = vpop.permute.xlu0 %3360
    %3362 = vrot.lane.b32.xlu0 %v3348, 21
    %v3363 = vpop.permute.xlu0 %3362
    %v3364 = vsel %vm111, %v3359, %v3361
    %v3365 = vsel %vm111, %v3361, %v3363
    %v3366 = vsel %vm111, %v3363, %v3353
    %v3371 = vsel %vm111, %v3353, %v3359
    %v3372 = vld [vmem:[%s1226] sm:$0xff]
    %3373 = vrot.lane.b32.xlu0 %v3349, 20
    %v3374 = vpop.permute.xlu0 %3373
    %3376 = vrot.lane.b32.xlu0 %v3346, 20
    %v3377 = vpop.permute.xlu0 %3376
    %3378 = vrot.lane.b32.xlu0 %v3347, 20
    %v3379 = vpop.permute.xlu0 %3378
    %3380 = vrot.lane.b32.xlu0 %v3348, 20
    %v3381 = vpop.permute.xlu0 %3380
    %v3382 = vsel %vm139, %v3377, %v3379
    %v3383 = vsel %vm139, %v3379, %v3381
    %v3384 = vsel %vm139, %v3381, %v3374
    %v3389 = vsel %vm139, %v3374, %v3377
    %v3391 = vsel %vm1245, %v3372, 0
    %3393 = vmatpush.msra.mxu0 0.0
    %3394 = vmatpush.msra.mxu0 0.0
    %3395 = vmatpush.msra.mxu0 0.0
    %3396 = vmatpush.msra.mxu0 0.0
    %3397 = vmatpush.msra.mxu0 0.0
    %3398 = vmatpush.msra.mxu0 0.0
    %3399 = vmatpush.msra.mxu0 0.0
    %3400 = vmatpush.msra.mxu0 0.0
    %3401 = vmatpush.msra.mxu0 0.0
    %3402 = vmatpush.msra.mxu0 0.0
    %3403 = vmatpush.msra.mxu0 0.0
    %3404 = vmatpush.msra.mxu0 0.0
    %3405 = vmatpush.msra.mxu0 0.0
    %3406 = vmatpush.msra.mxu0 0.0
    %3407 = vmatpush.msra.mxu0 0.0
    %3408 = vmatpush.msra.mxu0 %v3389
    %3409 = vmatmul.f32.gmra.mxu0 %v3391
    %v3410 = vpop.f32.mrf.mxu0
    %v3411 = vadd.f32 0.0, %v3410
    %3412 = vdwg.mxu0
    %3413 = vmatpush.msra.mxu0 0.0
    %3414 = vmatpush.msra.mxu0 0.0
    %3415 = vmatpush.msra.mxu0 0.0
    %3416 = vmatpush.msra.mxu0 0.0
    %3417 = vmatpush.msra.mxu0 0.0
    %3418 = vmatpush.msra.mxu0 0.0
    %3419 = vmatpush.msra.mxu0 0.0
    %3420 = vmatpush.msra.mxu0 0.0
    %3421 = vmatpush.msra.mxu0 0.0
    %3422 = vmatpush.msra.mxu0 0.0
    %3423 = vmatpush.msra.mxu0 0.0
    %3424 = vmatpush.msra.mxu0 0.0
    %3425 = vmatpush.msra.mxu0 0.0
    %3426 = vmatpush.msra.mxu0 0.0
    %3427 = vmatpush.msra.mxu0 0.0
    %3428 = vmatpush.msra.mxu0 %v3382
    %3429 = vmatmul.f32.gmra.mxu0 %v3391
    %v3430 = vpop.f32.mrf.mxu0
    %v3431 = vadd.f32 0.0, %v3430
    %3432 = vdwg.mxu0
    %3433 = vmatpush.msra.mxu0 0.0
    %3434 = vmatpush.msra.mxu0 0.0
    %3435 = vmatpush.msra.mxu0 0.0
    %3436 = vmatpush.msra.mxu0 0.0
    %3437 = vmatpush.msra.mxu0 0.0
    %3438 = vmatpush.msra.mxu0 0.0
    %3439 = vmatpush.msra.mxu0 0.0
    %3440 = vmatpush.msra.mxu0 0.0
    %3441 = vmatpush.msra.mxu0 0.0
    %3442 = vmatpush.msra.mxu0 0.0
    %3443 = vmatpush.msra.mxu0 0.0
    %3444 = vmatpush.msra.mxu0 0.0
    %3445 = vmatpush.msra.mxu0 0.0
    %3446 = vmatpush.msra.mxu0 0.0
    %3447 = vmatpush.msra.mxu0 0.0
    %3448 = vmatpush.msra.mxu0 %v3383
    %3449 = vmatmul.f32.gmra.mxu0 %v3391
    %v3450 = vpop.f32.mrf.mxu0
    %v3451 = vadd.f32 0.0, %v3450
    %3452 = vdwg.mxu0
    %3453 = vmatpush.msra.mxu0 0.0
    %3454 = vmatpush.msra.mxu0 0.0
    %3455 = vmatpush.msra.mxu0 0.0
    %3456 = vmatpush.msra.mxu0 0.0
    %3457 = vmatpush.msra.mxu0 0.0
    %3458 = vmatpush.msra.mxu0 0.0
    %3459 = vmatpush.msra.mxu0 0.0
    %3460 = vmatpush.msra.mxu0 0.0
    %3461 = vmatpush.msra.mxu0 0.0
    %3462 = vmatpush.msra.mxu0 0.0
    %3463 = vmatpush.msra.mxu0 0.0
    %3464 = vmatpush.msra.mxu0 0.0
    %3465 = vmatpush.msra.mxu0 0.0
    %3466 = vmatpush.msra.mxu0 0.0
    %3467 = vmatpush.msra.mxu0 0.0
    %3468 = vmatpush.msra.mxu0 %v3384
    %3469 = vmatmul.f32.gmra.mxu0 %v3391
    %v3470 = vpop.f32.mrf.mxu0
    %v3471 = vadd.f32 0.0, %v3470
    %3472 = vdwg.mxu0
    %v3474 = vsel %vm1245, %v3350, 0
    %3476 = vmatpush.msra.mxu0 0.0
    %3477 = vmatpush.msra.mxu0 0.0
    %3478 = vmatpush.msra.mxu0 0.0
    %3479 = vmatpush.msra.mxu0 0.0
    %3480 = vmatpush.msra.mxu0 0.0
    %3481 = vmatpush.msra.mxu0 0.0
    %3482 = vmatpush.msra.mxu0 0.0
    %3483 = vmatpush.msra.mxu0 0.0
    %3484 = vmatpush.msra.mxu0 0.0
    %3485 = vmatpush.msra.mxu0 0.0
    %3486 = vmatpush.msra.mxu0 0.0
    %3487 = vmatpush.msra.mxu0 0.0
    %3488 = vmatpush.msra.mxu0 0.0
    %3489 = vmatpush.msra.mxu0 0.0
    %3490 = vmatpush.msra.mxu0 0.0
    %3491 = vmatpush.msra.mxu0 %v3371
    %3492 = vmatmul.f32.gmra.mxu0 %v3474
    %v3493 = vpop.f32.mrf.mxu0
    %v3494 = vadd.f32 %v3411, %v3493
    %3495 = vdwg.mxu0
    %3496 = vmatpush.msra.mxu0 0.0
    %3497 = vmatpush.msra.mxu0 0.0
    %3498 = vmatpush.msra.mxu0 0.0
    %3499 = vmatpush.msra.mxu0 0.0
    %3500 = vmatpush.msra.mxu0 0.0
    %3501 = vmatpush.msra.mxu0 0.0
    %3502 = vmatpush.msra.mxu0 0.0
    %3503 = vmatpush.msra.mxu0 0.0
    %3504 = vmatpush.msra.mxu0 0.0
    %3505 = vmatpush.msra.mxu0 0.0
    %3506 = vmatpush.msra.mxu0 0.0
    %3507 = vmatpush.msra.mxu0 0.0
    %3508 = vmatpush.msra.mxu0 0.0
    %3509 = vmatpush.msra.mxu0 0.0
    %3510 = vmatpush.msra.mxu0 0.0
    %3511 = vmatpush.msra.mxu0 %v3364
    %3512 = vmatmul.f32.gmra.mxu0 %v3474
    %v3513 = vpop.f32.mrf.mxu0
    %v3514 = vadd.f32 %v3431, %v3513
    %3515 = vdwg.mxu0
    %3516 = vmatpush.msra.mxu0 0.0
    %3517 = vmatpush.msra.mxu0 0.0
    %3518 = vmatpush.msra.mxu0 0.0
    %3519 = vmatpush.msra.mxu0 0.0
    %3520 = vmatpush.msra.mxu0 0.0
    %3521 = vmatpush.msra.mxu0 0.0
    %3522 = vmatpush.msra.mxu0 0.0
    %3523 = vmatpush.msra.mxu0 0.0
    %3524 = vmatpush.msra.mxu0 0.0
    %3525 = vmatpush.msra.mxu0 0.0
    %3526 = vmatpush.msra.mxu0 0.0
    %3527 = vmatpush.msra.mxu0 0.0
    %3528 = vmatpush.msra.mxu0 0.0
    %3529 = vmatpush.msra.mxu0 0.0
    %3530 = vmatpush.msra.mxu0 0.0
    %3531 = vmatpush.msra.mxu0 %v3365
    %3532 = vmatmul.f32.gmra.mxu0 %v3474
    %v3533 = vpop.f32.mrf.mxu0
    %v3534 = vadd.f32 %v3451, %v3533
    %3535 = vdwg.mxu0
    %3536 = vmatpush.msra.mxu0 0.0
    %3537 = vmatpush.msra.mxu0 0.0
    %3538 = vmatpush.msra.mxu0 0.0
    %3539 = vmatpush.msra.mxu0 0.0
    %3540 = vmatpush.msra.mxu0 0.0
    %3541 = vmatpush.msra.mxu0 0.0
    %3542 = vmatpush.msra.mxu0 0.0
    %3543 = vmatpush.msra.mxu0 0.0
    %3544 = vmatpush.msra.mxu0 0.0
    %3545 = vmatpush.msra.mxu0 0.0
    %3546 = vmatpush.msra.mxu0 0.0
    %3547 = vmatpush.msra.mxu0 0.0
    %3548 = vmatpush.msra.mxu0 0.0
    %3549 = vmatpush.msra.mxu0 0.0
    %3550 = vmatpush.msra.mxu0 0.0
    %3551 = vmatpush.msra.mxu0 %v3366
    %3552 = vmatmul.f32.gmra.mxu0 %v3474
    %v3553 = vpop.f32.mrf.mxu0
    %v3554 = vadd.f32 %v3471, %v3553
    %3555 = vdwg.mxu0
    %v3556 = vld [vmem:[%s1412] sm:$0xff]
    %3557 = vrot.lane.b32.xlu0 %v3349, 19
    %v3558 = vpop.permute.xlu0 %3557
    %3560 = vrot.lane.b32.xlu0 %v3346, 19
    %v3561 = vpop.permute.xlu0 %3560
    %3562 = vrot.lane.b32.xlu0 %v3347, 19
    %v3563 = vpop.permute.xlu0 %3562
    %3564 = vrot.lane.b32.xlu0 %v3348, 19
    %v3565 = vpop.permute.xlu0 %3564
    %v3566 = vsel %vm353, %v3561, %v3563
    %v3567 = vsel %vm353, %v3563, %v3565
    %v3568 = vsel %vm353, %v3565, %v3558
    %v3573 = vsel %vm353, %v3558, %v3561
    %v3575 = vsel %vm1245, %v3556, 0
    %3577 = vmatpush.msra.mxu0 0.0
    %3578 = vmatpush.msra.mxu0 0.0
    %3579 = vmatpush.msra.mxu0 0.0
    %3580 = vmatpush.msra.mxu0 0.0
    %3581 = vmatpush.msra.mxu0 0.0
    %3582 = vmatpush.msra.mxu0 0.0
    %3583 = vmatpush.msra.mxu0 0.0
    %3584 = vmatpush.msra.mxu0 0.0
    %3585 = vmatpush.msra.mxu0 0.0
    %3586 = vmatpush.msra.mxu0 0.0
    %3587 = vmatpush.msra.mxu0 0.0
    %3588 = vmatpush.msra.mxu0 0.0
    %3589 = vmatpush.msra.mxu0 0.0
    %3590 = vmatpush.msra.mxu0 0.0
    %3591 = vmatpush.msra.mxu0 0.0
    %3592 = vmatpush.msra.mxu0 %v3573
    %3593 = vmatmul.f32.gmra.mxu0 %v3575
    %v3594 = vpop.f32.mrf.mxu0
    %v3595 = vadd.f32 0.0, %v3594
    %3596 = vdwg.mxu0
    %3597 = vmatpush.msra.mxu0 0.0
    %3598 = vmatpush.msra.mxu0 0.0
    %3599 = vmatpush.msra.mxu0 0.0
    %3600 = vmatpush.msra.mxu0 0.0
    %3601 = vmatpush.msra.mxu0 0.0
    %3602 = vmatpush.msra.mxu0 0.0
    %3603 = vmatpush.msra.mxu0 0.0
    %3604 = vmatpush.msra.mxu0 0.0
    %3605 = vmatpush.msra.mxu0 0.0
    %3606 = vmatpush.msra.mxu0 0.0
    %3607 = vmatpush.msra.mxu0 0.0
    %3608 = vmatpush.msra.mxu0 0.0
    %3609 = vmatpush.msra.mxu0 0.0
    %3610 = vmatpush.msra.mxu0 0.0
    %3611 = vmatpush.msra.mxu0 0.0
    %3612 = vmatpush.msra.mxu0 %v3566
    %3613 = vmatmul.f32.gmra.mxu0 %v3575
    %v3614 = vpop.f32.mrf.mxu0
    %v3615 = vadd.f32 0.0, %v3614
    %3616 = vdwg.mxu0
    %3617 = vmatpush.msra.mxu0 0.0
    %3618 = vmatpush.msra.mxu0 0.0
    %3619 = vmatpush.msra.mxu0 0.0
    %3620 = vmatpush.msra.mxu0 0.0
    %3621 = vmatpush.msra.mxu0 0.0
    %3622 = vmatpush.msra.mxu0 0.0
    %3623 = vmatpush.msra.mxu0 0.0
    %3624 = vmatpush.msra.mxu0 0.0
    %3625 = vmatpush.msra.mxu0 0.0
    %3626 = vmatpush.msra.mxu0 0.0
    %3627 = vmatpush.msra.mxu0 0.0
    %3628 = vmatpush.msra.mxu0 0.0
    %3629 = vmatpush.msra.mxu0 0.0
    %3630 = vmatpush.msra.mxu0 0.0
    %3631 = vmatpush.msra.mxu0 0.0
    %3632 = vmatpush.msra.mxu0 %v3567
    %3633 = vmatmul.f32.gmra.mxu0 %v3575
    %v3634 = vpop.f32.mrf.mxu0
    %v3635 = vadd.f32 0.0, %v3634
    %3636 = vdwg.mxu0
    %3637 = vmatpush.msra.mxu0 0.0
    %3638 = vmatpush.msra.mxu0 0.0
    %3639 = vmatpush.msra.mxu0 0.0
    %3640 = vmatpush.msra.mxu0 0.0
    %3641 = vmatpush.msra.mxu0 0.0
    %3642 = vmatpush.msra.mxu0 0.0
    %3643 = vmatpush.msra.mxu0 0.0
    %3644 = vmatpush.msra.mxu0 0.0
    %3645 = vmatpush.msra.mxu0 0.0
    %3646 = vmatpush.msra.mxu0 0.0
    %3647 = vmatpush.msra.mxu0 0.0
    %3648 = vmatpush.msra.mxu0 0.0
    %3649 = vmatpush.msra.mxu0 0.0
    %3650 = vmatpush.msra.mxu0 0.0
    %3651 = vmatpush.msra.mxu0 0.0
    %3652 = vmatpush.msra.mxu0 %v3568
    %3653 = vmatmul.f32.gmra.mxu0 %v3575
    %v3654 = vpop.f32.mrf.mxu0
    %v3655 = vadd.f32 0.0, %v3654
    %3656 = vdwg.mxu0
    %v3657 = vadd.f32 %v3494, %v3595
    %v3658 = vadd.f32 %v3514, %v3615
    %v3659 = vadd.f32 %v3534, %v3635
    %v3660 = vadd.f32 %v3554, %v3655
    %v3661 = vld [vmem:[%s1518] sm:$0xff]
    %3662 = vrot.lane.b32.xlu0 %v3349, 1
    %v3663 = vpop.permute.xlu0 %3662
    %3665 = vrot.lane.b32.xlu0 %v3346, 1
    %v3666 = vpop.permute.xlu0 %3665
    %3667 = vrot.lane.b32.xlu0 %v3347, 1
    %v3668 = vpop.permute.xlu0 %3667
    %3669 = vrot.lane.b32.xlu0 %v3348, 1
    %v3670 = vpop.permute.xlu0 %3669
    %v3671 = vsel %vm477, %v3666, %v3668
    %v3672 = vsel %vm477, %v3668, %v3670
    %v3673 = vsel %vm477, %v3670, %v3663
    %v3678 = vsel %vm477, %v3663, %v3666
    %v3680 = vsel %vm1245, %v3661, 0
    %3682 = vmatpush.msra.mxu0 0.0
    %3683 = vmatpush.msra.mxu0 0.0
    %3684 = vmatpush.msra.mxu0 0.0
    %3685 = vmatpush.msra.mxu0 0.0
    %3686 = vmatpush.msra.mxu0 0.0
    %3687 = vmatpush.msra.mxu0 0.0
    %3688 = vmatpush.msra.mxu0 0.0
    %3689 = vmatpush.msra.mxu0 0.0
    %3690 = vmatpush.msra.mxu0 0.0
    %3691 = vmatpush.msra.mxu0 0.0
    %3692 = vmatpush.msra.mxu0 0.0
    %3693 = vmatpush.msra.mxu0 0.0
    %3694 = vmatpush.msra.mxu0 0.0
    %3695 = vmatpush.msra.mxu0 0.0
    %3696 = vmatpush.msra.mxu0 0.0
    %3697 = vmatpush.msra.mxu0 %v3678
    %3698 = vmatmul.f32.gmra.mxu0 %v3680
    %v3699 = vpop.f32.mrf.mxu0
    %v3700 = vadd.f32 0.0, %v3699
    %3701 = vdwg.mxu0
    %3702 = vmatpush.msra.mxu0 0.0
    %3703 = vmatpush.msra.mxu0 0.0
    %3704 = vmatpush.msra.mxu0 0.0
    %3705 = vmatpush.msra.mxu0 0.0
    %3706 = vmatpush.msra.mxu0 0.0
    %3707 = vmatpush.msra.mxu0 0.0
    %3708 = vmatpush.msra.mxu0 0.0
    %3709 = vmatpush.msra.mxu0 0.0
    %3710 = vmatpush.msra.mxu0 0.0
    %3711 = vmatpush.msra.mxu0 0.0
    %3712 = vmatpush.msra.mxu0 0.0
    %3713 = vmatpush.msra.mxu0 0.0
    %3714 = vmatpush.msra.mxu0 0.0
    %3715 = vmatpush.msra.mxu0 0.0
    %3716 = vmatpush.msra.mxu0 0.0
    %3717 = vmatpush.msra.mxu0 %v3671
    %3718 = vmatmul.f32.gmra.mxu0 %v3680
    %v3719 = vpop.f32.mrf.mxu0
    %v3720 = vadd.f32 0.0, %v3719
    %3721 = vdwg.mxu0
    %3722 = vmatpush.msra.mxu0 0.0
    %3723 = vmatpush.msra.mxu0 0.0
    %3724 = vmatpush.msra.mxu0 0.0
    %3725 = vmatpush.msra.mxu0 0.0
    %3726 = vmatpush.msra.mxu0 0.0
    %3727 = vmatpush.msra.mxu0 0.0
    %3728 = vmatpush.msra.mxu0 0.0
    %3729 = vmatpush.msra.mxu0 0.0
    %3730 = vmatpush.msra.mxu0 0.0
    %3731 = vmatpush.msra.mxu0 0.0
    %3732 = vmatpush.msra.mxu0 0.0
    %3733 = vmatpush.msra.mxu0 0.0
    %3734 = vmatpush.msra.mxu0 0.0
    %3735 = vmatpush.msra.mxu0 0.0
    %3736 = vmatpush.msra.mxu0 0.0
    %3737 = vmatpush.msra.mxu0 %v3672
    %3738 = vmatmul.f32.gmra.mxu0 %v3680
    %v3739 = vpop.f32.mrf.mxu0
    %v3740 = vadd.f32 0.0, %v3739
    %3741 = vdwg.mxu0
    %3742 = vmatpush.msra.mxu0 0.0
    %3743 = vmatpush.msra.mxu0 0.0
    %3744 = vmatpush.msra.mxu0 0.0
    %3745 = vmatpush.msra.mxu0 0.0
    %3746 = vmatpush.msra.mxu0 0.0
    %3747 = vmatpush.msra.mxu0 0.0
    %3748 = vmatpush.msra.mxu0 0.0
    %3749 = vmatpush.msra.mxu0 0.0
    %3750 = vmatpush.msra.mxu0 0.0
    %3751 = vmatpush.msra.mxu0 0.0
    %3752 = vmatpush.msra.mxu0 0.0
    %3753 = vmatpush.msra.mxu0 0.0
    %3754 = vmatpush.msra.mxu0 0.0
    %3755 = vmatpush.msra.mxu0 0.0
    %3756 = vmatpush.msra.mxu0 0.0
    %3757 = vmatpush.msra.mxu0 %v3673
    %3758 = vmatmul.f32.gmra.mxu0 %v3680
    %v3759 = vpop.f32.mrf.mxu0
    %v3760 = vadd.f32 0.0, %v3759
    %3761 = vdwg.mxu0
    %v3762 = vadd.f32 %v3657, %v3700
    %v3763 = vadd.f32 %v3658, %v3720
    %v3764 = vadd.f32 %v3659, %v3740
    %v3765 = vadd.f32 %v3660, %v3760
    %v3766 = vld [vmem:[%s1624] sm:$0xff]
    %v3768 = vsel %vm1245, %v3766, 0
    %3770 = vmatpush.msra.mxu0 0.0
    %3771 = vmatpush.msra.mxu0 0.0
    %3772 = vmatpush.msra.mxu0 0.0
    %3773 = vmatpush.msra.mxu0 0.0
    %3774 = vmatpush.msra.mxu0 0.0
    %3775 = vmatpush.msra.mxu0 0.0
    %3776 = vmatpush.msra.mxu0 0.0
    %3777 = vmatpush.msra.mxu0 0.0
    %3778 = vmatpush.msra.mxu0 0.0
    %3779 = vmatpush.msra.mxu0 0.0
    %3780 = vmatpush.msra.mxu0 0.0
    %3781 = vmatpush.msra.mxu0 0.0
    %3782 = vmatpush.msra.mxu0 0.0
    %3783 = vmatpush.msra.mxu0 0.0
    %3784 = vmatpush.msra.mxu0 0.0
    %3785 = vmatpush.msra.mxu0 %v3346
    %3786 = vmatmul.f32.gmra.mxu0 %v3768
    %v3787 = vpop.f32.mrf.mxu0
    %v3788 = vadd.f32 0.0, %v3787
    %3789 = vdwg.mxu0
    %3790 = vmatpush.msra.mxu0 0.0
    %3791 = vmatpush.msra.mxu0 0.0
    %3792 = vmatpush.msra.mxu0 0.0
    %3793 = vmatpush.msra.mxu0 0.0
    %3794 = vmatpush.msra.mxu0 0.0
    %3795 = vmatpush.msra.mxu0 0.0
    %3796 = vmatpush.msra.mxu0 0.0
    %3797 = vmatpush.msra.mxu0 0.0
    %3798 = vmatpush.msra.mxu0 0.0
    %3799 = vmatpush.msra.mxu0 0.0
    %3800 = vmatpush.msra.mxu0 0.0
    %3801 = vmatpush.msra.mxu0 0.0
    %3802 = vmatpush.msra.mxu0 0.0
    %3803 = vmatpush.msra.mxu0 0.0
    %3804 = vmatpush.msra.mxu0 0.0
    %3805 = vmatpush.msra.mxu0 %v3347
    %3806 = vmatmul.f32.gmra.mxu0 %v3768
    %v3807 = vpop.f32.mrf.mxu0
    %v3808 = vadd.f32 0.0, %v3807
    %3809 = vdwg.mxu0
    %3810 = vmatpush.msra.mxu0 0.0
    %3811 = vmatpush.msra.mxu0 0.0
    %3812 = vmatpush.msra.mxu0 0.0
    %3813 = vmatpush.msra.mxu0 0.0
    %3814 = vmatpush.msra.mxu0 0.0
    %3815 = vmatpush.msra.mxu0 0.0
    %3816 = vmatpush.msra.mxu0 0.0
    %3817 = vmatpush.msra.mxu0 0.0
    %3818 = vmatpush.msra.mxu0 0.0
    %3819 = vmatpush.msra.mxu0 0.0
    %3820 = vmatpush.msra.mxu0 0.0
    %3821 = vmatpush.msra.mxu0 0.0
    %3822 = vmatpush.msra.mxu0 0.0
    %3823 = vmatpush.msra.mxu0 0.0
    %3824 = vmatpush.msra.mxu0 0.0
    %3825 = vmatpush.msra.mxu0 %v3348
    %3826 = vmatmul.f32.gmra.mxu0 %v3768
    %v3827 = vpop.f32.mrf.mxu0
    %v3828 = vadd.f32 0.0, %v3827
    %3829 = vdwg.mxu0
    %3830 = vmatpush.msra.mxu0 0.0
    %3831 = vmatpush.msra.mxu0 0.0
    %3832 = vmatpush.msra.mxu0 0.0
    %3833 = vmatpush.msra.mxu0 0.0
    %3834 = vmatpush.msra.mxu0 0.0
    %3835 = vmatpush.msra.mxu0 0.0
    %3836 = vmatpush.msra.mxu0 0.0
    %3837 = vmatpush.msra.mxu0 0.0
    %3838 = vmatpush.msra.mxu0 0.0
    %3839 = vmatpush.msra.mxu0 0.0
    %3840 = vmatpush.msra.mxu0 0.0
    %3841 = vmatpush.msra.mxu0 0.0
    %3842 = vmatpush.msra.mxu0 0.0
    %3843 = vmatpush.msra.mxu0 0.0
    %3844 = vmatpush.msra.mxu0 0.0
    %3845 = vmatpush.msra.mxu0 %v3349
    %3846 = vmatmul.f32.gmra.mxu0 %v3768
    %v3847 = vpop.f32.mrf.mxu0
    %v3848 = vadd.f32 0.0, %v3847
    %3849 = vdwg.mxu0
    %v3850 = vadd.f32 %v3762, %v3788
    %v3851 = vadd.f32 %v3763, %v3808
    %v3852 = vadd.f32 %v3764, %v3828
    %v3853 = vadd.f32 %v3765, %v3848
    %v3854 = vld [vmem:[%s1713] sm:$0xff]
    %3855 = vrot.lane.b32.xlu0 %v3346, 127
    %v3856 = vpop.permute.xlu0 %3855
    %3857 = vrot.lane.b32.xlu0 %v3347, 127
    %v3858 = vpop.permute.xlu0 %3857
    %3859 = vrot.lane.b32.xlu0 %v3348, 127
    %v3860 = vpop.permute.xlu0 %3859
    %3861 = vrot.lane.b32.xlu0 %v3349, 127
    %v3862 = vpop.permute.xlu0 %3861
    %v3863 = vsel %vm700, %v3856, %v3858
    %v3864 = vsel %vm700, %v3858, %v3860
    %v3865 = vsel %vm700, %v3860, %v3862
    %v3871 = vsel %vm700, %v3862, %v3856
    %v3873 = vsel %vm1245, %v3854, 0
    %3875 = vmatpush.msra.mxu0 0.0
    %3876 = vmatpush.msra.mxu0 0.0
    %3877 = vmatpush.msra.mxu0 0.0
    %3878 = vmatpush.msra.mxu0 0.0
    %3879 = vmatpush.msra.mxu0 0.0
    %3880 = vmatpush.msra.mxu0 0.0
    %3881 = vmatpush.msra.mxu0 0.0
    %3882 = vmatpush.msra.mxu0 0.0
    %3883 = vmatpush.msra.mxu0 0.0
    %3884 = vmatpush.msra.mxu0 0.0
    %3885 = vmatpush.msra.mxu0 0.0
    %3886 = vmatpush.msra.mxu0 0.0
    %3887 = vmatpush.msra.mxu0 0.0
    %3888 = vmatpush.msra.mxu0 0.0
    %3889 = vmatpush.msra.mxu0 0.0
    %3890 = vmatpush.msra.mxu0 %v3863
    %3891 = vmatmul.f32.gmra.mxu0 %v3873
    %v3892 = vpop.f32.mrf.mxu0
    %v3893 = vadd.f32 0.0, %v3892
    %3894 = vdwg.mxu0
    %3895 = vmatpush.msra.mxu0 0.0
    %3896 = vmatpush.msra.mxu0 0.0
    %3897 = vmatpush.msra.mxu0 0.0
    %3898 = vmatpush.msra.mxu0 0.0
    %3899 = vmatpush.msra.mxu0 0.0
    %3900 = vmatpush.msra.mxu0 0.0
    %3901 = vmatpush.msra.mxu0 0.0
    %3902 = vmatpush.msra.mxu0 0.0
    %3903 = vmatpush.msra.mxu0 0.0
    %3904 = vmatpush.msra.mxu0 0.0
    %3905 = vmatpush.msra.mxu0 0.0
    %3906 = vmatpush.msra.mxu0 0.0
    %3907 = vmatpush.msra.mxu0 0.0
    %3908 = vmatpush.msra.mxu0 0.0
    %3909 = vmatpush.msra.mxu0 0.0
    %3910 = vmatpush.msra.mxu0 %v3864
    %3911 = vmatmul.f32.gmra.mxu0 %v3873
    %v3912 = vpop.f32.mrf.mxu0
    %v3913 = vadd.f32 0.0, %v3912
    %3914 = vdwg.mxu0
    %3915 = vmatpush.msra.mxu0 0.0
    %3916 = vmatpush.msra.mxu0 0.0
    %3917 = vmatpush.msra.mxu0 0.0
    %3918 = vmatpush.msra.mxu0 0.0
    %3919 = vmatpush.msra.mxu0 0.0
    %3920 = vmatpush.msra.mxu0 0.0
    %3921 = vmatpush.msra.mxu0 0.0
    %3922 = vmatpush.msra.mxu0 0.0
    %3923 = vmatpush.msra.mxu0 0.0
    %3924 = vmatpush.msra.mxu0 0.0
    %3925 = vmatpush.msra.mxu0 0.0
    %3926 = vmatpush.msra.mxu0 0.0
    %3927 = vmatpush.msra.mxu0 0.0
    %3928 = vmatpush.msra.mxu0 0.0
    %3929 = vmatpush.msra.mxu0 0.0
    %3930 = vmatpush.msra.mxu0 %v3865
    %3931 = vmatmul.f32.gmra.mxu0 %v3873
    %v3932 = vpop.f32.mrf.mxu0
    %v3933 = vadd.f32 0.0, %v3932
    %3934 = vdwg.mxu0
    %3935 = vmatpush.msra.mxu0 0.0
    %3936 = vmatpush.msra.mxu0 0.0
    %3937 = vmatpush.msra.mxu0 0.0
    %3938 = vmatpush.msra.mxu0 0.0
    %3939 = vmatpush.msra.mxu0 0.0
    %3940 = vmatpush.msra.mxu0 0.0
    %3941 = vmatpush.msra.mxu0 0.0
    %3942 = vmatpush.msra.mxu0 0.0
    %3943 = vmatpush.msra.mxu0 0.0
    %3944 = vmatpush.msra.mxu0 0.0
    %3945 = vmatpush.msra.mxu0 0.0
    %3946 = vmatpush.msra.mxu0 0.0
    %3947 = vmatpush.msra.mxu0 0.0
    %3948 = vmatpush.msra.mxu0 0.0
    %3949 = vmatpush.msra.mxu0 0.0
    %3950 = vmatpush.msra.mxu0 %v3871
    %3951 = vmatmul.f32.gmra.mxu0 %v3873
    %v3952 = vpop.f32.mrf.mxu0
    %v3953 = vadd.f32 0.0, %v3952
    %3954 = vdwg.mxu0
    %v3955 = vadd.f32 %v3850, %v3893
    %v3956 = vadd.f32 %v3851, %v3913
    %v3957 = vadd.f32 %v3852, %v3933
    %v3958 = vadd.f32 %v3853, %v3953
    %v3959 = vld [vmem:[%s1819] sm:$0xff]
    %3960 = vrot.lane.b32.xlu0 %v3346, 109
    %v3961 = vpop.permute.xlu0 %3960
    %3962 = vrot.lane.b32.xlu0 %v3347, 109
    %v3963 = vpop.permute.xlu0 %3962
    %3964 = vrot.lane.b32.xlu0 %v3348, 109
    %v3965 = vpop.permute.xlu0 %3964
    %3966 = vrot.lane.b32.xlu0 %v3349, 109
    %v3967 = vpop.permute.xlu0 %3966
    %v3968 = vsel %vm824, %v3961, %v3963
    %v3969 = vsel %vm824, %v3963, %v3965
    %v3970 = vsel %vm824, %v3965, %v3967
    %v3976 = vsel %vm824, %v3967, %v3961
    %v3978 = vsel %vm1245, %v3959, 0
    %3980 = vmatpush.msra.mxu0 0.0
    %3981 = vmatpush.msra.mxu0 0.0
    %3982 = vmatpush.msra.mxu0 0.0
    %3983 = vmatpush.msra.mxu0 0.0
    %3984 = vmatpush.msra.mxu0 0.0
    %3985 = vmatpush.msra.mxu0 0.0
    %3986 = vmatpush.msra.mxu0 0.0
    %3987 = vmatpush.msra.mxu0 0.0
    %3988 = vmatpush.msra.mxu0 0.0
    %3989 = vmatpush.msra.mxu0 0.0
    %3990 = vmatpush.msra.mxu0 0.0
    %3991 = vmatpush.msra.mxu0 0.0
    %3992 = vmatpush.msra.mxu0 0.0
    %3993 = vmatpush.msra.mxu0 0.0
    %3994 = vmatpush.msra.mxu0 0.0
    %3995 = vmatpush.msra.mxu0 %v3968
    %3996 = vmatmul.f32.gmra.mxu0 %v3978
    %v3997 = vpop.f32.mrf.mxu0
    %v3998 = vadd.f32 0.0, %v3997
    %3999 = vdwg.mxu0
    %4000 = vmatpush.msra.mxu0 0.0
    %4001 = vmatpush.msra.mxu0 0.0
    %4002 = vmatpush.msra.mxu0 0.0
    %4003 = vmatpush.msra.mxu0 0.0
    %4004 = vmatpush.msra.mxu0 0.0
    %4005 = vmatpush.msra.mxu0 0.0
    %4006 = vmatpush.msra.mxu0 0.0
    %4007 = vmatpush.msra.mxu0 0.0
    %4008 = vmatpush.msra.mxu0 0.0
    %4009 = vmatpush.msra.mxu0 0.0
    %4010 = vmatpush.msra.mxu0 0.0
    %4011 = vmatpush.msra.mxu0 0.0
    %4012 = vmatpush.msra.mxu0 0.0
    %4013 = vmatpush.msra.mxu0 0.0
    %4014 = vmatpush.msra.mxu0 0.0
    %4015 = vmatpush.msra.mxu0 %v3969
    %4016 = vmatmul.f32.gmra.mxu0 %v3978
    %v4017 = vpop.f32.mrf.mxu0
    %v4018 = vadd.f32 0.0, %v4017
    %4019 = vdwg.mxu0
    %4020 = vmatpush.msra.mxu0 0.0
    %4021 = vmatpush.msra.mxu0 0.0
    %4022 = vmatpush.msra.mxu0 0.0
    %4023 = vmatpush.msra.mxu0 0.0
    %4024 = vmatpush.msra.mxu0 0.0
    %4025 = vmatpush.msra.mxu0 0.0
    %4026 = vmatpush.msra.mxu0 0.0
    %4027 = vmatpush.msra.mxu0 0.0
    %4028 = vmatpush.msra.mxu0 0.0
    %4029 = vmatpush.msra.mxu0 0.0
    %4030 = vmatpush.msra.mxu0 0.0
    %4031 = vmatpush.msra.mxu0 0.0
    %4032 = vmatpush.msra.mxu0 0.0
    %4033 = vmatpush.msra.mxu0 0.0
    %4034 = vmatpush.msra.mxu0 0.0
    %4035 = vmatpush.msra.mxu0 %v3970
    %4036 = vmatmul.f32.gmra.mxu0 %v3978
    %v4037 = vpop.f32.mrf.mxu0
    %v4038 = vadd.f32 0.0, %v4037
    %4039 = vdwg.mxu0
    %4040 = vmatpush.msra.mxu0 0.0
    %4041 = vmatpush.msra.mxu0 0.0
    %4042 = vmatpush.msra.mxu0 0.0
    %4043 = vmatpush.msra.mxu0 0.0
    %4044 = vmatpush.msra.mxu0 0.0
    %4045 = vmatpush.msra.mxu0 0.0
    %4046 = vmatpush.msra.mxu0 0.0
    %4047 = vmatpush.msra.mxu0 0.0
    %4048 = vmatpush.msra.mxu0 0.0
    %4049 = vmatpush.msra.mxu0 0.0
    %4050 = vmatpush.msra.mxu0 0.0
    %4051 = vmatpush.msra.mxu0 0.0
    %4052 = vmatpush.msra.mxu0 0.0
    %4053 = vmatpush.msra.mxu0 0.0
    %4054 = vmatpush.msra.mxu0 0.0
    %4055 = vmatpush.msra.mxu0 %v3976
    %4056 = vmatmul.f32.gmra.mxu0 %v3978
    %v4057 = vpop.f32.mrf.mxu0
    %v4058 = vadd.f32 0.0, %v4057
    %4059 = vdwg.mxu0
    %v4060 = vadd.f32 %v3955, %v3998
    %v4061 = vadd.f32 %v3956, %v4018
    %v4062 = vadd.f32 %v3957, %v4038
    %v4063 = vadd.f32 %v3958, %v4058
    %v4064 = vld [vmem:[%s1925] sm:$0xff]
    %4065 = vrot.lane.b32.xlu0 %v3346, 108
    %v4066 = vpop.permute.xlu0 %4065
    %4067 = vrot.lane.b32.xlu0 %v3347, 108
    %v4068 = vpop.permute.xlu0 %4067
    %4069 = vrot.lane.b32.xlu0 %v3348, 108
    %v4070 = vpop.permute.xlu0 %4069
    %4071 = vrot.lane.b32.xlu0 %v3349, 108
    %v4072 = vpop.permute.xlu0 %4071
    %v4073 = vsel %vm948, %v4066, %v4068
    %v4074 = vsel %vm948, %v4068, %v4070
    %v4075 = vsel %vm948, %v4070, %v4072
    %v4081 = vsel %vm948, %v4072, %v4066
    %v4083 = vsel %vm1245, %v4064, 0
    %4085 = vmatpush.msra.mxu0 0.0
    %4086 = vmatpush.msra.mxu0 0.0
    %4087 = vmatpush.msra.mxu0 0.0
    %4088 = vmatpush.msra.mxu0 0.0
    %4089 = vmatpush.msra.mxu0 0.0
    %4090 = vmatpush.msra.mxu0 0.0
    %4091 = vmatpush.msra.mxu0 0.0
    %4092 = vmatpush.msra.mxu0 0.0
    %4093 = vmatpush.msra.mxu0 0.0
    %4094 = vmatpush.msra.mxu0 0.0
    %4095 = vmatpush.msra.mxu0 0.0
    %4096 = vmatpush.msra.mxu0 0.0
    %4097 = vmatpush.msra.mxu0 0.0
    %4098 = vmatpush.msra.mxu0 0.0
    %4099 = vmatpush.msra.mxu0 0.0
    %4100 = vmatpush.msra.mxu0 %v4073
    %4101 = vmatmul.f32.gmra.mxu0 %v4083
    %v4102 = vpop.f32.mrf.mxu0
    %v4103 = vadd.f32 0.0, %v4102
    %4104 = vdwg.mxu0
    %4105 = vmatpush.msra.mxu0 0.0
    %4106 = vmatpush.msra.mxu0 0.0
    %4107 = vmatpush.msra.mxu0 0.0
    %4108 = vmatpush.msra.mxu0 0.0
    %4109 = vmatpush.msra.mxu0 0.0
    %4110 = vmatpush.msra.mxu0 0.0
    %4111 = vmatpush.msra.mxu0 0.0
    %4112 = vmatpush.msra.mxu0 0.0
    %4113 = vmatpush.msra.mxu0 0.0
    %4114 = vmatpush.msra.mxu0 0.0
    %4115 = vmatpush.msra.mxu0 0.0
    %4116 = vmatpush.msra.mxu0 0.0
    %4117 = vmatpush.msra.mxu0 0.0
    %4118 = vmatpush.msra.mxu0 0.0
    %4119 = vmatpush.msra.mxu0 0.0
    %4120 = vmatpush.msra.mxu0 %v4074
    %4121 = vmatmul.f32.gmra.mxu0 %v4083
    %v4122 = vpop.f32.mrf.mxu0
    %v4123 = vadd.f32 0.0, %v4122
    %4124 = vdwg.mxu0
    %4125 = vmatpush.msra.mxu0 0.0
    %4126 = vmatpush.msra.mxu0 0.0
    %4127 = vmatpush.msra.mxu0 0.0
    %4128 = vmatpush.msra.mxu0 0.0
    %4129 = vmatpush.msra.mxu0 0.0
    %4130 = vmatpush.msra.mxu0 0.0
    %4131 = vmatpush.msra.mxu0 0.0
    %4132 = vmatpush.msra.mxu0 0.0
    %4133 = vmatpush.msra.mxu0 0.0
    %4134 = vmatpush.msra.mxu0 0.0
    %4135 = vmatpush.msra.mxu0 0.0
    %4136 = vmatpush.msra.mxu0 0.0
    %4137 = vmatpush.msra.mxu0 0.0
    %4138 = vmatpush.msra.mxu0 0.0
    %4139 = vmatpush.msra.mxu0 0.0
    %4140 = vmatpush.msra.mxu0 %v4075
    %4141 = vmatmul.f32.gmra.mxu0 %v4083
    %v4142 = vpop.f32.mrf.mxu0
    %v4143 = vadd.f32 0.0, %v4142
    %4144 = vdwg.mxu0
    %4145 = vmatpush.msra.mxu0 0.0
    %4146 = vmatpush.msra.mxu0 0.0
    %4147 = vmatpush.msra.mxu0 0.0
    %4148 = vmatpush.msra.mxu0 0.0
    %4149 = vmatpush.msra.mxu0 0.0
    %4150 = vmatpush.msra.mxu0 0.0
    %4151 = vmatpush.msra.mxu0 0.0
    %4152 = vmatpush.msra.mxu0 0.0
    %4153 = vmatpush.msra.mxu0 0.0
    %4154 = vmatpush.msra.mxu0 0.0
    %4155 = vmatpush.msra.mxu0 0.0
    %4156 = vmatpush.msra.mxu0 0.0
    %4157 = vmatpush.msra.mxu0 0.0
    %4158 = vmatpush.msra.mxu0 0.0
    %4159 = vmatpush.msra.mxu0 0.0
    %4160 = vmatpush.msra.mxu0 %v4081
    %4161 = vmatmul.f32.gmra.mxu0 %v4083
    %v4162 = vpop.f32.mrf.mxu0
    %v4163 = vadd.f32 0.0, %v4162
    %4164 = vdwg.mxu0
    %v4165 = vadd.f32 %v4060, %v4103
    %v4166 = vadd.f32 %v4061, %v4123
    %v4167 = vadd.f32 %v4062, %v4143
    %v4168 = vadd.f32 %v4063, %v4163
    %v4169 = vld [vmem:[%s2031] sm:$0xff]
    %4170 = vrot.lane.b32.xlu0 %v3346, 107
    %v4171 = vpop.permute.xlu0 %4170
    %4172 = vrot.lane.b32.xlu0 %v3347, 107
    %v4173 = vpop.permute.xlu0 %4172
    %4174 = vrot.lane.b32.xlu0 %v3348, 107
    %v4175 = vpop.permute.xlu0 %4174
    %4176 = vrot.lane.b32.xlu0 %v3349, 107
    %v4177 = vpop.permute.xlu0 %4176
    %v4178 = vsel %vm1072, %v4171, %v4173
    %v4179 = vsel %vm1072, %v4173, %v4175
    %v4180 = vsel %vm1072, %v4175, %v4177
    %v4186 = vsel %vm1072, %v4177, %v4171
    %v4188 = vsel %vm1245, %v4169, 0
    %4190 = vmatpush.msra.mxu0 0.0
    %4191 = vmatpush.msra.mxu0 0.0
    %4192 = vmatpush.msra.mxu0 0.0
    %4193 = vmatpush.msra.mxu0 0.0
    %4194 = vmatpush.msra.mxu0 0.0
    %4195 = vmatpush.msra.mxu0 0.0
    %4196 = vmatpush.msra.mxu0 0.0
    %4197 = vmatpush.msra.mxu0 0.0
    %4198 = vmatpush.msra.mxu0 0.0
    %4199 = vmatpush.msra.mxu0 0.0
    %4200 = vmatpush.msra.mxu0 0.0
    %4201 = vmatpush.msra.mxu0 0.0
    %4202 = vmatpush.msra.mxu0 0.0
    %4203 = vmatpush.msra.mxu0 0.0
    %4204 = vmatpush.msra.mxu0 0.0
    %4205 = vmatpush.msra.mxu0 %v4178
    %4206 = vmatmul.f32.gmra.mxu0 %v4188
    %v4207 = vpop.f32.mrf.mxu0
    %v4208 = vadd.f32 0.0, %v4207
    %4209 = vdwg.mxu0
    %4210 = vmatpush.msra.mxu0 0.0
    %4211 = vmatpush.msra.mxu0 0.0
    %4212 = vmatpush.msra.mxu0 0.0
    %4213 = vmatpush.msra.mxu0 0.0
    %4214 = vmatpush.msra.mxu0 0.0
    %4215 = vmatpush.msra.mxu0 0.0
    %4216 = vmatpush.msra.mxu0 0.0
    %4217 = vmatpush.msra.mxu0 0.0
    %4218 = vmatpush.msra.mxu0 0.0
    %4219 = vmatpush.msra.mxu0 0.0
    %4220 = vmatpush.msra.mxu0 0.0
    %4221 = vmatpush.msra.mxu0 0.0
    %4222 = vmatpush.msra.mxu0 0.0
    %4223 = vmatpush.msra.mxu0 0.0
    %4224 = vmatpush.msra.mxu0 0.0
    %4225 = vmatpush.msra.mxu0 %v4179
    %4226 = vmatmul.f32.gmra.mxu0 %v4188
    %v4227 = vpop.f32.mrf.mxu0
    %v4228 = vadd.f32 0.0, %v4227
    %4229 = vdwg.mxu0
    %4230 = vmatpush.msra.mxu0 0.0
    %4231 = vmatpush.msra.mxu0 0.0
    %4232 = vmatpush.msra.mxu0 0.0
    %4233 = vmatpush.msra.mxu0 0.0
    %4234 = vmatpush.msra.mxu0 0.0
    %4235 = vmatpush.msra.mxu0 0.0
    %4236 = vmatpush.msra.mxu0 0.0
    %4237 = vmatpush.msra.mxu0 0.0
    %4238 = vmatpush.msra.mxu0 0.0
    %4239 = vmatpush.msra.mxu0 0.0
    %4240 = vmatpush.msra.mxu0 0.0
    %4241 = vmatpush.msra.mxu0 0.0
    %4242 = vmatpush.msra.mxu0 0.0
    %4243 = vmatpush.msra.mxu0 0.0
    %4244 = vmatpush.msra.mxu0 0.0
    %4245 = vmatpush.msra.mxu0 %v4180
    %4246 = vmatmul.f32.gmra.mxu0 %v4188
    %v4247 = vpop.f32.mrf.mxu0
    %v4248 = vadd.f32 0.0, %v4247
    %4249 = vdwg.mxu0
    %4250 = vmatpush.msra.mxu0 0.0
    %4251 = vmatpush.msra.mxu0 0.0
    %4252 = vmatpush.msra.mxu0 0.0
    %4253 = vmatpush.msra.mxu0 0.0
    %4254 = vmatpush.msra.mxu0 0.0
    %4255 = vmatpush.msra.mxu0 0.0
    %4256 = vmatpush.msra.mxu0 0.0
    %4257 = vmatpush.msra.mxu0 0.0
    %4258 = vmatpush.msra.mxu0 0.0
    %4259 = vmatpush.msra.mxu0 0.0
    %4260 = vmatpush.msra.mxu0 0.0
    %4261 = vmatpush.msra.mxu0 0.0
    %4262 = vmatpush.msra.mxu0 0.0
    %4263 = vmatpush.msra.mxu0 0.0
    %4264 = vmatpush.msra.mxu0 0.0
    %4265 = vmatpush.msra.mxu0 %v4186
    %4266 = vmatmul.f32.gmra.mxu0 %v4188
    %v4267 = vpop.f32.mrf.mxu0
    %v4268 = vadd.f32 0.0, %v4267
    %4269 = vdwg.mxu0
    %v4270 = vadd.f32 %v4165, %v4208
    %v4271 = vadd.f32 %v4166, %v4228
    %v4272 = vadd.f32 %v4167, %v4248
    %v4273 = vadd.f32 %v4168, %v4268
    %v4274 = vadd.f32 %v4270, %v2140
    %v4275 = vadd.f32 %v4271, %v2140
    %v4276 = vadd.f32 %v4272, %v2140
    %v4277 = vadd.f32 %v4273, %v2140
    %v4278 = vld [vmem:[%s5] sm:$0xff]
    %4280 = vset.pattern.permute.xlu0 0
    %4281 = vperm.xlu0 %4280, %v4278
    %v4282 = vpop.permute.xlu0 %4281
    %v4284 = vperm.slane %v2263, 0
    %v4285 = vperm.slane %v2263, 4
    %v4286 = vperm.slane %v2264, 0
    %v4287 = vperm.slane %v2264, 4
    %v4292 = vperm.slane %v4284, 0
    %v4293 = vperm.slane %v4285, 0
    %v4294 = vperm.slane %v4286, 0
    %v4295 = vperm.slane %v4287, 0
    %v4296 = vmul.f32 %v4282, %v4292
    %v4297 = vmul.f32 %v4282, %v4293
    %v4298 = vmul.f32 %v4282, %v4294
    %v4299 = vmul.f32 %v4282, %v4295
    %4300 = vset.pattern.permute.xlu0 1
    %4301 = vperm.xlu0 %4300, %v4278
    %v4302 = vpop.permute.xlu0 %4301
    %v4304 = vperm.slane %v2263, 1
    %v4305 = vperm.slane %v2263, 5
    %v4306 = vperm.slane %v2264, 1
    %v4307 = vperm.slane %v2264, 5
    %v4312 = vperm.slane %v4304, 1
    %v4313 = vperm.slane %v4305, 1
    %v4314 = vperm.slane %v4306, 1
    %v4315 = vperm.slane %v4307, 1
    %v4316 = vmul.f32 %v4302, %v4312
    %v4317 = vmul.f32 %v4302, %v4313
    %v4318 = vmul.f32 %v4302, %v4314
    %v4319 = vmul.f32 %v4302, %v4315
    %v4320 = vadd.f32 %v4296, %v4316
    %v4321 = vadd.f32 %v4297, %v4317
    %v4322 = vadd.f32 %v4298, %v4318
    %v4323 = vadd.f32 %v4299, %v4319
    %4324 = vset.pattern.permute.xlu0 2
    %4325 = vperm.xlu0 %4324, %v4278
    %v4326 = vpop.permute.xlu0 %4325
    %v4328 = vperm.slane %v2263, 2
    %v4329 = vperm.slane %v2263, 6
    %v4330 = vperm.slane %v2264, 2
    %v4331 = vperm.slane %v2264, 6
    %v4336 = vperm.slane %v4328, 2
    %v4337 = vperm.slane %v4329, 2
    %v4338 = vperm.slane %v4330, 2
    %v4339 = vperm.slane %v4331, 2
    %v4340 = vmul.f32 %v4326, %v4336
    %v4341 = vmul.f32 %v4326, %v4337
    %v4342 = vmul.f32 %v4326, %v4338
    %v4343 = vmul.f32 %v4326, %v4339
    %v4344 = vadd.f32 %v4320, %v4340
    %v4345 = vadd.f32 %v4321, %v4341
    %v4346 = vadd.f32 %v4322, %v4342
    %v4347 = vadd.f32 %v4323, %v4343
    %4348 = vset.pattern.permute.xlu0 3
    %4349 = vperm.xlu0 %4348, %v4278
    %v4350 = vpop.permute.xlu0 %4349
    %v4352 = vperm.slane %v2263, 3
    %v4353 = vperm.slane %v2263, 7
    %v4354 = vperm.slane %v2264, 3
    %v4355 = vperm.slane %v2264, 7
    %v4360 = vperm.slane %v4352, 3
    %v4361 = vperm.slane %v4353, 3
    %v4362 = vperm.slane %v4354, 3
    %v4363 = vperm.slane %v4355, 3
    %v4364 = vmul.f32 %v4350, %v4360
    %v4365 = vmul.f32 %v4350, %v4361
    %v4366 = vmul.f32 %v4350, %v4362
    %v4367 = vmul.f32 %v4350, %v4363
    %v4368 = vadd.f32 %v4344, %v4364
    %v4369 = vadd.f32 %v4345, %v4365
    %v4370 = vadd.f32 %v4346, %v4366
    %v4371 = vadd.f32 %v4347, %v4367
    %v4372 = vld [vmem:[%s6] sm:$0xff]
    %4374 = vset.pattern.permute.xlu0 0
    %4375 = vperm.xlu0 %4374, %v4372
    %v4376 = vpop.permute.xlu0 %4375
    %v4378 = vadd.f32 %v4368, %v4376
    %v4379 = vadd.f32 %v4369, %v4376
    %v4380 = vadd.f32 %v4370, %v4376
    %v4381 = vadd.f32 %v4371, %v4376
    %v4382 = vadd.f32 %v4274, %v4378
    %v4383 = vadd.f32 %v4275, %v4379
    %v4384 = vadd.f32 %v4276, %v4380
    %v4385 = vadd.f32 %v4277, %v4381
    %v4386 = vmax.f32 %v4382, 0.0
    %v4387 = vmax.f32 %v4383, 0.0
    %v4388 = vmax.f32 %v4384, 0.0
    %v4389 = vmax.f32 %v4385, 0.0
    %s4390 = scalar_lea.vmem [#allocation2], 32
    %4391 = vst [vmem:[%s4390] sm:$0xff] %v4386
    %4392 = vst [vmem:[%s4390 + $0x8] sm:$0xff] %v4387
    %4393 = vst [vmem:[%s4390 + $0x10] sm:$0xff] %v4388
    %4394 = vst [vmem:[%s4390 + $0x18] sm:$0xff] %v4389
    // Predicated region
    $region30: #{tpu_custom_call.1} parent=1 // pred_check
      _
    $region31: #{tpu_custom_call.1} parent=1 // pred_check_branch
      %4396 = sbr.rel (0) target = $region33
    $region32: #{tpu_custom_call.1} parent=1 // pred_region
      %4398 = vsyncadd [#allocation3], 0
      %s4399 = sshll.u32 [#allocation2], 4
      %s4400 = int_to_ptr.vmem [resolvable:$true] %s4399
      %s4401 = sshll.u32 %s7, 4
      %s4402 = int_to_ptr.hbm [resolvable:$true] %s4401
      %4407 = dma.vmem_to_hbm [thread:$0]  %s4400, 1024, %s4402, [#allocation3], 512, 512, 32
    $region33: #{tpu_custom_call.1} parent=1 // pred_fallthru
      _
    // Predicated region
    $region34: #{tpu_custom_call.1} parent=1 // pred_check
      _
    $region35: #{tpu_custom_call.1} parent=1 // pred_check_branch
      %4409 = sbr.rel (0) target = $region37
    $region36: #{tpu_custom_call.1} parent=1 // pred_region
      %4411 = dma.done [#allocation3], 1024
    $region37: #{tpu_custom_call.1} parent=1 // pred_fallthru
      _
    %4412 = vsyncpa [#allocation3], 1

</llo_original>
